<compile_context>
chip_gen: v5e
topology: v5e:2x2
jax: 0.10.0
libtpu: 0.0.40
codegen_flags: <defaults>
</compile_context>

<pallas_src>
import functools
import numpy as np
import jax
import jax.numpy as jnp
from jax.experimental import pallas as pl
from jax.experimental.pallas import tpu as pltpu

ROI_SIZE = 5
SPATIAL_SCALE = 1.0 / 8.0
HEAD_PAD = 128           # fused cls_loc+score head, padded to one lane tile


# --------------------------------------------------------------------------- #
# ROI max-pooling kernel: separable (row-band max, then column max)            #
# --------------------------------------------------------------------------- #
def _roi_pool_kernel(ridx_ref, bins_ref, x_ref, out_ref, *, H, W):
    r = pl.program_id(0)
    RS = ROI_SIZE
    C = x_ref.shape[-1]
    neg = -jnp.inf

    # bin boundaries for this ROI (scalars from SMEM)
    h_lo = [bins_ref[r, 0 * RS + p] for p in range(RS)]
    h_hi = [bins_ref[r, 1 * RS + p] for p in range(RS)]
    w_lo = [bins_ref[r, 2 * RS + p] for p in range(RS)]
    w_hi = [bins_ref[r, 3 * RS + p] for p in range(RS)]

    # Stage 1: single pass over the feature map; per-ph row-band maxima (W, C).
    bands = [jnp.full((W, C), neg, dtype=x_ref.dtype) for _ in range(RS)]
    for hh in range(H):
        row = x_ref[0, hh]                                       # (W, C)
        for ph in range(RS):
            inside = jnp.logical_and(hh >= h_lo[ph], hh < h_hi[ph])
            bands[ph] = jnp.where(inside,
                                  jnp.maximum(bands[ph], row),
                                  bands[ph])

    # Stage 2: masked max over w of each (W, C) band -> 25 bins of (C,).
    w_iota = jax.lax.broadcasted_iota(jnp.int32, (W, 1), 0)
    for pw in range(RS):
        mask_w = jnp.logical_and(w_iota >= w_lo[pw], w_iota < w_hi[pw])  # (W,1)
        w_empty = w_hi[pw] <= w_lo[pw]
        for ph in range(RS):
            bmax = jnp.max(jnp.where(mask_w, bands[ph], neg), axis=0)    # (C,)
            empty = jnp.logical_or(h_hi[ph] <= h_lo[ph], w_empty)
            out_ref[0, ph * RS + pw, :] = jnp.where(
                empty, jnp.zeros_like(bmax), bmax)


def roi_pooling_pallas(x_nhwc, roi_indices, bins):
    N, H, W, C = x_nhwc.shape
    R = roi_indices.shape[0]
    kern = functools.partial(_roi_pool_kernel, H=H, W=W)
    grid_spec = pltpu.PrefetchScalarGridSpec(
        num_scalar_prefetch=2,
        grid=(R,),
        in_specs=[pl.BlockSpec(
            (1, H, W, C),
            lambda r, ridx, bins_: (ridx[r], 0, 0, 0))],
        out_specs=pl.BlockSpec(
            (1, ROI_SIZE * ROI_SIZE, C),
            lambda r, ridx, bins_: (r, 0, 0)),
    )
    return pl.pallas_call(
        kern,
        out_shape=jax.ShapeDtypeStruct((R, ROI_SIZE * ROI_SIZE, C),
                                       x_nhwc.dtype),
        grid_spec=grid_spec,
        compiler_params=pltpu.CompilerParams(
            dimension_semantics=("parallel",)),   # ROIs independent -> 2 TCs on v7x
    )(roi_indices, bins, x_nhwc)


# --------------------------------------------------------------------------- #
# Fused MLP kernel: fc1 (K tiled, bf16) -> relu -> fc2 -> relu -> fused head   #
# --------------------------------------------------------------------------- #
def _mlp_kernel(pool_ref, w1_ref, b1_ref, w2_ref, b2_ref, wh_ref, bh_ref,
                head_ref, acc_ref):
    k = pl.program_id(1)

    @pl.when(k == 0)
    def _():
        acc_ref[...] = jnp.zeros_like(acc_ref)

    acc_ref[...] += jnp.dot(pool_ref[...], w1_ref[...],
                            preferred_element_type=jnp.float32)

    @pl.when(k == pl.num_programs(1) - 1)
    def _():
        h1 = jnp.maximum(acc_ref[...] + b1_ref[...], 0.0)
        h2 = jnp.maximum(
            jnp.dot(h1.astype(jnp.bfloat16), w2_ref[...],
                    preferred_element_type=jnp.float32) + b2_ref[...], 0.0)
        head_ref[...] = (jnp.dot(h2.astype(jnp.bfloat16), wh_ref[...],
                                 preferred_element_type=jnp.float32)
                         + bh_ref[...]).astype(head_ref.dtype)


def rcnn_mlp_pallas(pool_flat, prepared, tk=1280):
    w1, b1, w2, b2, wh, bh, nloc, nsc = prepared
    R, K1 = pool_flat.shape
    H1 = w1.shape[1]
    HP = wh.shape[1]
    assert K1 % tk == 0, (K1, tk)
    n_k = K1 // tk

    # Row tiling: full MXU tiles when R is large, minimal padding when small.
    tm = 128 if R >= 128 else max(8, ((R + 7) // 8) * 8)
    Rp = ((R + tm - 1) // tm) * tm
    pool = pool_flat.astype(jnp.bfloat16)
    if Rp != R:
        pool = jnp.pad(pool, ((0, Rp - R), (0, 0)))

    grid_spec = pltpu.PrefetchScalarGridSpec(
        num_scalar_prefetch=0,
        grid=(Rp // tm, n_k),
        in_specs=[
            pl.BlockSpec((tm, tk), lambda i, k: (i, k)),     # pooled (bf16)
            pl.BlockSpec((tk, H1), lambda i, k: (k, 0)),     # w1 (bf16, streamed)
            pl.BlockSpec((1, H1), lambda i, k: (0, 0)),      # b1
            pl.BlockSpec((H1, H1), lambda i, k: (0, 0)),     # w2 (bf16)
            pl.BlockSpec((1, H1), lambda i, k: (0, 0)),      # b2
            pl.BlockSpec((H1, HP), lambda i, k: (0, 0)),     # fused head W (bf16)
            pl.BlockSpec((1, HP), lambda i, k: (0, 0)),      # fused head bias
        ],
        out_specs=pl.BlockSpec((tm, HP), lambda i, k: (i, 0)),
        scratch_shapes=[pltpu.VMEM((tm, H1), jnp.float32)],
    )
    head = pl.pallas_call(
        _mlp_kernel,
        out_shape=jax.ShapeDtypeStruct((Rp, HP), jnp.float32),
        grid_spec=grid_spec,
        compiler_params=pltpu.CompilerParams(
            dimension_semantics=("parallel", "arbitrary"),
            vmem_limit_bytes=32 * 1024 * 1024),   # legal on v5e/v6e/v7x
    )(pool, w1, b1, w2, b2, wh, bh)
    return head[:R, :nloc], head[:R, nloc:nloc + nsc]


# --------------------------------------------------------------------------- #
# Parameter preparation (one-time, host side)                                  #
# --------------------------------------------------------------------------- #
def prepare_params(params):
    """Permute fc1 rows to the pooled (ph, pw, c) flatten order, fuse
    cls_loc + score into one lane-dense head, and cast big weights to bf16."""
    w1, b1, w2, b2, wl, bl, wsc, bsc = params
    K1 = w1.shape[0]
    P = ROI_SIZE * ROI_SIZE
    C = K1 // P
    # PyTorch flatten of (R, C, rs, rs) is (c, ph, pw)-major; Pallas pooled
    # tensor flattens as (ph, pw, c)-major -> permute w1 rows accordingly.
    perm = (jnp.arange(P)[:, None] + jnp.arange(C)[None, :] * P).reshape(-1)
    w1p = w1[perm]
    nloc = wl.shape[1]
    nsc = wsc.shape[1]
    whead = jnp.concatenate([wl, wsc], axis=1)
    bhead = jnp.concatenate([bl, bsc], axis=0)
    whead = jnp.pad(whead, ((0, 0), (0, HEAD_PAD - nloc - nsc)))
    bhead = jnp.pad(bhead, (0, HEAD_PAD - nloc - nsc))
    return (w1p.astype(jnp.bfloat16),
            b1.reshape(1, -1).astype(jnp.float32),
            w2.astype(jnp.bfloat16),
            b2.reshape(1, -1).astype(jnp.float32),
            whead.astype(jnp.bfloat16),
            bhead.reshape(1, -1).astype(jnp.float32),
            nloc, nsc)


# --------------------------------------------------------------------------- #
# Glue: bin boundaries (torchvision roi_pool semantics) + full forward         #
# --------------------------------------------------------------------------- #
def compute_roi_bins(rois, H, W):
    x1 = jnp.round(rois[:, 0] * SPATIAL_SCALE).astype(jnp.int32)
    y1 = jnp.round(rois[:, 1] * SPATIAL_SCALE).astype(jnp.int32)
    x2 = jnp.round(rois[:, 2] * SPATIAL_SCALE).astype(jnp.int32)
    y2 = jnp.round(rois[:, 3] * SPATIAL_SCALE).astype(jnp.int32)
    roi_w = jnp.maximum(x2 - x1 + 1, 1).astype(jnp.float32)
    roi_h = jnp.maximum(y2 - y1 + 1, 1).astype(jnp.float32)
    bw = roi_w / ROI_SIZE
    bh = roi_h / ROI_SIZE
    p = jnp.arange(ROI_SIZE, dtype=jnp.float32)
    ws = jnp.clip(jnp.floor(p[None] * bw[:, None]).astype(jnp.int32) + x1[:, None], 0, W)
    we = jnp.clip(jnp.ceil((p[None] + 1.0) * bw[:, None]).astype(jnp.int32) + x1[:, None], 0, W)
    hs = jnp.clip(jnp.floor(p[None] * bh[:, None]).astype(jnp.int32) + y1[:, None], 0, H)
    he = jnp.clip(jnp.ceil((p[None] + 1.0) * bh[:, None]).astype(jnp.int32) + y1[:, None], 0, H)
    # fused (R, 4*ROI_SIZE) int32 table: [hs | he | ws | we]
    return jnp.concatenate([hs, he, ws, we], axis=1).astype(jnp.int32)


def rcnn_header_forward(x_nchw, rois, roi_indices, prepared):
    N, C, H, W = x_nchw.shape
    x_nhwc = jnp.transpose(x_nchw, (0, 2, 3, 1))
    # Group ROIs by batch index so consecutive grid steps hit the same input
    # block (Pallas skips the re-DMA when the block index is unchanged).
    order = jnp.argsort(roi_indices)
    inv = jnp.argsort(order)
    rois_s = rois[order]
    ridx_s = roi_indices[order].astype(jnp.int32)
    bins = compute_roi_bins(rois_s, H, W)
    pooled = roi_pooling_pallas(x_nhwc, ridx_s, bins)          # (R, rs*rs, C)
    R = pooled.shape[0]
    pool_flat = pooled.reshape(R, ROI_SIZE * ROI_SIZE * C)     # natural order
    loc_s, score_s = rcnn_mlp_pallas(pool_flat, prepared)
    return loc_s[inv], score_s[inv]


def init_params(key, C):
    K1 = C * ROI_SIZE * ROI_SIZE
    ks = jax.random.split(key, 8)
    s = 0.02
    w1 = jax.random.normal(ks[0], (K1, 1024), jnp.float32) * s
    b1 = jax.random.normal(ks[1], (1024,), jnp.float32) * s
    w2 = jax.random.normal(ks[2], (1024, 1024), jnp.float32) * s
    b2 = jax.random.normal(ks[3], (1024,), jnp.float32) * s
    wl = jax.random.normal(ks[4], (1024, 8), jnp.float32) * s
    bl = jax.random.normal(ks[5], (8,), jnp.float32) * s
    wsc = jax.random.normal(ks[6], (1024, 2), jnp.float32) * s
    bsc = jax.random.normal(ks[7], (2,), jnp.float32) * s
    return (w1, b1, w2, b2, wl, bl, wsc, bsc)


# --------------------------------------------------------------------------- #
# Pure numpy/JAX reference (f32, PyTorch semantics) for correctness check      #
# --------------------------------------------------------------------------- #
def reference_forward(x_nchw, rois, roi_indices, params):
    N, C, H, W = x_nchw.shape
    x_nhwc = np.transpose(np.asarray(x_nchw), (0, 2, 3, 1))
    bins = np.asarray(compute_roi_bins(rois, H, W))
    hs = bins[:, 0 * ROI_SIZE:1 * ROI_SIZE]
    he = bins[:, 1 * ROI_SIZE:2 * ROI_SIZE]
    ws = bins[:, 2 * ROI_SIZE:3 * ROI_SIZE]
    we = bins[:, 3 * ROI_SIZE:4 * ROI_SIZE]
    ridx = np.asarray(roi_indices)
    R = ridx.shape[0]
    pool = np.zeros((R, C, ROI_SIZE, ROI_SIZE), np.float32)
    for r in range(R):
        f = x_nhwc[int(ridx[r])]
        for ph in range(ROI_SIZE):
            for pw in range(ROI_SIZE):
                h0, h1 = int(hs[r, ph]), int(he[r, ph])
                w0, w1 = int(ws[r, pw]), int(we[r, pw])
                if h1 <= h0 or w1 <= w0:
                    continue
                pool[r, :, ph, pw] = f[h0:h1, w0:w1, :].max(axis=(0, 1))
    flat = pool.reshape(R, -1)
    w1_, b1_, w2_, b2_, wl_, bl_, wsc_, bsc_ = [np.asarray(p) for p in params]
    h1v = np.maximum(flat @ w1_ + b1_, 0.0)
    h2v = np.maximum(h1v @ w2_ + b2_, 0.0)
    loc = h2v @ wl_ + bl_
    sc = h2v @ wsc_ + bsc_
    return loc, sc


if __name__ == "__main__":
    key = jax.random.PRNGKey(0)
    kx, kr1, kr2, ki, kp = jax.random.split(key, 5)

    N, C, H, W = 2, 256, 16, 16          # feature map (NCHW, stride-8 features)
    R = 8                                # number of ROIs
    img = W / SPATIAL_SCALE              # implied image size = 128

    x = jax.random.normal(kx, (N, C, H, W), jnp.float32)
    xy1 = jax.random.uniform(kr1, (R, 2), minval=0.0, maxval=90.0)
    whs = jax.random.uniform(kr2, (R, 2), minval=16.0, maxval=60.0)
    rois = jnp.concatenate([xy1, jnp.minimum(xy1 + whs, img - 1.0)], axis=1)
    roi_indices = jax.random.randint(ki, (R,), 0, N, dtype=jnp.int32)
    params = init_params(kp, C)
    prepared = prepare_params(params)    # one-time: permute/fuse/bf16-cast

    loc, score = rcnn_header_forward(x, rois, roi_indices, prepared)
    loc, score = jax.block_until_ready((loc, score))

    loc_ref, score_ref = reference_forward(x, rois, roi_indices, params)
    assert loc.shape == (R, 8) and score.shape == (R, 2)
    assert np.allclose(np.asarray(loc), loc_ref, atol=5e-2, rtol=1e-2)
    assert np.allclose(np.asarray(score), score_ref, atol=5e-2, rtol=1e-2)
    print("KERNEL_OK")
</pallas_src>

<mosaic_0001>
module attributes {stable_mosaic.version = 11 : i64} {
  func.func @_roi_pool_kernel(%arg0: i32, %arg1: memref<8xi32, #tpu.memory_space<smem>>, %arg2: memref<8x20xi32, #tpu.memory_space<smem>>, %arg3: memref<1x16x16x256xf32, #tpu.memory_space<vmem>>, %arg4: memref<1x25x256xf32, #tpu.memory_space<vmem>>) attributes {dimension_semantics = [#tpu.dimension_semantics<parallel>], iteration_bounds = array<i64: 8>, scalar_prefetch = 2 : i64, scratch_operands = 0 : i64, tpu.core_type = #tpu.core_type<tc>, window_params = [{transform_indices = @transform_0, window_bounds = array<i64: 1, 16, 16, 256>}, {transform_indices = @transform_1, window_bounds = array<i64: 1, 25, 256>}]} {
    %0 = arith.index_cast %arg0 : i32 to index
    %c0 = arith.constant 0 : index
    %1 = memref.load %arg2[%0, %c0] : memref<8x20xi32, #tpu.memory_space<smem>>
    %2 = arith.index_cast %arg0 : i32 to index
    %c1 = arith.constant 1 : index
    %3 = memref.load %arg2[%2, %c1] : memref<8x20xi32, #tpu.memory_space<smem>>
    %4 = arith.index_cast %arg0 : i32 to index
    %c2 = arith.constant 2 : index
    %5 = memref.load %arg2[%4, %c2] : memref<8x20xi32, #tpu.memory_space<smem>>
    %6 = arith.index_cast %arg0 : i32 to index
    %c3 = arith.constant 3 : index
    %7 = memref.load %arg2[%6, %c3] : memref<8x20xi32, #tpu.memory_space<smem>>
    %8 = arith.index_cast %arg0 : i32 to index
    %c4 = arith.constant 4 : index
    %9 = memref.load %arg2[%8, %c4] : memref<8x20xi32, #tpu.memory_space<smem>>
    %10 = arith.index_cast %arg0 : i32 to index
    %c5 = arith.constant 5 : index
    %11 = memref.load %arg2[%10, %c5] : memref<8x20xi32, #tpu.memory_space<smem>>
    %12 = arith.index_cast %arg0 : i32 to index
    %c6 = arith.constant 6 : index
    %13 = memref.load %arg2[%12, %c6] : memref<8x20xi32, #tpu.memory_space<smem>>
    %14 = arith.index_cast %arg0 : i32 to index
    %c7 = arith.constant 7 : index
    %15 = memref.load %arg2[%14, %c7] : memref<8x20xi32, #tpu.memory_space<smem>>
    %16 = arith.index_cast %arg0 : i32 to index
    %c8 = arith.constant 8 : index
    %17 = memref.load %arg2[%16, %c8] : memref<8x20xi32, #tpu.memory_space<smem>>
    %18 = arith.index_cast %arg0 : i32 to index
    %c9 = arith.constant 9 : index
    %19 = memref.load %arg2[%18, %c9] : memref<8x20xi32, #tpu.memory_space<smem>>
    %20 = arith.index_cast %arg0 : i32 to index
    %c10 = arith.constant 10 : index
    %21 = memref.load %arg2[%20, %c10] : memref<8x20xi32, #tpu.memory_space<smem>>
    %22 = arith.index_cast %arg0 : i32 to index
    %c11 = arith.constant 11 : index
    %23 = memref.load %arg2[%22, %c11] : memref<8x20xi32, #tpu.memory_space<smem>>
    %24 = arith.index_cast %arg0 : i32 to index
    %c12 = arith.constant 12 : index
    %25 = memref.load %arg2[%24, %c12] : memref<8x20xi32, #tpu.memory_space<smem>>
    %26 = arith.index_cast %arg0 : i32 to index
    %c13 = arith.constant 13 : index
    %27 = memref.load %arg2[%26, %c13] : memref<8x20xi32, #tpu.memory_space<smem>>
    %28 = arith.index_cast %arg0 : i32 to index
    %c14 = arith.constant 14 : index
    %29 = memref.load %arg2[%28, %c14] : memref<8x20xi32, #tpu.memory_space<smem>>
    %30 = arith.index_cast %arg0 : i32 to index
    %c15 = arith.constant 15 : index
    %31 = memref.load %arg2[%30, %c15] : memref<8x20xi32, #tpu.memory_space<smem>>
    %32 = arith.index_cast %arg0 : i32 to index
    %c16 = arith.constant 16 : index
    %33 = memref.load %arg2[%32, %c16] : memref<8x20xi32, #tpu.memory_space<smem>>
    %34 = arith.index_cast %arg0 : i32 to index
    %c17 = arith.constant 17 : index
    %35 = memref.load %arg2[%34, %c17] : memref<8x20xi32, #tpu.memory_space<smem>>
    %36 = arith.index_cast %arg0 : i32 to index
    %c18 = arith.constant 18 : index
    %37 = memref.load %arg2[%36, %c18] : memref<8x20xi32, #tpu.memory_space<smem>>
    %38 = arith.index_cast %arg0 : i32 to index
    %c19 = arith.constant 19 : index
    %39 = memref.load %arg2[%38, %c19] : memref<8x20xi32, #tpu.memory_space<smem>>
    %cst = arith.constant 0xFF800000 : f32
    %40 = vector.broadcast %cst : f32 to vector<16x256xf32>
    %cst_0 = arith.constant 0xFF800000 : f32
    %41 = vector.broadcast %cst_0 : f32 to vector<16x256xf32>
    %cst_1 = arith.constant 0xFF800000 : f32
    %42 = vector.broadcast %cst_1 : f32 to vector<16x256xf32>
    %cst_2 = arith.constant 0xFF800000 : f32
    %43 = vector.broadcast %cst_2 : f32 to vector<16x256xf32>
    %cst_3 = arith.constant 0xFF800000 : f32
    %44 = vector.broadcast %cst_3 : f32 to vector<16x256xf32>
    %c0_4 = arith.constant 0 : index
    %c0_5 = arith.constant 0 : index
    %c0_6 = arith.constant 0 : index
    %c0_7 = arith.constant 0 : index
    %45 = vector.load %arg3[%c0_4, %c0_5, %c0_6, %c0_7] : memref<1x16x16x256xf32, #tpu.memory_space<vmem>>, vector<1x1x16x256xf32>
    %46 = vector.shape_cast %45 : vector<1x1x16x256xf32> to vector<16x256xf32>
    %c0_i32 = arith.constant 0 : i32
    %47 = arith.cmpi sle, %1, %c0_i32 : i32
    %c0_i32_8 = arith.constant 0 : i32
    %48 = arith.cmpi sgt, %11, %c0_i32_8 : i32
    %49 = arith.andi %47, %48 : i1
    %50 = arith.maximumf %40, %46 : vector<16x256xf32>
    %51 = arith.select %49, %50, %40 : vector<16x256xf32>
    %c0_i32_9 = arith.constant 0 : i32
    %52 = arith.cmpi sle, %3, %c0_i32_9 : i32
    %c0_i32_10 = arith.constant 0 : i32
    %53 = arith.cmpi sgt, %13, %c0_i32_10 : i32
    %54 = arith.andi %52, %53 : i1
    %55 = arith.maximumf %41, %46 : vector<16x256xf32>
    %56 = arith.select %54, %55, %41 : vector<16x256xf32>
    %c0_i32_11 = arith.constant 0 : i32
    %57 = arith.cmpi sle, %5, %c0_i32_11 : i32
    %c0_i32_12 = arith.constant 0 : i32
    %58 = arith.cmpi sgt, %15, %c0_i32_12 : i32
    %59 = arith.andi %57, %58 : i1
    %60 = arith.maximumf %42, %46 : vector<16x256xf32>
    %61 = arith.select %59, %60, %42 : vector<16x256xf32>
    %c0_i32_13 = arith.constant 0 : i32
    %62 = arith.cmpi sle, %7, %c0_i32_13 : i32
    %c0_i32_14 = arith.constant 0 : i32
    %63 = arith.cmpi sgt, %17, %c0_i32_14 : i32
    %64 = arith.andi %62, %63 : i1
    %65 = arith.maximumf %43, %46 : vector<16x256xf32>
    %66 = arith.select %64, %65, %43 : vector<16x256xf32>
    %c0_i32_15 = arith.constant 0 : i32
    %67 = arith.cmpi sle, %9, %c0_i32_15 : i32
    %c0_i32_16 = arith.constant 0 : i32
    %68 = arith.cmpi sgt, %19, %c0_i32_16 : i32
    %69 = arith.andi %67, %68 : i1
    %70 = arith.maximumf %44, %46 : vector<16x256xf32>
    %71 = arith.select %69, %70, %44 : vector<16x256xf32>
    %c0_17 = arith.constant 0 : index
    %c1_18 = arith.constant 1 : index
    %c0_19 = arith.constant 0 : index
    %c0_20 = arith.constant 0 : index
    %72 = vector.load %arg3[%c0_17, %c1_18, %c0_19, %c0_20] : memref<1x16x16x256xf32, #tpu.memory_space<vmem>>, vector<1x1x16x256xf32>
    %73 = vector.shape_cast %72 : vector<1x1x16x256xf32> to vector<16x256xf32>
    %c1_i32 = arith.constant 1 : i32
    %74 = arith.cmpi sle, %1, %c1_i32 : i32
    %c1_i32_21 = arith.constant 1 : i32
    %75 = arith.cmpi sgt, %11, %c1_i32_21 : i32
    %76 = arith.andi %74, %75 : i1
    %77 = arith.maximumf %51, %73 : vector<16x256xf32>
    %78 = arith.select %76, %77, %51 : vector<16x256xf32>
    %c1_i32_22 = arith.constant 1 : i32
    %79 = arith.cmpi sle, %3, %c1_i32_22 : i32
    %c1_i32_23 = arith.constant 1 : i32
    %80 = arith.cmpi sgt, %13, %c1_i32_23 : i32
    %81 = arith.andi %79, %80 : i1
    %82 = arith.maximumf %56, %73 : vector<16x256xf32>
    %83 = arith.select %81, %82, %56 : vector<16x256xf32>
    %c1_i32_24 = arith.constant 1 : i32
    %84 = arith.cmpi sle, %5, %c1_i32_24 : i32
    %c1_i32_25 = arith.constant 1 : i32
    %85 = arith.cmpi sgt, %15, %c1_i32_25 : i32
    %86 = arith.andi %84, %85 : i1
    %87 = arith.maximumf %61, %73 : vector<16x256xf32>
    %88 = arith.select %86, %87, %61 : vector<16x256xf32>
    %c1_i32_26 = arith.constant 1 : i32
    %89 = arith.cmpi sle, %7, %c1_i32_26 : i32
    %c1_i32_27 = arith.constant 1 : i32
    %90 = arith.cmpi sgt, %17, %c1_i32_27 : i32
    %91 = arith.andi %89, %90 : i1
    %92 = arith.maximumf %66, %73 : vector<16x256xf32>
    %93 = arith.select %91, %92, %66 : vector<16x256xf32>
    %c1_i32_28 = arith.constant 1 : i32
    %94 = arith.cmpi sle, %9, %c1_i32_28 : i32
    %c1_i32_29 = arith.constant 1 : i32
    %95 = arith.cmpi sgt, %19, %c1_i32_29 : i32
    %96 = arith.andi %94, %95 : i1
    %97 = arith.maximumf %71, %73 : vector<16x256xf32>
    %98 = arith.select %96, %97, %71 : vector<16x256xf32>
    %c0_30 = arith.constant 0 : index
    %c2_31 = arith.constant 2 : index
    %c0_32 = arith.constant 0 : index
    %c0_33 = arith.constant 0 : index
    %99 = vector.load %arg3[%c0_30, %c2_31, %c0_32, %c0_33] : memref<1x16x16x256xf32, #tpu.memory_space<vmem>>, vector<1x1x16x256xf32>
    %100 = vector.shape_cast %99 : vector<1x1x16x256xf32> to vector<16x256xf32>
    %c2_i32 = arith.constant 2 : i32
    %101 = arith.cmpi sle, %1, %c2_i32 : i32
    %c2_i32_34 = arith.constant 2 : i32
    %102 = arith.cmpi sgt, %11, %c2_i32_34 : i32
    %103 = arith.andi %101, %102 : i1
    %104 = arith.maximumf %78, %100 : vector<16x256xf32>
    %105 = arith.select %103, %104, %78 : vector<16x256xf32>
    %c2_i32_35 = arith.constant 2 : i32
    %106 = arith.cmpi sle, %3, %c2_i32_35 : i32
    %c2_i32_36 = arith.constant 2 : i32
    %107 = arith.cmpi sgt, %13, %c2_i32_36 : i32
    %108 = arith.andi %106, %107 : i1
    %109 = arith.maximumf %83, %100 : vector<16x256xf32>
    %110 = arith.select %108, %109, %83 : vector<16x256xf32>
    %c2_i32_37 = arith.constant 2 : i32
    %111 = arith.cmpi sle, %5, %c2_i32_37 : i32
    %c2_i32_38 = arith.constant 2 : i32
    %112 = arith.cmpi sgt, %15, %c2_i32_38 : i32
    %113 = arith.andi %111, %112 : i1
    %114 = arith.maximumf %88, %100 : vector<16x256xf32>
    %115 = arith.select %113, %114, %88 : vector<16x256xf32>
    %c2_i32_39 = arith.constant 2 : i32
    %116 = arith.cmpi sle, %7, %c2_i32_39 : i32
    %c2_i32_40 = arith.constant 2 : i32
    %117 = arith.cmpi sgt, %17, %c2_i32_40 : i32
    %118 = arith.andi %116, %117 : i1
    %119 = arith.maximumf %93, %100 : vector<16x256xf32>
    %120 = arith.select %118, %119, %93 : vector<16x256xf32>
    %c2_i32_41 = arith.constant 2 : i32
    %121 = arith.cmpi sle, %9, %c2_i32_41 : i32
    %c2_i32_42 = arith.constant 2 : i32
    %122 = arith.cmpi sgt, %19, %c2_i32_42 : i32
    %123 = arith.andi %121, %122 : i1
    %124 = arith.maximumf %98, %100 : vector<16x256xf32>
    %125 = arith.select %123, %124, %98 : vector<16x256xf32>
    %c0_43 = arith.constant 0 : index
    %c3_44 = arith.constant 3 : index
    %c0_45 = arith.constant 0 : index
    %c0_46 = arith.constant 0 : index
    %126 = vector.load %arg3[%c0_43, %c3_44, %c0_45, %c0_46] : memref<1x16x16x256xf32, #tpu.memory_space<vmem>>, vector<1x1x16x256xf32>
    %127 = vector.shape_cast %126 : vector<1x1x16x256xf32> to vector<16x256xf32>
    %c3_i32 = arith.constant 3 : i32
    %128 = arith.cmpi sle, %1, %c3_i32 : i32
    %c3_i32_47 = arith.constant 3 : i32
    %129 = arith.cmpi sgt, %11, %c3_i32_47 : i32
    %130 = arith.andi %128, %129 : i1
    %131 = arith.maximumf %105, %127 : vector<16x256xf32>
    %132 = arith.select %130, %131, %105 : vector<16x256xf32>
    %c3_i32_48 = arith.constant 3 : i32
    %133 = arith.cmpi sle, %3, %c3_i32_48 : i32
    %c3_i32_49 = arith.constant 3 : i32
    %134 = arith.cmpi sgt, %13, %c3_i32_49 : i32
    %135 = arith.andi %133, %134 : i1
    %136 = arith.maximumf %110, %127 : vector<16x256xf32>
    %137 = arith.select %135, %136, %110 : vector<16x256xf32>
    %c3_i32_50 = arith.constant 3 : i32
    %138 = arith.cmpi sle, %5, %c3_i32_50 : i32
    %c3_i32_51 = arith.constant 3 : i32
    %139 = arith.cmpi sgt, %15, %c3_i32_51 : i32
    %140 = arith.andi %138, %139 : i1
    %141 = arith.maximumf %115, %127 : vector<16x256xf32>
    %142 = arith.select %140, %141, %115 : vector<16x256xf32>
    %c3_i32_52 = arith.constant 3 : i32
    %143 = arith.cmpi sle, %7, %c3_i32_52 : i32
    %c3_i32_53 = arith.constant 3 : i32
    %144 = arith.cmpi sgt, %17, %c3_i32_53 : i32
    %145 = arith.andi %143, %144 : i1
    %146 = arith.maximumf %120, %127 : vector<16x256xf32>
    %147 = arith.select %145, %146, %120 : vector<16x256xf32>
    %c3_i32_54 = arith.constant 3 : i32
    %148 = arith.cmpi sle, %9, %c3_i32_54 : i32
    %c3_i32_55 = arith.constant 3 : i32
    %149 = arith.cmpi sgt, %19, %c3_i32_55 : i32
    %150 = arith.andi %148, %149 : i1
    %151 = arith.maximumf %125, %127 : vector<16x256xf32>
    %152 = arith.select %150, %151, %125 : vector<16x256xf32>
    %c0_56 = arith.constant 0 : index
    %c4_57 = arith.constant 4 : index
    %c0_58 = arith.constant 0 : index
    %c0_59 = arith.constant 0 : index
    %153 = vector.load %arg3[%c0_56, %c4_57, %c0_58, %c0_59] : memref<1x16x16x256xf32, #tpu.memory_space<vmem>>, vector<1x1x16x256xf32>
    %154 = vector.shape_cast %153 : vector<1x1x16x256xf32> to vector<16x256xf32>
    %c4_i32 = arith.constant 4 : i32
    %155 = arith.cmpi sle, %1, %c4_i32 : i32
    %c4_i32_60 = arith.constant 4 : i32
    %156 = arith.cmpi sgt, %11, %c4_i32_60 : i32
    %157 = arith.andi %155, %156 : i1
    %158 = arith.maximumf %132, %154 : vector<16x256xf32>
    %159 = arith.select %157, %158, %132 : vector<16x256xf32>
    %c4_i32_61 = arith.constant 4 : i32
    %160 = arith.cmpi sle, %3, %c4_i32_61 : i32
    %c4_i32_62 = arith.constant 4 : i32
    %161 = arith.cmpi sgt, %13, %c4_i32_62 : i32
    %162 = arith.andi %160, %161 : i1
    %163 = arith.maximumf %137, %154 : vector<16x256xf32>
    %164 = arith.select %162, %163, %137 : vector<16x256xf32>
    %c4_i32_63 = arith.constant 4 : i32
    %165 = arith.cmpi sle, %5, %c4_i32_63 : i32
    %c4_i32_64 = arith.constant 4 : i32
    %166 = arith.cmpi sgt, %15, %c4_i32_64 : i32
    %167 = arith.andi %165, %166 : i1
    %168 = arith.maximumf %142, %154 : vector<16x256xf32>
    %169 = arith.select %167, %168, %142 : vector<16x256xf32>
    %c4_i32_65 = arith.constant 4 : i32
    %170 = arith.cmpi sle, %7, %c4_i32_65 : i32
    %c4_i32_66 = arith.constant 4 : i32
    %171 = arith.cmpi sgt, %17, %c4_i32_66 : i32
    %172 = arith.andi %170, %171 : i1
    %173 = arith.maximumf %147, %154 : vector<16x256xf32>
    %174 = arith.select %172, %173, %147 : vector<16x256xf32>
    %c4_i32_67 = arith.constant 4 : i32
    %175 = arith.cmpi sle, %9, %c4_i32_67 : i32
    %c4_i32_68 = arith.constant 4 : i32
    %176 = arith.cmpi sgt, %19, %c4_i32_68 : i32
    %177 = arith.andi %175, %176 : i1
    %178 = arith.maximumf %152, %154 : vector<16x256xf32>
    %179 = arith.select %177, %178, %152 : vector<16x256xf32>
    %c0_69 = arith.constant 0 : index
    %c5_70 = arith.constant 5 : index
    %c0_71 = arith.constant 0 : index
    %c0_72 = arith.constant 0 : index
    %180 = vector.load %arg3[%c0_69, %c5_70, %c0_71, %c0_72] : memref<1x16x16x256xf32, #tpu.memory_space<vmem>>, vector<1x1x16x256xf32>
    %181 = vector.shape_cast %180 : vector<1x1x16x256xf32> to vector<16x256xf32>
    %c5_i32 = arith.constant 5 : i32
    %182 = arith.cmpi sle, %1, %c5_i32 : i32
    %c5_i32_73 = arith.constant 5 : i32
    %183 = arith.cmpi sgt, %11, %c5_i32_73 : i32
    %184 = arith.andi %182, %183 : i1
    %185 = arith.maximumf %159, %181 : vector<16x256xf32>
    %186 = arith.select %184, %185, %159 : vector<16x256xf32>
    %c5_i32_74 = arith.constant 5 : i32
    %187 = arith.cmpi sle, %3, %c5_i32_74 : i32
    %c5_i32_75 = arith.constant 5 : i32
    %188 = arith.cmpi sgt, %13, %c5_i32_75 : i32
    %189 = arith.andi %187, %188 : i1
    %190 = arith.maximumf %164, %181 : vector<16x256xf32>
    %191 = arith.select %189, %190, %164 : vector<16x256xf32>
    %c5_i32_76 = arith.constant 5 : i32
    %192 = arith.cmpi sle, %5, %c5_i32_76 : i32
    %c5_i32_77 = arith.constant 5 : i32
    %193 = arith.cmpi sgt, %15, %c5_i32_77 : i32
    %194 = arith.andi %192, %193 : i1
    %195 = arith.maximumf %169, %181 : vector<16x256xf32>
    %196 = arith.select %194, %195, %169 : vector<16x256xf32>
    %c5_i32_78 = arith.constant 5 : i32
    %197 = arith.cmpi sle, %7, %c5_i32_78 : i32
    %c5_i32_79 = arith.constant 5 : i32
    %198 = arith.cmpi sgt, %17, %c5_i32_79 : i32
    %199 = arith.andi %197, %198 : i1
    %200 = arith.maximumf %174, %181 : vector<16x256xf32>
    %201 = arith.select %199, %200, %174 : vector<16x256xf32>
    %c5_i32_80 = arith.constant 5 : i32
    %202 = arith.cmpi sle, %9, %c5_i32_80 : i32
    %c5_i32_81 = arith.constant 5 : i32
    %203 = arith.cmpi sgt, %19, %c5_i32_81 : i32
    %204 = arith.andi %202, %203 : i1
    %205 = arith.maximumf %179, %181 : vector<16x256xf32>
    %206 = arith.select %204, %205, %179 : vector<16x256xf32>
    %c0_82 = arith.constant 0 : index
    %c6_83 = arith.constant 6 : index
    %c0_84 = arith.constant 0 : index
    %c0_85 = arith.constant 0 : index
    %207 = vector.load %arg3[%c0_82, %c6_83, %c0_84, %c0_85] : memref<1x16x16x256xf32, #tpu.memory_space<vmem>>, vector<1x1x16x256xf32>
    %208 = vector.shape_cast %207 : vector<1x1x16x256xf32> to vector<16x256xf32>
    %c6_i32 = arith.constant 6 : i32
    %209 = arith.cmpi sle, %1, %c6_i32 : i32
    %c6_i32_86 = arith.constant 6 : i32
    %210 = arith.cmpi sgt, %11, %c6_i32_86 : i32
    %211 = arith.andi %209, %210 : i1
    %212 = arith.maximumf %186, %208 : vector<16x256xf32>
    %213 = arith.select %211, %212, %186 : vector<16x256xf32>
    %c6_i32_87 = arith.constant 6 : i32
    %214 = arith.cmpi sle, %3, %c6_i32_87 : i32
    %c6_i32_88 = arith.constant 6 : i32
    %215 = arith.cmpi sgt, %13, %c6_i32_88 : i32
    %216 = arith.andi %214, %215 : i1
    %217 = arith.maximumf %191, %208 : vector<16x256xf32>
    %218 = arith.select %216, %217, %191 : vector<16x256xf32>
    %c6_i32_89 = arith.constant 6 : i32
    %219 = arith.cmpi sle, %5, %c6_i32_89 : i32
    %c6_i32_90 = arith.constant 6 : i32
    %220 = arith.cmpi sgt, %15, %c6_i32_90 : i32
    %221 = arith.andi %219, %220 : i1
    %222 = arith.maximumf %196, %208 : vector<16x256xf32>
    %223 = arith.select %221, %222, %196 : vector<16x256xf32>
    %c6_i32_91 = arith.constant 6 : i32
    %224 = arith.cmpi sle, %7, %c6_i32_91 : i32
    %c6_i32_92 = arith.constant 6 : i32
    %225 = arith.cmpi sgt, %17, %c6_i32_92 : i32
    %226 = arith.andi %224, %225 : i1
    %227 = arith.maximumf %201, %208 : vector<16x256xf32>
    %228 = arith.select %226, %227, %201 : vector<16x256xf32>
    %c6_i32_93 = arith.constant 6 : i32
    %229 = arith.cmpi sle, %9, %c6_i32_93 : i32
    %c6_i32_94 = arith.constant 6 : i32
    %230 = arith.cmpi sgt, %19, %c6_i32_94 : i32
    %231 = arith.andi %229, %230 : i1
    %232 = arith.maximumf %206, %208 : vector<16x256xf32>
    %233 = arith.select %231, %232, %206 : vector<16x256xf32>
    %c0_95 = arith.constant 0 : index
    %c7_96 = arith.constant 7 : index
    %c0_97 = arith.constant 0 : index
    %c0_98 = arith.constant 0 : index
    %234 = vector.load %arg3[%c0_95, %c7_96, %c0_97, %c0_98] : memref<1x16x16x256xf32, #tpu.memory_space<vmem>>, vector<1x1x16x256xf32>
    %235 = vector.shape_cast %234 : vector<1x1x16x256xf32> to vector<16x256xf32>
    %c7_i32 = arith.constant 7 : i32
    %236 = arith.cmpi sle, %1, %c7_i32 : i32
    %c7_i32_99 = arith.constant 7 : i32
    %237 = arith.cmpi sgt, %11, %c7_i32_99 : i32
    %238 = arith.andi %236, %237 : i1
    %239 = arith.maximumf %213, %235 : vector<16x256xf32>
    %240 = arith.select %238, %239, %213 : vector<16x256xf32>
    %c7_i32_100 = arith.constant 7 : i32
    %241 = arith.cmpi sle, %3, %c7_i32_100 : i32
    %c7_i32_101 = arith.constant 7 : i32
    %242 = arith.cmpi sgt, %13, %c7_i32_101 : i32
    %243 = arith.andi %241, %242 : i1
    %244 = arith.maximumf %218, %235 : vector<16x256xf32>
    %245 = arith.select %243, %244, %218 : vector<16x256xf32>
    %c7_i32_102 = arith.constant 7 : i32
    %246 = arith.cmpi sle, %5, %c7_i32_102 : i32
    %c7_i32_103 = arith.constant 7 : i32
    %247 = arith.cmpi sgt, %15, %c7_i32_103 : i32
    %248 = arith.andi %246, %247 : i1
    %249 = arith.maximumf %223, %235 : vector<16x256xf32>
    %250 = arith.select %248, %249, %223 : vector<16x256xf32>
    %c7_i32_104 = arith.constant 7 : i32
    %251 = arith.cmpi sle, %7, %c7_i32_104 : i32
    %c7_i32_105 = arith.constant 7 : i32
    %252 = arith.cmpi sgt, %17, %c7_i32_105 : i32
    %253 = arith.andi %251, %252 : i1
    %254 = arith.maximumf %228, %235 : vector<16x256xf32>
    %255 = arith.select %253, %254, %228 : vector<16x256xf32>
    %c7_i32_106 = arith.constant 7 : i32
    %256 = arith.cmpi sle, %9, %c7_i32_106 : i32
    %c7_i32_107 = arith.constant 7 : i32
    %257 = arith.cmpi sgt, %19, %c7_i32_107 : i32
    %258 = arith.andi %256, %257 : i1
    %259 = arith.maximumf %233, %235 : vector<16x256xf32>
    %260 = arith.select %258, %259, %233 : vector<16x256xf32>
    %c0_108 = arith.constant 0 : index
    %c8_109 = arith.constant 8 : index
    %c0_110 = arith.constant 0 : index
    %c0_111 = arith.constant 0 : index
    %261 = vector.load %arg3[%c0_108, %c8_109, %c0_110, %c0_111] : memref<1x16x16x256xf32, #tpu.memory_space<vmem>>, vector<1x1x16x256xf32>
    %262 = vector.shape_cast %261 : vector<1x1x16x256xf32> to vector<16x256xf32>
    %c8_i32 = arith.constant 8 : i32
    %263 = arith.cmpi sle, %1, %c8_i32 : i32
    %c8_i32_112 = arith.constant 8 : i32
    %264 = arith.cmpi sgt, %11, %c8_i32_112 : i32
    %265 = arith.andi %263, %264 : i1
    %266 = arith.maximumf %240, %262 : vector<16x256xf32>
    %267 = arith.select %265, %266, %240 : vector<16x256xf32>
    %c8_i32_113 = arith.constant 8 : i32
    %268 = arith.cmpi sle, %3, %c8_i32_113 : i32
    %c8_i32_114 = arith.constant 8 : i32
    %269 = arith.cmpi sgt, %13, %c8_i32_114 : i32
    %270 = arith.andi %268, %269 : i1
    %271 = arith.maximumf %245, %262 : vector<16x256xf32>
    %272 = arith.select %270, %271, %245 : vector<16x256xf32>
    %c8_i32_115 = arith.constant 8 : i32
    %273 = arith.cmpi sle, %5, %c8_i32_115 : i32
    %c8_i32_116 = arith.constant 8 : i32
    %274 = arith.cmpi sgt, %15, %c8_i32_116 : i32
    %275 = arith.andi %273, %274 : i1
    %276 = arith.maximumf %250, %262 : vector<16x256xf32>
    %277 = arith.select %275, %276, %250 : vector<16x256xf32>
    %c8_i32_117 = arith.constant 8 : i32
    %278 = arith.cmpi sle, %7, %c8_i32_117 : i32
    %c8_i32_118 = arith.constant 8 : i32
    %279 = arith.cmpi sgt, %17, %c8_i32_118 : i32
    %280 = arith.andi %278, %279 : i1
    %281 = arith.maximumf %255, %262 : vector<16x256xf32>
    %282 = arith.select %280, %281, %255 : vector<16x256xf32>
    %c8_i32_119 = arith.constant 8 : i32
    %283 = arith.cmpi sle, %9, %c8_i32_119 : i32
    %c8_i32_120 = arith.constant 8 : i32
    %284 = arith.cmpi sgt, %19, %c8_i32_120 : i32
    %285 = arith.andi %283, %284 : i1
    %286 = arith.maximumf %260, %262 : vector<16x256xf32>
    %287 = arith.select %285, %286, %260 : vector<16x256xf32>
    %c0_121 = arith.constant 0 : index
    %c9_122 = arith.constant 9 : index
    %c0_123 = arith.constant 0 : index
    %c0_124 = arith.constant 0 : index
    %288 = vector.load %arg3[%c0_121, %c9_122, %c0_123, %c0_124] : memref<1x16x16x256xf32, #tpu.memory_space<vmem>>, vector<1x1x16x256xf32>
    %289 = vector.shape_cast %288 : vector<1x1x16x256xf32> to vector<16x256xf32>
    %c9_i32 = arith.constant 9 : i32
    %290 = arith.cmpi sle, %1, %c9_i32 : i32
    %c9_i32_125 = arith.constant 9 : i32
    %291 = arith.cmpi sgt, %11, %c9_i32_125 : i32
    %292 = arith.andi %290, %291 : i1
    %293 = arith.maximumf %267, %289 : vector<16x256xf32>
    %294 = arith.select %292, %293, %267 : vector<16x256xf32>
    %c9_i32_126 = arith.constant 9 : i32
    %295 = arith.cmpi sle, %3, %c9_i32_126 : i32
    %c9_i32_127 = arith.constant 9 : i32
    %296 = arith.cmpi sgt, %13, %c9_i32_127 : i32
    %297 = arith.andi %295, %296 : i1
    %298 = arith.maximumf %272, %289 : vector<16x256xf32>
    %299 = arith.select %297, %298, %272 : vector<16x256xf32>
    %c9_i32_128 = arith.constant 9 : i32
    %300 = arith.cmpi sle, %5, %c9_i32_128 : i32
    %c9_i32_129 = arith.constant 9 : i32
    %301 = arith.cmpi sgt, %15, %c9_i32_129 : i32
    %302 = arith.andi %300, %301 : i1
    %303 = arith.maximumf %277, %289 : vector<16x256xf32>
    %304 = arith.select %302, %303, %277 : vector<16x256xf32>
    %c9_i32_130 = arith.constant 9 : i32
    %305 = arith.cmpi sle, %7, %c9_i32_130 : i32
    %c9_i32_131 = arith.constant 9 : i32
    %306 = arith.cmpi sgt, %17, %c9_i32_131 : i32
    %307 = arith.andi %305, %306 : i1
    %308 = arith.maximumf %282, %289 : vector<16x256xf32>
    %309 = arith.select %307, %308, %282 : vector<16x256xf32>
    %c9_i32_132 = arith.constant 9 : i32
    %310 = arith.cmpi sle, %9, %c9_i32_132 : i32
    %c9_i32_133 = arith.constant 9 : i32
    %311 = arith.cmpi sgt, %19, %c9_i32_133 : i32
    %312 = arith.andi %310, %311 : i1
    %313 = arith.maximumf %287, %289 : vector<16x256xf32>
    %314 = arith.select %312, %313, %287 : vector<16x256xf32>
    %c0_134 = arith.constant 0 : index
    %c10_135 = arith.constant 10 : index
    %c0_136 = arith.constant 0 : index
    %c0_137 = arith.constant 0 : index
    %315 = vector.load %arg3[%c0_134, %c10_135, %c0_136, %c0_137] : memref<1x16x16x256xf32, #tpu.memory_space<vmem>>, vector<1x1x16x256xf32>
    %316 = vector.shape_cast %315 : vector<1x1x16x256xf32> to vector<16x256xf32>
    %c10_i32 = arith.constant 10 : i32
    %317 = arith.cmpi sle, %1, %c10_i32 : i32
    %c10_i32_138 = arith.constant 10 : i32
    %318 = arith.cmpi sgt, %11, %c10_i32_138 : i32
    %319 = arith.andi %317, %318 : i1
    %320 = arith.maximumf %294, %316 : vector<16x256xf32>
    %321 = arith.select %319, %320, %294 : vector<16x256xf32>
    %c10_i32_139 = arith.constant 10 : i32
    %322 = arith.cmpi sle, %3, %c10_i32_139 : i32
    %c10_i32_140 = arith.constant 10 : i32
    %323 = arith.cmpi sgt, %13, %c10_i32_140 : i32
    %324 = arith.andi %322, %323 : i1
    %325 = arith.maximumf %299, %316 : vector<16x256xf32>
    %326 = arith.select %324, %325, %299 : vector<16x256xf32>
    %c10_i32_141 = arith.constant 10 : i32
    %327 = arith.cmpi sle, %5, %c10_i32_141 : i32
    %c10_i32_142 = arith.constant 10 : i32
    %328 = arith.cmpi sgt, %15, %c10_i32_142 : i32
    %329 = arith.andi %327, %328 : i1
    %330 = arith.maximumf %304, %316 : vector<16x256xf32>
    %331 = arith.select %329, %330, %304 : vector<16x256xf32>
    %c10_i32_143 = arith.constant 10 : i32
    %332 = arith.cmpi sle, %7, %c10_i32_143 : i32
    %c10_i32_144 = arith.constant 10 : i32
    %333 = arith.cmpi sgt, %17, %c10_i32_144 : i32
    %334 = arith.andi %332, %333 : i1
    %335 = arith.maximumf %309, %316 : vector<16x256xf32>
    %336 = arith.select %334, %335, %309 : vector<16x256xf32>
    %c10_i32_145 = arith.constant 10 : i32
    %337 = arith.cmpi sle, %9, %c10_i32_145 : i32
    %c10_i32_146 = arith.constant 10 : i32
    %338 = arith.cmpi sgt, %19, %c10_i32_146 : i32
    %339 = arith.andi %337, %338 : i1
    %340 = arith.maximumf %314, %316 : vector<16x256xf32>
    %341 = arith.select %339, %340, %314 : vector<16x256xf32>
    %c0_147 = arith.constant 0 : index
    %c11_148 = arith.constant 11 : index
    %c0_149 = arith.constant 0 : index
    %c0_150 = arith.constant 0 : index
    %342 = vector.load %arg3[%c0_147, %c11_148, %c0_149, %c0_150] : memref<1x16x16x256xf32, #tpu.memory_space<vmem>>, vector<1x1x16x256xf32>
    %343 = vector.shape_cast %342 : vector<1x1x16x256xf32> to vector<16x256xf32>
    %c11_i32 = arith.constant 11 : i32
    %344 = arith.cmpi sle, %1, %c11_i32 : i32
    %c11_i32_151 = arith.constant 11 : i32
    %345 = arith.cmpi sgt, %11, %c11_i32_151 : i32
    %346 = arith.andi %344, %345 : i1
    %347 = arith.maximumf %321, %343 : vector<16x256xf32>
    %348 = arith.select %346, %347, %321 : vector<16x256xf32>
    %c11_i32_152 = arith.constant 11 : i32
    %349 = arith.cmpi sle, %3, %c11_i32_152 : i32
    %c11_i32_153 = arith.constant 11 : i32
    %350 = arith.cmpi sgt, %13, %c11_i32_153 : i32
    %351 = arith.andi %349, %350 : i1
    %352 = arith.maximumf %326, %343 : vector<16x256xf32>
    %353 = arith.select %351, %352, %326 : vector<16x256xf32>
    %c11_i32_154 = arith.constant 11 : i32
    %354 = arith.cmpi sle, %5, %c11_i32_154 : i32
    %c11_i32_155 = arith.constant 11 : i32
    %355 = arith.cmpi sgt, %15, %c11_i32_155 : i32
    %356 = arith.andi %354, %355 : i1
    %357 = arith.maximumf %331, %343 : vector<16x256xf32>
    %358 = arith.select %356, %357, %331 : vector<16x256xf32>
    %c11_i32_156 = arith.constant 11 : i32
    %359 = arith.cmpi sle, %7, %c11_i32_156 : i32
    %c11_i32_157 = arith.constant 11 : i32
    %360 = arith.cmpi sgt, %17, %c11_i32_157 : i32
    %361 = arith.andi %359, %360 : i1
    %362 = arith.maximumf %336, %343 : vector<16x256xf32>
    %363 = arith.select %361, %362, %336 : vector<16x256xf32>
    %c11_i32_158 = arith.constant 11 : i32
    %364 = arith.cmpi sle, %9, %c11_i32_158 : i32
    %c11_i32_159 = arith.constant 11 : i32
    %365 = arith.cmpi sgt, %19, %c11_i32_159 : i32
    %366 = arith.andi %364, %365 : i1
    %367 = arith.maximumf %341, %343 : vector<16x256xf32>
    %368 = arith.select %366, %367, %341 : vector<16x256xf32>
    %c0_160 = arith.constant 0 : index
    %c12_161 = arith.constant 12 : index
    %c0_162 = arith.constant 0 : index
    %c0_163 = arith.constant 0 : index
    %369 = vector.load %arg3[%c0_160, %c12_161, %c0_162, %c0_163] : memref<1x16x16x256xf32, #tpu.memory_space<vmem>>, vector<1x1x16x256xf32>
    %370 = vector.shape_cast %369 : vector<1x1x16x256xf32> to vector<16x256xf32>
    %c12_i32 = arith.constant 12 : i32
    %371 = arith.cmpi sle, %1, %c12_i32 : i32
    %c12_i32_164 = arith.constant 12 : i32
    %372 = arith.cmpi sgt, %11, %c12_i32_164 : i32
    %373 = arith.andi %371, %372 : i1
    %374 = arith.maximumf %348, %370 : vector<16x256xf32>
    %375 = arith.select %373, %374, %348 : vector<16x256xf32>
    %c12_i32_165 = arith.constant 12 : i32
    %376 = arith.cmpi sle, %3, %c12_i32_165 : i32
    %c12_i32_166 = arith.constant 12 : i32
    %377 = arith.cmpi sgt, %13, %c12_i32_166 : i32
    %378 = arith.andi %376, %377 : i1
    %379 = arith.maximumf %353, %370 : vector<16x256xf32>
    %380 = arith.select %378, %379, %353 : vector<16x256xf32>
    %c12_i32_167 = arith.constant 12 : i32
    %381 = arith.cmpi sle, %5, %c12_i32_167 : i32
    %c12_i32_168 = arith.constant 12 : i32
    %382 = arith.cmpi sgt, %15, %c12_i32_168 : i32
    %383 = arith.andi %381, %382 : i1
    %384 = arith.maximumf %358, %370 : vector<16x256xf32>
    %385 = arith.select %383, %384, %358 : vector<16x256xf32>
    %c12_i32_169 = arith.constant 12 : i32
    %386 = arith.cmpi sle, %7, %c12_i32_169 : i32
    %c12_i32_170 = arith.constant 12 : i32
    %387 = arith.cmpi sgt, %17, %c12_i32_170 : i32
    %388 = arith.andi %386, %387 : i1
    %389 = arith.maximumf %363, %370 : vector<16x256xf32>
    %390 = arith.select %388, %389, %363 : vector<16x256xf32>
    %c12_i32_171 = arith.constant 12 : i32
    %391 = arith.cmpi sle, %9, %c12_i32_171 : i32
    %c12_i32_172 = arith.constant 12 : i32
    %392 = arith.cmpi sgt, %19, %c12_i32_172 : i32
    %393 = arith.andi %391, %392 : i1
    %394 = arith.maximumf %368, %370 : vector<16x256xf32>
    %395 = arith.select %393, %394, %368 : vector<16x256xf32>
    %c0_173 = arith.constant 0 : index
    %c13_174 = arith.constant 13 : index
    %c0_175 = arith.constant 0 : index
    %c0_176 = arith.constant 0 : index
    %396 = vector.load %arg3[%c0_173, %c13_174, %c0_175, %c0_176] : memref<1x16x16x256xf32, #tpu.memory_space<vmem>>, vector<1x1x16x256xf32>
    %397 = vector.shape_cast %396 : vector<1x1x16x256xf32> to vector<16x256xf32>
    %c13_i32 = arith.constant 13 : i32
    %398 = arith.cmpi sle, %1, %c13_i32 : i32
    %c13_i32_177 = arith.constant 13 : i32
    %399 = arith.cmpi sgt, %11, %c13_i32_177 : i32
    %400 = arith.andi %398, %399 : i1
    %401 = arith.maximumf %375, %397 : vector<16x256xf32>
    %402 = arith.select %400, %401, %375 : vector<16x256xf32>
    %c13_i32_178 = arith.constant 13 : i32
    %403 = arith.cmpi sle, %3, %c13_i32_178 : i32
    %c13_i32_179 = arith.constant 13 : i32
    %404 = arith.cmpi sgt, %13, %c13_i32_179 : i32
    %405 = arith.andi %403, %404 : i1
    %406 = arith.maximumf %380, %397 : vector<16x256xf32>
    %407 = arith.select %405, %406, %380 : vector<16x256xf32>
    %c13_i32_180 = arith.constant 13 : i32
    %408 = arith.cmpi sle, %5, %c13_i32_180 : i32
    %c13_i32_181 = arith.constant 13 : i32
    %409 = arith.cmpi sgt, %15, %c13_i32_181 : i32
    %410 = arith.andi %408, %409 : i1
    %411 = arith.maximumf %385, %397 : vector<16x256xf32>
    %412 = arith.select %410, %411, %385 : vector<16x256xf32>
    %c13_i32_182 = arith.constant 13 : i32
    %413 = arith.cmpi sle, %7, %c13_i32_182 : i32
    %c13_i32_183 = arith.constant 13 : i32
    %414 = arith.cmpi sgt, %17, %c13_i32_183 : i32
    %415 = arith.andi %413, %414 : i1
    %416 = arith.maximumf %390, %397 : vector<16x256xf32>
    %417 = arith.select %415, %416, %390 : vector<16x256xf32>
    %c13_i32_184 = arith.constant 13 : i32
    %418 = arith.cmpi sle, %9, %c13_i32_184 : i32
    %c13_i32_185 = arith.constant 13 : i32
    %419 = arith.cmpi sgt, %19, %c13_i32_185 : i32
    %420 = arith.andi %418, %419 : i1
    %421 = arith.maximumf %395, %397 : vector<16x256xf32>
    %422 = arith.select %420, %421, %395 : vector<16x256xf32>
    %c0_186 = arith.constant 0 : index
    %c14_187 = arith.constant 14 : index
    %c0_188 = arith.constant 0 : index
    %c0_189 = arith.constant 0 : index
    %423 = vector.load %arg3[%c0_186, %c14_187, %c0_188, %c0_189] : memref<1x16x16x256xf32, #tpu.memory_space<vmem>>, vector<1x1x16x256xf32>
    %424 = vector.shape_cast %423 : vector<1x1x16x256xf32> to vector<16x256xf32>
    %c14_i32 = arith.constant 14 : i32
    %425 = arith.cmpi sle, %1, %c14_i32 : i32
    %c14_i32_190 = arith.constant 14 : i32
    %426 = arith.cmpi sgt, %11, %c14_i32_190 : i32
    %427 = arith.andi %425, %426 : i1
    %428 = arith.maximumf %402, %424 : vector<16x256xf32>
    %429 = arith.select %427, %428, %402 : vector<16x256xf32>
    %c14_i32_191 = arith.constant 14 : i32
    %430 = arith.cmpi sle, %3, %c14_i32_191 : i32
    %c14_i32_192 = arith.constant 14 : i32
    %431 = arith.cmpi sgt, %13, %c14_i32_192 : i32
    %432 = arith.andi %430, %431 : i1
    %433 = arith.maximumf %407, %424 : vector<16x256xf32>
    %434 = arith.select %432, %433, %407 : vector<16x256xf32>
    %c14_i32_193 = arith.constant 14 : i32
    %435 = arith.cmpi sle, %5, %c14_i32_193 : i32
    %c14_i32_194 = arith.constant 14 : i32
    %436 = arith.cmpi sgt, %15, %c14_i32_194 : i32
    %437 = arith.andi %435, %436 : i1
    %438 = arith.maximumf %412, %424 : vector<16x256xf32>
    %439 = arith.select %437, %438, %412 : vector<16x256xf32>
    %c14_i32_195 = arith.constant 14 : i32
    %440 = arith.cmpi sle, %7, %c14_i32_195 : i32
    %c14_i32_196 = arith.constant 14 : i32
    %441 = arith.cmpi sgt, %17, %c14_i32_196 : i32
    %442 = arith.andi %440, %441 : i1
    %443 = arith.maximumf %417, %424 : vector<16x256xf32>
    %444 = arith.select %442, %443, %417 : vector<16x256xf32>
    %c14_i32_197 = arith.constant 14 : i32
    %445 = arith.cmpi sle, %9, %c14_i32_197 : i32
    %c14_i32_198 = arith.constant 14 : i32
    %446 = arith.cmpi sgt, %19, %c14_i32_198 : i32
    %447 = arith.andi %445, %446 : i1
    %448 = arith.maximumf %422, %424 : vector<16x256xf32>
    %449 = arith.select %447, %448, %422 : vector<16x256xf32>
    %c0_199 = arith.constant 0 : index
    %c15_200 = arith.constant 15 : index
    %c0_201 = arith.constant 0 : index
    %c0_202 = arith.constant 0 : index
    %450 = vector.load %arg3[%c0_199, %c15_200, %c0_201, %c0_202] : memref<1x16x16x256xf32, #tpu.memory_space<vmem>>, vector<1x1x16x256xf32>
    %451 = vector.shape_cast %450 : vector<1x1x16x256xf32> to vector<16x256xf32>
    %c15_i32 = arith.constant 15 : i32
    %452 = arith.cmpi sle, %1, %c15_i32 : i32
    %c15_i32_203 = arith.constant 15 : i32
    %453 = arith.cmpi sgt, %11, %c15_i32_203 : i32
    %454 = arith.andi %452, %453 : i1
    %455 = arith.maximumf %429, %451 : vector<16x256xf32>
    %456 = arith.select %454, %455, %429 : vector<16x256xf32>
    %c15_i32_204 = arith.constant 15 : i32
    %457 = arith.cmpi sle, %3, %c15_i32_204 : i32
    %c15_i32_205 = arith.constant 15 : i32
    %458 = arith.cmpi sgt, %13, %c15_i32_205 : i32
    %459 = arith.andi %457, %458 : i1
    %460 = arith.maximumf %434, %451 : vector<16x256xf32>
    %461 = arith.select %459, %460, %434 : vector<16x256xf32>
    %c15_i32_206 = arith.constant 15 : i32
    %462 = arith.cmpi sle, %5, %c15_i32_206 : i32
    %c15_i32_207 = arith.constant 15 : i32
    %463 = arith.cmpi sgt, %15, %c15_i32_207 : i32
    %464 = arith.andi %462, %463 : i1
    %465 = arith.maximumf %439, %451 : vector<16x256xf32>
    %466 = arith.select %464, %465, %439 : vector<16x256xf32>
    %c15_i32_208 = arith.constant 15 : i32
    %467 = arith.cmpi sle, %7, %c15_i32_208 : i32
    %c15_i32_209 = arith.constant 15 : i32
    %468 = arith.cmpi sgt, %17, %c15_i32_209 : i32
    %469 = arith.andi %467, %468 : i1
    %470 = arith.maximumf %444, %451 : vector<16x256xf32>
    %471 = arith.select %469, %470, %444 : vector<16x256xf32>
    %c15_i32_210 = arith.constant 15 : i32
    %472 = arith.cmpi sle, %9, %c15_i32_210 : i32
    %c15_i32_211 = arith.constant 15 : i32
    %473 = arith.cmpi sgt, %19, %c15_i32_211 : i32
    %474 = arith.andi %472, %473 : i1
    %475 = arith.maximumf %449, %451 : vector<16x256xf32>
    %476 = arith.select %474, %475, %449 : vector<16x256xf32>
    %477 = tpu.iota {dimensions = array<i32: 0>} : vector<16x1xi32>
    %478 = vector.broadcast %21 : i32 to vector<16x1xi32>
    %479 = arith.cmpi sge, %477, %478 : vector<16x1xi32>
    %480 = vector.broadcast %31 : i32 to vector<16x1xi32>
    %481 = arith.cmpi slt, %477, %480 : vector<16x1xi32>
    %482 = arith.andi %479, %481 : vector<16x1xi1>
    %483 = arith.cmpi sle, %31, %21 : i32
    %cst_212 = arith.constant 0xFF800000 : f32
    %484 = vector.shape_cast %482 : vector<16x1xi1> to vector<16x1xi1>
    %485 = vector.broadcast %484 : vector<16x1xi1> to vector<16x256xi1>
    %486 = vector.broadcast %cst_212 : f32 to vector<16x256xf32>
    %487 = arith.select %485, %456, %486 : vector<16x256xi1>, vector<16x256xf32>
    %cst_213 = arith.constant dense<0xFF800000> : vector<256xf32>
    %488 = vector.multi_reduction <maximumf>, %487, %cst_213 [0] : vector<16x256xf32> to vector<256xf32>
    %489 = arith.cmpi sle, %11, %1 : i32
    %490 = arith.ori %489, %483 : i1
    %cst_214 = arith.constant 0.000000e+00 : f32
    %491 = vector.broadcast %cst_214 : f32 to vector<256xf32>
    %492 = arith.select %490, %491, %488 : vector<256xf32>
    %c0_215 = arith.constant 0 : index
    %c0_216 = arith.constant 0 : index
    %c0_217 = arith.constant 0 : index
    %493 = vector.load %arg4[%c0_215, %c0_216, %c0_217] : memref<1x25x256xf32, #tpu.memory_space<vmem>>, vector<1x1x256xf32>
    %494 = vector.shape_cast %493 : vector<1x1x256xf32> to vector<256xf32>
    %495 = vector.shape_cast %492 : vector<256xf32> to vector<1x1x256xf32>
    tpu.vector_store %arg4[%c0_215, %c0_216, %c0_217], %495 {strides = array<i32>} : memref<1x25x256xf32, #tpu.memory_space<vmem>>, vector<1x1x256xf32>,
    %cst_218 = arith.constant 0xFF800000 : f32
    %496 = vector.shape_cast %482 : vector<16x1xi1> to vector<16x1xi1>
    %497 = vector.broadcast %496 : vector<16x1xi1> to vector<16x256xi1>
    %498 = vector.broadcast %cst_218 : f32 to vector<16x256xf32>
    %499 = arith.select %497, %461, %498 : vector<16x256xi1>, vector<16x256xf32>
    %cst_219 = arith.constant dense<0xFF800000> : vector<256xf32>
    %500 = vector.multi_reduction <maximumf>, %499, %cst_219 [0] : vector<16x256xf32> to vector<256xf32>
    %501 = arith.cmpi sle, %13, %3 : i32
    %502 = arith.ori %501, %483 : i1
    %cst_220 = arith.constant 0.000000e+00 : f32
    %503 = vector.broadcast %cst_220 : f32 to vector<256xf32>
    %504 = arith.select %502, %503, %500 : vector<256xf32>
    %c0_221 = arith.constant 0 : index
    %c5_222 = arith.constant 5 : index
    %c0_223 = arith.constant 0 : index
    %505 = vector.load %arg4[%c0_221, %c5_222, %c0_223] : memref<1x25x256xf32, #tpu.memory_space<vmem>>, vector<1x1x256xf32>
    %506 = vector.shape_cast %505 : vector<1x1x256xf32> to vector<256xf32>
    %507 = vector.shape_cast %504 : vector<256xf32> to vector<1x1x256xf32>
    tpu.vector_store %arg4[%c0_221, %c5_222, %c0_223], %507 {strides = array<i32>} : memref<1x25x256xf32, #tpu.memory_space<vmem>>, vector<1x1x256xf32>,
    %cst_224 = arith.constant 0xFF800000 : f32
    %508 = vector.shape_cast %482 : vector<16x1xi1> to vector<16x1xi1>
    %509 = vector.broadcast %508 : vector<16x1xi1> to vector<16x256xi1>
    %510 = vector.broadcast %cst_224 : f32 to vector<16x256xf32>
    %511 = arith.select %509, %466, %510 : vector<16x256xi1>, vector<16x256xf32>
    %cst_225 = arith.constant dense<0xFF800000> : vector<256xf32>
    %512 = vector.multi_reduction <maximumf>, %511, %cst_225 [0] : vector<16x256xf32> to vector<256xf32>
    %513 = arith.cmpi sle, %15, %5 : i32
    %514 = arith.ori %513, %483 : i1
    %cst_226 = arith.constant 0.000000e+00 : f32
    %515 = vector.broadcast %cst_226 : f32 to vector<256xf32>
    %516 = arith.select %514, %515, %512 : vector<256xf32>
    %c0_227 = arith.constant 0 : index
    %c10_228 = arith.constant 10 : index
    %c0_229 = arith.constant 0 : index
    %517 = vector.load %arg4[%c0_227, %c10_228, %c0_229] : memref<1x25x256xf32, #tpu.memory_space<vmem>>, vector<1x1x256xf32>
    %518 = vector.shape_cast %517 : vector<1x1x256xf32> to vector<256xf32>
    %519 = vector.shape_cast %516 : vector<256xf32> to vector<1x1x256xf32>
    tpu.vector_store %arg4[%c0_227, %c10_228, %c0_229], %519 {strides = array<i32>} : memref<1x25x256xf32, #tpu.memory_space<vmem>>, vector<1x1x256xf32>,
    %cst_230 = arith.constant 0xFF800000 : f32
    %520 = vector.shape_cast %482 : vector<16x1xi1> to vector<16x1xi1>
    %521 = vector.broadcast %520 : vector<16x1xi1> to vector<16x256xi1>
    %522 = vector.broadcast %cst_230 : f32 to vector<16x256xf32>
    %523 = arith.select %521, %471, %522 : vector<16x256xi1>, vector<16x256xf32>
    %cst_231 = arith.constant dense<0xFF800000> : vector<256xf32>
    %524 = vector.multi_reduction <maximumf>, %523, %cst_231 [0] : vector<16x256xf32> to vector<256xf32>
    %525 = arith.cmpi sle, %17, %7 : i32
    %526 = arith.ori %525, %483 : i1
    %cst_232 = arith.constant 0.000000e+00 : f32
    %527 = vector.broadcast %cst_232 : f32 to vector<256xf32>
    %528 = arith.select %526, %527, %524 : vector<256xf32>
    %c0_233 = arith.constant 0 : index
    %c15_234 = arith.constant 15 : index
    %c0_235 = arith.constant 0 : index
    %529 = vector.load %arg4[%c0_233, %c15_234, %c0_235] : memref<1x25x256xf32, #tpu.memory_space<vmem>>, vector<1x1x256xf32>
    %530 = vector.shape_cast %529 : vector<1x1x256xf32> to vector<256xf32>
    %531 = vector.shape_cast %528 : vector<256xf32> to vector<1x1x256xf32>
    tpu.vector_store %arg4[%c0_233, %c15_234, %c0_235], %531 {strides = array<i32>} : memref<1x25x256xf32, #tpu.memory_space<vmem>>, vector<1x1x256xf32>,
    %cst_236 = arith.constant 0xFF800000 : f32
    %532 = vector.shape_cast %482 : vector<16x1xi1> to vector<16x1xi1>
    %533 = vector.broadcast %532 : vector<16x1xi1> to vector<16x256xi1>
    %534 = vector.broadcast %cst_236 : f32 to vector<16x256xf32>
    %535 = arith.select %533, %476, %534 : vector<16x256xi1>, vector<16x256xf32>
    %cst_237 = arith.constant dense<0xFF800000> : vector<256xf32>
    %536 = vector.multi_reduction <maximumf>, %535, %cst_237 [0] : vector<16x256xf32> to vector<256xf32>
    %537 = arith.cmpi sle, %19, %9 : i32
    %538 = arith.ori %537, %483 : i1
    %cst_238 = arith.constant 0.000000e+00 : f32
    %539 = vector.broadcast %cst_238 : f32 to vector<256xf32>
    %540 = arith.select %538, %539, %536 : vector<256xf32>
    %c0_239 = arith.constant 0 : index
    %c20 = arith.constant 20 : index
    %c0_240 = arith.constant 0 : index
    %541 = vector.load %arg4[%c0_239, %c20, %c0_240] : memref<1x25x256xf32, #tpu.memory_space<vmem>>, vector<1x1x256xf32>
    %542 = vector.shape_cast %541 : vector<1x1x256xf32> to vector<256xf32>
    %543 = vector.shape_cast %540 : vector<256xf32> to vector<1x1x256xf32>
    tpu.vector_store %arg4[%c0_239, %c20, %c0_240], %543 {strides = array<i32>} : memref<1x25x256xf32, #tpu.memory_space<vmem>>, vector<1x1x256xf32>,
    %544 = vector.broadcast %23 : i32 to vector<16x1xi32>
    %545 = arith.cmpi sge, %477, %544 : vector<16x1xi32>
    %546 = vector.broadcast %33 : i32 to vector<16x1xi32>
    %547 = arith.cmpi slt, %477, %546 : vector<16x1xi32>
    %548 = arith.andi %545, %547 : vector<16x1xi1>
    %549 = arith.cmpi sle, %33, %23 : i32
    %cst_241 = arith.constant 0xFF800000 : f32
    %550 = vector.shape_cast %548 : vector<16x1xi1> to vector<16x1xi1>
    %551 = vector.broadcast %550 : vector<16x1xi1> to vector<16x256xi1>
    %552 = vector.broadcast %cst_241 : f32 to vector<16x256xf32>
    %553 = arith.select %551, %456, %552 : vector<16x256xi1>, vector<16x256xf32>
    %cst_242 = arith.constant dense<0xFF800000> : vector<256xf32>
    %554 = vector.multi_reduction <maximumf>, %553, %cst_242 [0] : vector<16x256xf32> to vector<256xf32>
    %555 = arith.cmpi sle, %11, %1 : i32
    %556 = arith.ori %555, %549 : i1
    %cst_243 = arith.constant 0.000000e+00 : f32
    %557 = vector.broadcast %cst_243 : f32 to vector<256xf32>
    %558 = arith.select %556, %557, %554 : vector<256xf32>
    %c0_244 = arith.constant 0 : index
    %c1_245 = arith.constant 1 : index
    %c0_246 = arith.constant 0 : index
    %559 = vector.load %arg4[%c0_244, %c1_245, %c0_246] : memref<1x25x256xf32, #tpu.memory_space<vmem>>, vector<1x1x256xf32>
    %560 = vector.shape_cast %559 : vector<1x1x256xf32> to vector<256xf32>
    %561 = vector.shape_cast %558 : vector<256xf32> to vector<1x1x256xf32>
    tpu.vector_store %arg4[%c0_244, %c1_245, %c0_246], %561 {strides = array<i32>} : memref<1x25x256xf32, #tpu.memory_space<vmem>>, vector<1x1x256xf32>,
    %cst_247 = arith.constant 0xFF800000 : f32
    %562 = vector.shape_cast %548 : vector<16x1xi1> to vector<16x1xi1>
    %563 = vector.broadcast %562 : vector<16x1xi1> to vector<16x256xi1>
    %564 = vector.broadcast %cst_247 : f32 to vector<16x256xf32>
    %565 = arith.select %563, %461, %564 : vector<16x256xi1>, vector<16x256xf32>
    %cst_248 = arith.constant dense<0xFF800000> : vector<256xf32>
    %566 = vector.multi_reduction <maximumf>, %565, %cst_248 [0] : vector<16x256xf32> to vector<256xf32>
    %567 = arith.cmpi sle, %13, %3 : i32
    %568 = arith.ori %567, %549 : i1
    %cst_249 = arith.constant 0.000000e+00 : f32
    %569 = vector.broadcast %cst_249 : f32 to vector<256xf32>
    %570 = arith.select %568, %569, %566 : vector<256xf32>
    %c0_250 = arith.constant 0 : index
    %c6_251 = arith.constant 6 : index
    %c0_252 = arith.constant 0 : index
    %571 = vector.load %arg4[%c0_250, %c6_251, %c0_252] : memref<1x25x256xf32, #tpu.memory_space<vmem>>, vector<1x1x256xf32>
    %572 = vector.shape_cast %571 : vector<1x1x256xf32> to vector<256xf32>
    %573 = vector.shape_cast %570 : vector<256xf32> to vector<1x1x256xf32>
    tpu.vector_store %arg4[%c0_250, %c6_251, %c0_252], %573 {strides = array<i32>} : memref<1x25x256xf32, #tpu.memory_space<vmem>>, vector<1x1x256xf32>,
    %cst_253 = arith.constant 0xFF800000 : f32
    %574 = vector.shape_cast %548 : vector<16x1xi1> to vector<16x1xi1>
    %575 = vector.broadcast %574 : vector<16x1xi1> to vector<16x256xi1>
    %576 = vector.broadcast %cst_253 : f32 to vector<16x256xf32>
    %577 = arith.select %575, %466, %576 : vector<16x256xi1>, vector<16x256xf32>
    %cst_254 = arith.constant dense<0xFF800000> : vector<256xf32>
    %578 = vector.multi_reduction <maximumf>, %577, %cst_254 [0] : vector<16x256xf32> to vector<256xf32>
    %579 = arith.cmpi sle, %15, %5 : i32
    %580 = arith.ori %579, %549 : i1
    %cst_255 = arith.constant 0.000000e+00 : f32
    %581 = vector.broadcast %cst_255 : f32 to vector<256xf32>
    %582 = arith.select %580, %581, %578 : vector<256xf32>
    %c0_256 = arith.constant 0 : index
    %c11_257 = arith.constant 11 : index
    %c0_258 = arith.constant 0 : index
    %583 = vector.load %arg4[%c0_256, %c11_257, %c0_258] : memref<1x25x256xf32, #tpu.memory_space<vmem>>, vector<1x1x256xf32>
    %584 = vector.shape_cast %583 : vector<1x1x256xf32> to vector<256xf32>
    %585 = vector.shape_cast %582 : vector<256xf32> to vector<1x1x256xf32>
    tpu.vector_store %arg4[%c0_256, %c11_257, %c0_258], %585 {strides = array<i32>} : memref<1x25x256xf32, #tpu.memory_space<vmem>>, vector<1x1x256xf32>,
    %cst_259 = arith.constant 0xFF800000 : f32
    %586 = vector.shape_cast %548 : vector<16x1xi1> to vector<16x1xi1>
    %587 = vector.broadcast %586 : vector<16x1xi1> to vector<16x256xi1>
    %588 = vector.broadcast %cst_259 : f32 to vector<16x256xf32>
    %589 = arith.select %587, %471, %588 : vector<16x256xi1>, vector<16x256xf32>
    %cst_260 = arith.constant dense<0xFF800000> : vector<256xf32>
    %590 = vector.multi_reduction <maximumf>, %589, %cst_260 [0] : vector<16x256xf32> to vector<256xf32>
    %591 = arith.cmpi sle, %17, %7 : i32
    %592 = arith.ori %591, %549 : i1
    %cst_261 = arith.constant 0.000000e+00 : f32
    %593 = vector.broadcast %cst_261 : f32 to vector<256xf32>
    %594 = arith.select %592, %593, %590 : vector<256xf32>
    %c0_262 = arith.constant 0 : index
    %c16_263 = arith.constant 16 : index
    %c0_264 = arith.constant 0 : index
    %595 = vector.load %arg4[%c0_262, %c16_263, %c0_264] : memref<1x25x256xf32, #tpu.memory_space<vmem>>, vector<1x1x256xf32>
    %596 = vector.shape_cast %595 : vector<1x1x256xf32> to vector<256xf32>
    %597 = vector.shape_cast %594 : vector<256xf32> to vector<1x1x256xf32>
    tpu.vector_store %arg4[%c0_262, %c16_263, %c0_264], %597 {strides = array<i32>} : memref<1x25x256xf32, #tpu.memory_space<vmem>>, vector<1x1x256xf32>,
    %cst_265 = arith.constant 0xFF800000 : f32
    %598 = vector.shape_cast %548 : vector<16x1xi1> to vector<16x1xi1>
    %599 = vector.broadcast %598 : vector<16x1xi1> to vector<16x256xi1>
    %600 = vector.broadcast %cst_265 : f32 to vector<16x256xf32>
    %601 = arith.select %599, %476, %600 : vector<16x256xi1>, vector<16x256xf32>
    %cst_266 = arith.constant dense<0xFF800000> : vector<256xf32>
    %602 = vector.multi_reduction <maximumf>, %601, %cst_266 [0] : vector<16x256xf32> to vector<256xf32>
    %603 = arith.cmpi sle, %19, %9 : i32
    %604 = arith.ori %603, %549 : i1
    %cst_267 = arith.constant 0.000000e+00 : f32
    %605 = vector.broadcast %cst_267 : f32 to vector<256xf32>
    %606 = arith.select %604, %605, %602 : vector<256xf32>
    %c0_268 = arith.constant 0 : index
    %c21 = arith.constant 21 : index
    %c0_269 = arith.constant 0 : index
    %607 = vector.load %arg4[%c0_268, %c21, %c0_269] : memref<1x25x256xf32, #tpu.memory_space<vmem>>, vector<1x1x256xf32>
    %608 = vector.shape_cast %607 : vector<1x1x256xf32> to vector<256xf32>
    %609 = vector.shape_cast %606 : vector<256xf32> to vector<1x1x256xf32>
    tpu.vector_store %arg4[%c0_268, %c21, %c0_269], %609 {strides = array<i32>} : memref<1x25x256xf32, #tpu.memory_space<vmem>>, vector<1x1x256xf32>,
    %610 = vector.broadcast %25 : i32 to vector<16x1xi32>
    %611 = arith.cmpi sge, %477, %610 : vector<16x1xi32>
    %612 = vector.broadcast %35 : i32 to vector<16x1xi32>
    %613 = arith.cmpi slt, %477, %612 : vector<16x1xi32>
    %614 = arith.andi %611, %613 : vector<16x1xi1>
    %615 = arith.cmpi sle, %35, %25 : i32
    %cst_270 = arith.constant 0xFF800000 : f32
    %616 = vector.shape_cast %614 : vector<16x1xi1> to vector<16x1xi1>
    %617 = vector.broadcast %616 : vector<16x1xi1> to vector<16x256xi1>
    %618 = vector.broadcast %cst_270 : f32 to vector<16x256xf32>
    %619 = arith.select %617, %456, %618 : vector<16x256xi1>, vector<16x256xf32>
    %cst_271 = arith.constant dense<0xFF800000> : vector<256xf32>
    %620 = vector.multi_reduction <maximumf>, %619, %cst_271 [0] : vector<16x256xf32> to vector<256xf32>
    %621 = arith.cmpi sle, %11, %1 : i32
    %622 = arith.ori %621, %615 : i1
    %cst_272 = arith.constant 0.000000e+00 : f32
    %623 = vector.broadcast %cst_272 : f32 to vector<256xf32>
    %624 = arith.select %622, %623, %620 : vector<256xf32>
    %c0_273 = arith.constant 0 : index
    %c2_274 = arith.constant 2 : index
    %c0_275 = arith.constant 0 : index
    %625 = vector.load %arg4[%c0_273, %c2_274, %c0_275] : memref<1x25x256xf32, #tpu.memory_space<vmem>>, vector<1x1x256xf32>
    %626 = vector.shape_cast %625 : vector<1x1x256xf32> to vector<256xf32>
    %627 = vector.shape_cast %624 : vector<256xf32> to vector<1x1x256xf32>
    tpu.vector_store %arg4[%c0_273, %c2_274, %c0_275], %627 {strides = array<i32>} : memref<1x25x256xf32, #tpu.memory_space<vmem>>, vector<1x1x256xf32>,
    %cst_276 = arith.constant 0xFF800000 : f32
    %628 = vector.shape_cast %614 : vector<16x1xi1> to vector<16x1xi1>
    %629 = vector.broadcast %628 : vector<16x1xi1> to vector<16x256xi1>
    %630 = vector.broadcast %cst_276 : f32 to vector<16x256xf32>
    %631 = arith.select %629, %461, %630 : vector<16x256xi1>, vector<16x256xf32>
    %cst_277 = arith.constant dense<0xFF800000> : vector<256xf32>
    %632 = vector.multi_reduction <maximumf>, %631, %cst_277 [0] : vector<16x256xf32> to vector<256xf32>
    %633 = arith.cmpi sle, %13, %3 : i32
    %634 = arith.ori %633, %615 : i1
    %cst_278 = arith.constant 0.000000e+00 : f32
    %635 = vector.broadcast %cst_278 : f32 to vector<256xf32>
    %636 = arith.select %634, %635, %632 : vector<256xf32>
    %c0_279 = arith.constant 0 : index
    %c7_280 = arith.constant 7 : index
    %c0_281 = arith.constant 0 : index
    %637 = vector.load %arg4[%c0_279, %c7_280, %c0_281] : memref<1x25x256xf32, #tpu.memory_space<vmem>>, vector<1x1x256xf32>
    %638 = vector.shape_cast %637 : vector<1x1x256xf32> to vector<256xf32>
    %639 = vector.shape_cast %636 : vector<256xf32> to vector<1x1x256xf32>
    tpu.vector_store %arg4[%c0_279, %c7_280, %c0_281], %639 {strides = array<i32>} : memref<1x25x256xf32, #tpu.memory_space<vmem>>, vector<1x1x256xf32>,
    %cst_282 = arith.constant 0xFF800000 : f32
    %640 = vector.shape_cast %614 : vector<16x1xi1> to vector<16x1xi1>
    %641 = vector.broadcast %640 : vector<16x1xi1> to vector<16x256xi1>
    %642 = vector.broadcast %cst_282 : f32 to vector<16x256xf32>
    %643 = arith.select %641, %466, %642 : vector<16x256xi1>, vector<16x256xf32>
    %cst_283 = arith.constant dense<0xFF800000> : vector<256xf32>
    %644 = vector.multi_reduction <maximumf>, %643, %cst_283 [0] : vector<16x256xf32> to vector<256xf32>
    %645 = arith.cmpi sle, %15, %5 : i32
    %646 = arith.ori %645, %615 : i1
    %cst_284 = arith.constant 0.000000e+00 : f32
    %647 = vector.broadcast %cst_284 : f32 to vector<256xf32>
    %648 = arith.select %646, %647, %644 : vector<256xf32>
    %c0_285 = arith.constant 0 : index
    %c12_286 = arith.constant 12 : index
    %c0_287 = arith.constant 0 : index
    %649 = vector.load %arg4[%c0_285, %c12_286, %c0_287] : memref<1x25x256xf32, #tpu.memory_space<vmem>>, vector<1x1x256xf32>
    %650 = vector.shape_cast %649 : vector<1x1x256xf32> to vector<256xf32>
    %651 = vector.shape_cast %648 : vector<256xf32> to vector<1x1x256xf32>
    tpu.vector_store %arg4[%c0_285, %c12_286, %c0_287], %651 {strides = array<i32>} : memref<1x25x256xf32, #tpu.memory_space<vmem>>, vector<1x1x256xf32>,
    %cst_288 = arith.constant 0xFF800000 : f32
    %652 = vector.shape_cast %614 : vector<16x1xi1> to vector<16x1xi1>
    %653 = vector.broadcast %652 : vector<16x1xi1> to vector<16x256xi1>
    %654 = vector.broadcast %cst_288 : f32 to vector<16x256xf32>
    %655 = arith.select %653, %471, %654 : vector<16x256xi1>, vector<16x256xf32>
    %cst_289 = arith.constant dense<0xFF800000> : vector<256xf32>
    %656 = vector.multi_reduction <maximumf>, %655, %cst_289 [0] : vector<16x256xf32> to vector<256xf32>
    %657 = arith.cmpi sle, %17, %7 : i32
    %658 = arith.ori %657, %615 : i1
    %cst_290 = arith.constant 0.000000e+00 : f32
    %659 = vector.broadcast %cst_290 : f32 to vector<256xf32>
    %660 = arith.select %658, %659, %656 : vector<256xf32>
    %c0_291 = arith.constant 0 : index
    %c17_292 = arith.constant 17 : index
    %c0_293 = arith.constant 0 : index
    %661 = vector.load %arg4[%c0_291, %c17_292, %c0_293] : memref<1x25x256xf32, #tpu.memory_space<vmem>>, vector<1x1x256xf32>
    %662 = vector.shape_cast %661 : vector<1x1x256xf32> to vector<256xf32>
    %663 = vector.shape_cast %660 : vector<256xf32> to vector<1x1x256xf32>
    tpu.vector_store %arg4[%c0_291, %c17_292, %c0_293], %663 {strides = array<i32>} : memref<1x25x256xf32, #tpu.memory_space<vmem>>, vector<1x1x256xf32>,
    %cst_294 = arith.constant 0xFF800000 : f32
    %664 = vector.shape_cast %614 : vector<16x1xi1> to vector<16x1xi1>
    %665 = vector.broadcast %664 : vector<16x1xi1> to vector<16x256xi1>
    %666 = vector.broadcast %cst_294 : f32 to vector<16x256xf32>
    %667 = arith.select %665, %476, %666 : vector<16x256xi1>, vector<16x256xf32>
    %cst_295 = arith.constant dense<0xFF800000> : vector<256xf32>
    %668 = vector.multi_reduction <maximumf>, %667, %cst_295 [0] : vector<16x256xf32> to vector<256xf32>
    %669 = arith.cmpi sle, %19, %9 : i32
    %670 = arith.ori %669, %615 : i1
    %cst_296 = arith.constant 0.000000e+00 : f32
    %671 = vector.broadcast %cst_296 : f32 to vector<256xf32>
    %672 = arith.select %670, %671, %668 : vector<256xf32>
    %c0_297 = arith.constant 0 : index
    %c22 = arith.constant 22 : index
    %c0_298 = arith.constant 0 : index
    %673 = vector.load %arg4[%c0_297, %c22, %c0_298] : memref<1x25x256xf32, #tpu.memory_space<vmem>>, vector<1x1x256xf32>
    %674 = vector.shape_cast %673 : vector<1x1x256xf32> to vector<256xf32>
    %675 = vector.shape_cast %672 : vector<256xf32> to vector<1x1x256xf32>
    tpu.vector_store %arg4[%c0_297, %c22, %c0_298], %675 {strides = array<i32>} : memref<1x25x256xf32, #tpu.memory_space<vmem>>, vector<1x1x256xf32>,
    %676 = vector.broadcast %27 : i32 to vector<16x1xi32>
    %677 = arith.cmpi sge, %477, %676 : vector<16x1xi32>
    %678 = vector.broadcast %37 : i32 to vector<16x1xi32>
    %679 = arith.cmpi slt, %477, %678 : vector<16x1xi32>
    %680 = arith.andi %677, %679 : vector<16x1xi1>
    %681 = arith.cmpi sle, %37, %27 : i32
    %cst_299 = arith.constant 0xFF800000 : f32
    %682 = vector.shape_cast %680 : vector<16x1xi1> to vector<16x1xi1>
    %683 = vector.broadcast %682 : vector<16x1xi1> to vector<16x256xi1>
    %684 = vector.broadcast %cst_299 : f32 to vector<16x256xf32>
    %685 = arith.select %683, %456, %684 : vector<16x256xi1>, vector<16x256xf32>
    %cst_300 = arith.constant dense<0xFF800000> : vector<256xf32>
    %686 = vector.multi_reduction <maximumf>, %685, %cst_300 [0] : vector<16x256xf32> to vector<256xf32>
    %687 = arith.cmpi sle, %11, %1 : i32
    %688 = arith.ori %687, %681 : i1
    %cst_301 = arith.constant 0.000000e+00 : f32
    %689 = vector.broadcast %cst_301 : f32 to vector<256xf32>
    %690 = arith.select %688, %689, %686 : vector<256xf32>
    %c0_302 = arith.constant 0 : index
    %c3_303 = arith.constant 3 : index
    %c0_304 = arith.constant 0 : index
    %691 = vector.load %arg4[%c0_302, %c3_303, %c0_304] : memref<1x25x256xf32, #tpu.memory_space<vmem>>, vector<1x1x256xf32>
    %692 = vector.shape_cast %691 : vector<1x1x256xf32> to vector<256xf32>
    %693 = vector.shape_cast %690 : vector<256xf32> to vector<1x1x256xf32>
    tpu.vector_store %arg4[%c0_302, %c3_303, %c0_304], %693 {strides = array<i32>} : memref<1x25x256xf32, #tpu.memory_space<vmem>>, vector<1x1x256xf32>,
    %cst_305 = arith.constant 0xFF800000 : f32
    %694 = vector.shape_cast %680 : vector<16x1xi1> to vector<16x1xi1>
    %695 = vector.broadcast %694 : vector<16x1xi1> to vector<16x256xi1>
    %696 = vector.broadcast %cst_305 : f32 to vector<16x256xf32>
    %697 = arith.select %695, %461, %696 : vector<16x256xi1>, vector<16x256xf32>
    %cst_306 = arith.constant dense<0xFF800000> : vector<256xf32>
    %698 = vector.multi_reduction <maximumf>, %697, %cst_306 [0] : vector<16x256xf32> to vector<256xf32>
    %699 = arith.cmpi sle, %13, %3 : i32
    %700 = arith.ori %699, %681 : i1
    %cst_307 = arith.constant 0.000000e+00 : f32
    %701 = vector.broadcast %cst_307 : f32 to vector<256xf32>
    %702 = arith.select %700, %701, %698 : vector<256xf32>
    %c0_308 = arith.constant 0 : index
    %c8_309 = arith.constant 8 : index
    %c0_310 = arith.constant 0 : index
    %703 = vector.load %arg4[%c0_308, %c8_309, %c0_310] : memref<1x25x256xf32, #tpu.memory_space<vmem>>, vector<1x1x256xf32>
    %704 = vector.shape_cast %703 : vector<1x1x256xf32> to vector<256xf32>
    %705 = vector.shape_cast %702 : vector<256xf32> to vector<1x1x256xf32>
    tpu.vector_store %arg4[%c0_308, %c8_309, %c0_310], %705 {strides = array<i32>} : memref<1x25x256xf32, #tpu.memory_space<vmem>>, vector<1x1x256xf32>,
    %cst_311 = arith.constant 0xFF800000 : f32
    %706 = vector.shape_cast %680 : vector<16x1xi1> to vector<16x1xi1>
    %707 = vector.broadcast %706 : vector<16x1xi1> to vector<16x256xi1>
    %708 = vector.broadcast %cst_311 : f32 to vector<16x256xf32>
    %709 = arith.select %707, %466, %708 : vector<16x256xi1>, vector<16x256xf32>
    %cst_312 = arith.constant dense<0xFF800000> : vector<256xf32>
    %710 = vector.multi_reduction <maximumf>, %709, %cst_312 [0] : vector<16x256xf32> to vector<256xf32>
    %711 = arith.cmpi sle, %15, %5 : i32
    %712 = arith.ori %711, %681 : i1
    %cst_313 = arith.constant 0.000000e+00 : f32
    %713 = vector.broadcast %cst_313 : f32 to vector<256xf32>
    %714 = arith.select %712, %713, %710 : vector<256xf32>
    %c0_314 = arith.constant 0 : index
    %c13_315 = arith.constant 13 : index
    %c0_316 = arith.constant 0 : index
    %715 = vector.load %arg4[%c0_314, %c13_315, %c0_316] : memref<1x25x256xf32, #tpu.memory_space<vmem>>, vector<1x1x256xf32>
    %716 = vector.shape_cast %715 : vector<1x1x256xf32> to vector<256xf32>
    %717 = vector.shape_cast %714 : vector<256xf32> to vector<1x1x256xf32>
    tpu.vector_store %arg4[%c0_314, %c13_315, %c0_316], %717 {strides = array<i32>} : memref<1x25x256xf32, #tpu.memory_space<vmem>>, vector<1x1x256xf32>,
    %cst_317 = arith.constant 0xFF800000 : f32
    %718 = vector.shape_cast %680 : vector<16x1xi1> to vector<16x1xi1>
    %719 = vector.broadcast %718 : vector<16x1xi1> to vector<16x256xi1>
    %720 = vector.broadcast %cst_317 : f32 to vector<16x256xf32>
    %721 = arith.select %719, %471, %720 : vector<16x256xi1>, vector<16x256xf32>
    %cst_318 = arith.constant dense<0xFF800000> : vector<256xf32>
    %722 = vector.multi_reduction <maximumf>, %721, %cst_318 [0] : vector<16x256xf32> to vector<256xf32>
    %723 = arith.cmpi sle, %17, %7 : i32
    %724 = arith.ori %723, %681 : i1
    %cst_319 = arith.constant 0.000000e+00 : f32
    %725 = vector.broadcast %cst_319 : f32 to vector<256xf32>
    %726 = arith.select %724, %725, %722 : vector<256xf32>
    %c0_320 = arith.constant 0 : index
    %c18_321 = arith.constant 18 : index
    %c0_322 = arith.constant 0 : index
    %727 = vector.load %arg4[%c0_320, %c18_321, %c0_322] : memref<1x25x256xf32, #tpu.memory_space<vmem>>, vector<1x1x256xf32>
    %728 = vector.shape_cast %727 : vector<1x1x256xf32> to vector<256xf32>
    %729 = vector.shape_cast %726 : vector<256xf32> to vector<1x1x256xf32>
    tpu.vector_store %arg4[%c0_320, %c18_321, %c0_322], %729 {strides = array<i32>} : memref<1x25x256xf32, #tpu.memory_space<vmem>>, vector<1x1x256xf32>,
    %cst_323 = arith.constant 0xFF800000 : f32
    %730 = vector.shape_cast %680 : vector<16x1xi1> to vector<16x1xi1>
    %731 = vector.broadcast %730 : vector<16x1xi1> to vector<16x256xi1>
    %732 = vector.broadcast %cst_323 : f32 to vector<16x256xf32>
    %733 = arith.select %731, %476, %732 : vector<16x256xi1>, vector<16x256xf32>
    %cst_324 = arith.constant dense<0xFF800000> : vector<256xf32>
    %734 = vector.multi_reduction <maximumf>, %733, %cst_324 [0] : vector<16x256xf32> to vector<256xf32>
    %735 = arith.cmpi sle, %19, %9 : i32
    %736 = arith.ori %735, %681 : i1
    %cst_325 = arith.constant 0.000000e+00 : f32
    %737 = vector.broadcast %cst_325 : f32 to vector<256xf32>
    %738 = arith.select %736, %737, %734 : vector<256xf32>
    %c0_326 = arith.constant 0 : index
    %c23 = arith.constant 23 : index
    %c0_327 = arith.constant 0 : index
    %739 = vector.load %arg4[%c0_326, %c23, %c0_327] : memref<1x25x256xf32, #tpu.memory_space<vmem>>, vector<1x1x256xf32>
    %740 = vector.shape_cast %739 : vector<1x1x256xf32> to vector<256xf32>
    %741 = vector.shape_cast %738 : vector<256xf32> to vector<1x1x256xf32>
    tpu.vector_store %arg4[%c0_326, %c23, %c0_327], %741 {strides = array<i32>} : memref<1x25x256xf32, #tpu.memory_space<vmem>>, vector<1x1x256xf32>,
    %742 = vector.broadcast %29 : i32 to vector<16x1xi32>
    %743 = arith.cmpi sge, %477, %742 : vector<16x1xi32>
    %744 = vector.broadcast %39 : i32 to vector<16x1xi32>
    %745 = arith.cmpi slt, %477, %744 : vector<16x1xi32>
    %746 = arith.andi %743, %745 : vector<16x1xi1>
    %747 = arith.cmpi sle, %39, %29 : i32
    %cst_328 = arith.constant 0xFF800000 : f32
    %748 = vector.shape_cast %746 : vector<16x1xi1> to vector<16x1xi1>
    %749 = vector.broadcast %748 : vector<16x1xi1> to vector<16x256xi1>
    %750 = vector.broadcast %cst_328 : f32 to vector<16x256xf32>
    %751 = arith.select %749, %456, %750 : vector<16x256xi1>, vector<16x256xf32>
    %cst_329 = arith.constant dense<0xFF800000> : vector<256xf32>
    %752 = vector.multi_reduction <maximumf>, %751, %cst_329 [0] : vector<16x256xf32> to vector<256xf32>
    %753 = arith.cmpi sle, %11, %1 : i32
    %754 = arith.ori %753, %747 : i1
    %cst_330 = arith.constant 0.000000e+00 : f32
    %755 = vector.broadcast %cst_330 : f32 to vector<256xf32>
    %756 = arith.select %754, %755, %752 : vector<256xf32>
    %c0_331 = arith.constant 0 : index
    %c4_332 = arith.constant 4 : index
    %c0_333 = arith.constant 0 : index
    %757 = vector.load %arg4[%c0_331, %c4_332, %c0_333] : memref<1x25x256xf32, #tpu.memory_space<vmem>>, vector<1x1x256xf32>
    %758 = vector.shape_cast %757 : vector<1x1x256xf32> to vector<256xf32>
    %759 = vector.shape_cast %756 : vector<256xf32> to vector<1x1x256xf32>
    tpu.vector_store %arg4[%c0_331, %c4_332, %c0_333], %759 {strides = array<i32>} : memref<1x25x256xf32, #tpu.memory_space<vmem>>, vector<1x1x256xf32>,
    %cst_334 = arith.constant 0xFF800000 : f32
    %760 = vector.shape_cast %746 : vector<16x1xi1> to vector<16x1xi1>
    %761 = vector.broadcast %760 : vector<16x1xi1> to vector<16x256xi1>
    %762 = vector.broadcast %cst_334 : f32 to vector<16x256xf32>
    %763 = arith.select %761, %461, %762 : vector<16x256xi1>, vector<16x256xf32>
    %cst_335 = arith.constant dense<0xFF800000> : vector<256xf32>
    %764 = vector.multi_reduction <maximumf>, %763, %cst_335 [0] : vector<16x256xf32> to vector<256xf32>
    %765 = arith.cmpi sle, %13, %3 : i32
    %766 = arith.ori %765, %747 : i1
    %cst_336 = arith.constant 0.000000e+00 : f32
    %767 = vector.broadcast %cst_336 : f32 to vector<256xf32>
    %768 = arith.select %766, %767, %764 : vector<256xf32>
    %c0_337 = arith.constant 0 : index
    %c9_338 = arith.constant 9 : index
    %c0_339 = arith.constant 0 : index
    %769 = vector.load %arg4[%c0_337, %c9_338, %c0_339] : memref<1x25x256xf32, #tpu.memory_space<vmem>>, vector<1x1x256xf32>
    %770 = vector.shape_cast %769 : vector<1x1x256xf32> to vector<256xf32>
    %771 = vector.shape_cast %768 : vector<256xf32> to vector<1x1x256xf32>
    tpu.vector_store %arg4[%c0_337, %c9_338, %c0_339], %771 {strides = array<i32>} : memref<1x25x256xf32, #tpu.memory_space<vmem>>, vector<1x1x256xf32>,
    %cst_340 = arith.constant 0xFF800000 : f32
    %772 = vector.shape_cast %746 : vector<16x1xi1> to vector<16x1xi1>
    %773 = vector.broadcast %772 : vector<16x1xi1> to vector<16x256xi1>
    %774 = vector.broadcast %cst_340 : f32 to vector<16x256xf32>
    %775 = arith.select %773, %466, %774 : vector<16x256xi1>, vector<16x256xf32>
    %cst_341 = arith.constant dense<0xFF800000> : vector<256xf32>
    %776 = vector.multi_reduction <maximumf>, %775, %cst_341 [0] : vector<16x256xf32> to vector<256xf32>
    %777 = arith.cmpi sle, %15, %5 : i32
    %778 = arith.ori %777, %747 : i1
    %cst_342 = arith.constant 0.000000e+00 : f32
    %779 = vector.broadcast %cst_342 : f32 to vector<256xf32>
    %780 = arith.select %778, %779, %776 : vector<256xf32>
    %c0_343 = arith.constant 0 : index
    %c14_344 = arith.constant 14 : index
    %c0_345 = arith.constant 0 : index
    %781 = vector.load %arg4[%c0_343, %c14_344, %c0_345] : memref<1x25x256xf32, #tpu.memory_space<vmem>>, vector<1x1x256xf32>
    %782 = vector.shape_cast %781 : vector<1x1x256xf32> to vector<256xf32>
    %783 = vector.shape_cast %780 : vector<256xf32> to vector<1x1x256xf32>
    tpu.vector_store %arg4[%c0_343, %c14_344, %c0_345], %783 {strides = array<i32>} : memref<1x25x256xf32, #tpu.memory_space<vmem>>, vector<1x1x256xf32>,
    %cst_346 = arith.constant 0xFF800000 : f32
    %784 = vector.shape_cast %746 : vector<16x1xi1> to vector<16x1xi1>
    %785 = vector.broadcast %784 : vector<16x1xi1> to vector<16x256xi1>
    %786 = vector.broadcast %cst_346 : f32 to vector<16x256xf32>
    %787 = arith.select %785, %471, %786 : vector<16x256xi1>, vector<16x256xf32>
    %cst_347 = arith.constant dense<0xFF800000> : vector<256xf32>
    %788 = vector.multi_reduction <maximumf>, %787, %cst_347 [0] : vector<16x256xf32> to vector<256xf32>
    %789 = arith.cmpi sle, %17, %7 : i32
    %790 = arith.ori %789, %747 : i1
    %cst_348 = arith.constant 0.000000e+00 : f32
    %791 = vector.broadcast %cst_348 : f32 to vector<256xf32>
    %792 = arith.select %790, %791, %788 : vector<256xf32>
    %c0_349 = arith.constant 0 : index
    %c19_350 = arith.constant 19 : index
    %c0_351 = arith.constant 0 : index
    %793 = vector.load %arg4[%c0_349, %c19_350, %c0_351] : memref<1x25x256xf32, #tpu.memory_space<vmem>>, vector<1x1x256xf32>
    %794 = vector.shape_cast %793 : vector<1x1x256xf32> to vector<256xf32>
    %795 = vector.shape_cast %792 : vector<256xf32> to vector<1x1x256xf32>
    tpu.vector_store %arg4[%c0_349, %c19_350, %c0_351], %795 {strides = array<i32>} : memref<1x25x256xf32, #tpu.memory_space<vmem>>, vector<1x1x256xf32>,
    %cst_352 = arith.constant 0xFF800000 : f32
    %796 = vector.shape_cast %746 : vector<16x1xi1> to vector<16x1xi1>
    %797 = vector.broadcast %796 : vector<16x1xi1> to vector<16x256xi1>
    %798 = vector.broadcast %cst_352 : f32 to vector<16x256xf32>
    %799 = arith.select %797, %476, %798 : vector<16x256xi1>, vector<16x256xf32>
    %cst_353 = arith.constant dense<0xFF800000> : vector<256xf32>
    %800 = vector.multi_reduction <maximumf>, %799, %cst_353 [0] : vector<16x256xf32> to vector<256xf32>
    %801 = arith.cmpi sle, %19, %9 : i32
    %802 = arith.ori %801, %747 : i1
    %cst_354 = arith.constant 0.000000e+00 : f32
    %803 = vector.broadcast %cst_354 : f32 to vector<256xf32>
    %804 = arith.select %802, %803, %800 : vector<256xf32>
    %c0_355 = arith.constant 0 : index
    %c24 = arith.constant 24 : index
    %c0_356 = arith.constant 0 : index
    %805 = vector.load %arg4[%c0_355, %c24, %c0_356] : memref<1x25x256xf32, #tpu.memory_space<vmem>>, vector<1x1x256xf32>
    %806 = vector.shape_cast %805 : vector<1x1x256xf32> to vector<256xf32>
    %807 = vector.shape_cast %804 : vector<256xf32> to vector<1x1x256xf32>
    tpu.vector_store %arg4[%c0_355, %c24, %c0_356], %807 {strides = array<i32>} : memref<1x25x256xf32, #tpu.memory_space<vmem>>, vector<1x1x256xf32>,
    return
  }
  func.func @transform_0(%arg0: i32, %arg1: memref<8xi32, #tpu.memory_space<smem>>, %arg2: memref<8x20xi32, #tpu.memory_space<smem>>) -> (i32, i32, i32, i32) {
    %0 = arith.index_cast %arg0 : i32 to index
    %1 = memref.load %arg1[%0] : memref<8xi32, #tpu.memory_space<smem>>
    %c0_i32 = arith.constant 0 : i32
    %c0_i32_0 = arith.constant 0 : i32
    %c0_i32_1 = arith.constant 0 : i32
    %c0_i32_2 = arith.constant 0 : i32
    return %1, %c0_i32, %c0_i32_0, %c0_i32_1 : i32, i32, i32, i32
  }
  func.func @transform_1(%arg0: i32, %arg1: memref<8xi32, #tpu.memory_space<smem>>, %arg2: memref<8x20xi32, #tpu.memory_space<smem>>) -> (i32, i32, i32) {
    %c0_i32 = arith.constant 0 : i32
    %c0_i32_0 = arith.constant 0 : i32
    %c0_i32_1 = arith.constant 0 : i32
    return %arg0, %c0_i32, %c0_i32_0 : i32, i32, i32
  }
}

</mosaic_0001>

<llo_original>
// kernel: tpu_custom_call.1
$region0: #{tpu_custom_call.1}
  #allocation0 [shape = 'u32[]', space=smem, size = 0x4, offset = 0x4, fixed_abs, tag = 'smem constant byte address 0x4 - core index']
  #allocation1 [shape = 'u32[72,128]{1,0:T(1,128)}', space=vmem, size = 0x9000, scoped, tag = 'internal scratch']
  #allocation2 [shape = 's32[1]{0}', space=sflag, size = 0x4, scoped, tag = 'scoped memory for tpu_custom_call.1']
  #allocation3 [shape = 'u8[512]{0}', space=smem, size = 0x200, scoped, tag = 'prefetched SMEM operand 0']
  #allocation4 [shape = 'u8[4096]{0}', space=smem, size = 0x1000, scoped, tag = 'prefetched SMEM operand 1']
  %s0 = inlined_call_operand.hbm [shape: s32[8], index: 0, kind: input, shape index: {}]
  %s1 = inlined_call_operand.hbm [shape: s32[8,20], index: 1, kind: input, shape index: {}]
  %s2 = inlined_call_operand.hbm [shape: f32[2,16,16,256], index: 2, kind: input, shape index: {}]
  %s3 = inlined_call_operand.vmem [shape: f32[8,25,256], index: 3, kind: output, shape index: {}]
  %s4 = sld [smem:[#allocation0]]
  $region41: #{tpu_custom_call.1} parent=0
    _
  %s6 = ssub.s32 1, %s4
  %s7 = scalar_select 0, %s6, %s4
  %s9 = sshll.u32 %s0, 4
  %s10 = int_to_ptr.hbm [resolvable:$true] %s9
  %12 = dma.hbm_to_smem %s10, 16, [#allocation3], [#allocation2]
  %s14 = sshll.u32 %s1, 4
  %s15 = int_to_ptr.hbm [resolvable:$true] %s14
  %17 = dma.hbm_to_smem %s15, 128, [#allocation4], [#allocation2]
  %19 = dma.done [#allocation2], 144
  %20 = sfence
  $region1: #{tpu_custom_call.1} parent=0
    #allocation5 [shape = 'u8[524288]{0}', space=vmem, size = 0x80000, scoped, tag = 'input window, operand 2']
    #allocation6 [shape = 's32[2]{0}', space=sflag, size = 0x8, scoped, tag = 'scoped memory for tpu_custom_call.1']
    %21 = vsyncpa [#allocation6], 0
    %s22 = scalar_lea.sflag [#allocation6], 1
    %23 = vsyncpa %s22, 0
    loop: start=0, step=1, limit=10
    $region2: #{tpu_custom_call.1} parent=1 // loop_pre_header
      _
    $region3: #{tpu_custom_call.1} parent=1 // loop_header
      %s25 = sphi 0, %s29
      %p26 = scmp.ge.s32.totalorder %s25, 10
      %s37 = sphi 0, %s39
      %s40 = sphi 0, %s37
      %s41 = sphi 0, %s40
      %s57 = sphi 0, %s41
      %s63 = sphi 0, %s65
      %s66 = sphi 0, %s63
      %s67 = sphi 0, %s66
      %s83 = sphi 0, %s67
    $region4: #{tpu_custom_call.1} parent=1 // loop_header_branch
      %28 = sbr.rel (%p26) target = $region8
    $region5: #{tpu_custom_call.1} parent=1 // loop_body
      %s30 = ssub.s32 %s25, 1
      %s31 = ssub.s32 %s25, 2
      %s32 = sadd.s32 %s25, 1
      %s33 = sld [smem:[#allocation3 + %s25]]
      %s34 = sld [smem:[#allocation3 + %s32]]
      %s35 = ssub.s32 %s33, %s34
      %p36 = scmp.eq.s32.totalorder %s35, 0
      %s38 = sadd.s32 %s37, 1
      %s39 = scalar_select %p36, %s37, %s38
      %p42 = pneg %p36
      %p43 = scmp.eq.s32.totalorder %s25, 7
      %p44 = por %p42, %p43
      %p45 = scmp.ne.s32.totalorder %s37, %s40
      %p46 = scmp.eq.s32.totalorder %s25, 0
      %p47 = por %p45, %p46
      %p48 = scmp.ne.s32.totalorder %s37, %s40
      %p49 = scmp.eq.s32.totalorder %s30, 7
      %p50 = por %p48, %p49
      %p51 = scmp.ne.s32.totalorder %s40, %s41
      %p52 = scmp.eq.s32.totalorder %s30, 0
      %p53 = por %p51, %p52
      %p54 = scmp.ne.s32.totalorder %s40, %s41
      %p55 = scmp.eq.s32.totalorder %s31, 7
      %p56 = por %p54, %p55
      %p58 = scmp.ne.s32.totalorder %s41, %s57
      %p59 = scmp.eq.s32.totalorder %s31, 0
      %p60 = por %p58, %p59
      %s61 = ssub.s32 %s25, %s32
      %p62 = scmp.eq.s32.totalorder %s61, 0
      %s64 = sadd.s32 %s63, 1
      %s65 = scalar_select %p62, %s63, %s64
      %p68 = pneg %p62
      %p69 = scmp.eq.s32.totalorder %s25, 7
      %p70 = por %p68, %p69
      %p71 = scmp.ne.s32.totalorder %s63, %s66
      %p72 = scmp.eq.s32.totalorder %s25, 0
      %p73 = por %p71, %p72
      %p74 = scmp.ne.s32.totalorder %s63, %s66
      %p75 = scmp.eq.s32.totalorder %s30, 7
      %p76 = por %p74, %p75
      %p77 = scmp.ne.s32.totalorder %s66, %s67
      %p78 = scmp.eq.s32.totalorder %s30, 0
      %p79 = por %p77, %p78
      %p80 = scmp.ne.s32.totalorder %s66, %s67
      %p81 = scmp.eq.s32.totalorder %s31, 7
      %p82 = por %p80, %p81
      %p84 = scmp.ne.s32.totalorder %s67, %s83
      %p85 = scmp.eq.s32.totalorder %s31, 0
      %p86 = por %p84, %p85
      %p87 = scmp.le.s32.totalorder 1, %s25
      %p88 = scmp.lt.s32.totalorder %s25, 9
      %p89 = pnand %p87, %p88
      %p90 = pneg %p89
      // Predicated region
      $region9: #{tpu_custom_call.1} parent=5 // pred_check
        _
      $region10: #{tpu_custom_call.1} parent=5 // pred_check_branch
        %92 = sbr.rel (%p89) target = $region12
      $region11: #{tpu_custom_call.1} parent=5 // pred_region
        %s93 = ssub.s32 %s25, 1
      $region12: #{tpu_custom_call.1} parent=5 // pred_fallthru
        _
      %p94 = scmp.lt.s32.totalorder %s25, 8
      // Predicated region
      $region13: #{tpu_custom_call.1} parent=5 // pred_check
        %p95 = pneg %p94
      $region14: #{tpu_custom_call.1} parent=5 // pred_check_branch
        %97 = sbr.rel (%p95) target = $region16
      $region15: #{tpu_custom_call.1} parent=5 // pred_region
        // Predicated region
        $region17: #{tpu_custom_call.1} parent=15 // pred_check
          %p98 = pneg %p47
        $region18: #{tpu_custom_call.1} parent=15 // pred_check_branch
          %100 = sbr.rel (%p98) target = $region20
        $region19: #{tpu_custom_call.1} parent=15 // pred_region
          %s101 = sand.u32 %s37, 1
          %s102 = scalar_lea.sflag [#allocation6], %s101
          %s103 = sand.u32 %s37, 1
          %s104 = smul.addr %s103, 512
          %s105 = scalar_lea.vmem [#allocation5], %s104
          %s106 = sld [smem:[#allocation3 + %s25]]
          %108 = vsyncadd %s102, 0
          %s109 = smul.addr %s106, 64
          %s110 = smul.addr %s109, 8
          %s111 = scalar_lea.hbm %s2, %s110
          %s112 = sshll.u32 %s111, 4
          %s113 = int_to_ptr.hbm [resolvable:$true] %s112
          %s114 = sshll.u32 %s105, 4
          %s115 = int_to_ptr.vmem [resolvable:$true] %s114
          %120 = dma.hbm_to_vmem [thread:$0]  %s113, 8192, %s115, %s102, 256, 256, 16
        $region20: #{tpu_custom_call.1} parent=15 // pred_fallthru
          _
      $region16: #{tpu_custom_call.1} parent=5 // pred_fallthru
        _
      %p121 = scmp.le.s32.totalorder 1, %s25
      %p122 = scmp.lt.s32.totalorder %s25, 9
      %p123 = pnand %p121, %p122
      %p124 = pneg %p123
      // Predicated region
      $region21: #{tpu_custom_call.1} parent=5 // pred_check
        _
      $region22: #{tpu_custom_call.1} parent=5 // pred_check_branch
        %126 = sbr.rel (%p123) target = $region24
      $region23: #{tpu_custom_call.1} parent=5 // pred_region
        %s127 = ssub.s32 %s25, 1
        %s128 = sand.u32 %s40, 1
        %s129 = scalar_lea.sflag [#allocation6], %s128
        %s130 = sand.u32 %s40, 1
        %s131 = smul.addr %s130, 512
        %s132 = scalar_lea.vmem [#allocation5], %s131
        // Predicated region
        $region25: #{tpu_custom_call.1} parent=23 // pred_check
          %p133 = pneg %p53
        $region26: #{tpu_custom_call.1} parent=23 // pred_check_branch
          %135 = sbr.rel (%p133) target = $region28
        $region27: #{tpu_custom_call.1} parent=23 // pred_region
          %137 = dma.done %s129, 8192
        $region28: #{tpu_custom_call.1} parent=23 // pred_fallthru
          _
        %s138 = sand.u32 %s40, 1
        %s139 = scalar_lea.sflag [#allocation6], %s138
        %s140 = sand.u32 %s40, 1
        %s141 = smul.addr %s140, 512
        %s142 = scalar_lea.vmem [#allocation5], %s141
        %p143 = pneg %p53
        %p144 = pneg %p50
        %p145 = pneg %p79
        %p146 = pneg %p76
        %p147 = scmp.lt.s32.totalorder %s30, 7
        %s148 = scalar_select %p147, %s30, 7
        %s149 = smul.addr %s148, 8
        %s150 = smul.addr %s149, 8
        %s151 = scalar_lea.vmem %s3, %s150
        %s152 = sld [smem:[#allocation3 + %s30]]
        %p153 = scmp.lt.s32.totalorder %s30, 7
        %s154 = scalar_select %p153, %s30, 7
        %s155 = smul.addr %s154, 8
        %s156 = smul.addr %s155, 8
        %s157 = scalar_lea.vmem %s3, %s156
        %s158 = smul.u32 %s30, 128
        %s159 = sld [smem:[#allocation4 + %s158]]
        %s160 = sadd.s32 %s158, 1
        %s161 = sld [smem:[#allocation4 + %s160]]
        %s162 = sadd.s32 %s158, 2
        %s163 = sld [smem:[#allocation4 + %s162]]
        %s164 = sadd.s32 %s158, 3
        %s165 = sld [smem:[#allocation4 + %s164]]
        %s166 = sadd.s32 %s158, 4
        %s167 = sld [smem:[#allocation4 + %s166]]
        %s168 = sadd.s32 %s158, 5
        %s169 = sld [smem:[#allocation4 + %s168]]
        %s170 = sadd.s32 %s158, 6
        %s171 = sld [smem:[#allocation4 + %s170]]
        %s172 = sadd.s32 %s158, 7
        %s173 = sld [smem:[#allocation4 + %s172]]
        %s174 = sadd.s32 %s158, 8
        %s175 = sld [smem:[#allocation4 + %s174]]
        %s176 = sadd.s32 %s158, 9
        %s177 = sld [smem:[#allocation4 + %s176]]
        %s178 = sadd.s32 %s158, 10
        %s179 = sld [smem:[#allocation4 + %s178]]
        %s180 = sadd.s32 %s158, 11
        %s181 = sld [smem:[#allocation4 + %s180]]
        %s182 = sadd.s32 %s158, 12
        %s183 = sld [smem:[#allocation4 + %s182]]
        %s184 = sadd.s32 %s158, 13
        %s185 = sld [smem:[#allocation4 + %s184]]
        %s186 = sadd.s32 %s158, 14
        %s187 = sld [smem:[#allocation4 + %s186]]
        %s188 = sadd.s32 %s158, 15
        %s189 = sld [smem:[#allocation4 + %s188]]
        %s190 = sadd.s32 %s158, 16
        %s191 = sld [smem:[#allocation4 + %s190]]
        %s192 = sadd.s32 %s158, 17
        %s193 = sld [smem:[#allocation4 + %s192]]
        %s194 = sadd.s32 %s158, 18
        %s195 = sld [smem:[#allocation4 + %s194]]
        %s196 = sadd.s32 %s158, 19
        %s197 = sld [smem:[#allocation4 + %s196]]
        %v198 = vld [vmem:[%s132] sm:$0xff]
        %v199 = vld [vmem:[%s132 + $0x8] sm:$0xff]
        %v200 = vld [vmem:[%s132 + $0x10] sm:$0xff]
        %v201 = vld [vmem:[%s132 + $0x18] sm:$0xff]
        %p202 = scmp.le.s32.totalorder %s159, 0
        %p203 = scmp.gt.s32.totalorder %s169, 0
        %p204 = pnand %p202, %p203
        %p205 = pneg %p204
        %s206 = scalar_select %p205, 1, 0
        %v207 = vstv %s206
        %vm208 = vcmp.eq.s32.totalorder %v207, 1
        %v209 = vsel %vm208, %v198, -inf
        %v210 = vsel %vm208, %v199, -inf
        %v211 = vsel %vm208, %v200, -inf
        %v212 = vsel %vm208, %v201, -inf
        %p213 = scmp.le.s32.totalorder %s161, 0
        %p214 = scmp.gt.s32.totalorder %s171, 0
        %p215 = pnand %p213, %p214
        %p216 = pneg %p215
        %s217 = scalar_select %p216, 1, 0
        %v218 = vstv %s217
        %vm219 = vcmp.eq.s32.totalorder %v218, 1
        %v220 = vsel %vm219, %v198, -inf
        %v221 = vsel %vm219, %v199, -inf
        %v222 = vsel %vm219, %v200, -inf
        %v223 = vsel %vm219, %v201, -inf
        %p224 = scmp.le.s32.totalorder %s163, 0
        %p225 = scmp.gt.s32.totalorder %s173, 0
        %p226 = pnand %p224, %p225
        %p227 = pneg %p226
        %s228 = scalar_select %p227, 1, 0
        %v229 = vstv %s228
        %vm230 = vcmp.eq.s32.totalorder %v229, 1
        %v231 = vsel %vm230, %v198, -inf
        %v232 = vsel %vm230, %v199, -inf
        %v233 = vsel %vm230, %v200, -inf
        %v234 = vsel %vm230, %v201, -inf
        %p235 = scmp.le.s32.totalorder %s165, 0
        %p236 = scmp.gt.s32.totalorder %s175, 0
        %p237 = pnand %p235, %p236
        %p238 = pneg %p237
        %s239 = scalar_select %p238, 1, 0
        %v240 = vstv %s239
        %vm241 = vcmp.eq.s32.totalorder %v240, 1
        %v242 = vsel %vm241, %v198, -inf
        %v243 = vsel %vm241, %v199, -inf
        %v244 = vsel %vm241, %v200, -inf
        %v245 = vsel %vm241, %v201, -inf
        %p246 = scmp.le.s32.totalorder %s167, 0
        %p247 = scmp.gt.s32.totalorder %s177, 0
        %p248 = pnand %p246, %p247
        %p249 = pneg %p248
        %s250 = scalar_select %p249, 1, 0
        %v251 = vstv %s250
        %vm252 = vcmp.eq.s32.totalorder %v251, 1
        %v253 = vsel %vm252, %v198, -inf
        %v254 = vsel %vm252, %v199, -inf
        %v255 = vsel %vm252, %v200, -inf
        %v256 = vsel %vm252, %v201, -inf
        %s257 = scalar_lea.vmem %s132, 32 [#allocation5]
        %v258 = vld [vmem:[%s257] sm:$0xff]
        %v259 = vld [vmem:[%s257 + $0x8] sm:$0xff]
        %v260 = vld [vmem:[%s257 + $0x10] sm:$0xff]
        %v261 = vld [vmem:[%s257 + $0x18] sm:$0xff]
        %p262 = scmp.le.s32.totalorder %s159, 1
        %p263 = scmp.gt.s32.totalorder %s169, 1
        %p264 = pnand %p262, %p263
        %p265 = pneg %p264
        %v266 = vmax.f32 %v209, %v258
        %v267 = vmax.f32 %v210, %v259
        %v268 = vmax.f32 %v211, %v260
        %v269 = vmax.f32 %v212, %v261
        %s270 = scalar_select %p265, 1, 0
        %v271 = vstv %s270
        %vm272 = vcmp.eq.s32.totalorder %v271, 1
        %v273 = vsel %vm272, %v266, %v209
        %v274 = vsel %vm272, %v267, %v210
        %v275 = vsel %vm272, %v268, %v211
        %v276 = vsel %vm272, %v269, %v212
        %p277 = scmp.le.s32.totalorder %s161, 1
        %p278 = scmp.gt.s32.totalorder %s171, 1
        %p279 = pnand %p277, %p278
        %p280 = pneg %p279
        %v281 = vmax.f32 %v220, %v258
        %v282 = vmax.f32 %v221, %v259
        %v283 = vmax.f32 %v222, %v260
        %v284 = vmax.f32 %v223, %v261
        %s285 = scalar_select %p280, 1, 0
        %v286 = vstv %s285
        %vm287 = vcmp.eq.s32.totalorder %v286, 1
        %v288 = vsel %vm287, %v281, %v220
        %v289 = vsel %vm287, %v282, %v221
        %v290 = vsel %vm287, %v283, %v222
        %v291 = vsel %vm287, %v284, %v223
        %p292 = scmp.le.s32.totalorder %s163, 1
        %p293 = scmp.gt.s32.totalorder %s173, 1
        %p294 = pnand %p292, %p293
        %p295 = pneg %p294
        %v296 = vmax.f32 %v231, %v258
        %v297 = vmax.f32 %v232, %v259
        %v298 = vmax.f32 %v233, %v260
        %v299 = vmax.f32 %v234, %v261
        %s300 = scalar_select %p295, 1, 0
        %v301 = vstv %s300
        %vm302 = vcmp.eq.s32.totalorder %v301, 1
        %v303 = vsel %vm302, %v296, %v231
        %v304 = vsel %vm302, %v297, %v232
        %v305 = vsel %vm302, %v298, %v233
        %v306 = vsel %vm302, %v299, %v234
        %p307 = scmp.le.s32.totalorder %s165, 1
        %p308 = scmp.gt.s32.totalorder %s175, 1
        %p309 = pnand %p307, %p308
        %p310 = pneg %p309
        %v311 = vmax.f32 %v242, %v258
        %v312 = vmax.f32 %v243, %v259
        %v313 = vmax.f32 %v244, %v260
        %v314 = vmax.f32 %v245, %v261
        %s315 = scalar_select %p310, 1, 0
        %v316 = vstv %s315
        %vm317 = vcmp.eq.s32.totalorder %v316, 1
        %v318 = vsel %vm317, %v311, %v242
        %v319 = vsel %vm317, %v312, %v243
        %v320 = vsel %vm317, %v313, %v244
        %v321 = vsel %vm317, %v314, %v245
        %p322 = scmp.le.s32.totalorder %s167, 1
        %p323 = scmp.gt.s32.totalorder %s177, 1
        %p324 = pnand %p322, %p323
        %p325 = pneg %p324
        %v326 = vmax.f32 %v253, %v258
        %v327 = vmax.f32 %v254, %v259
        %v328 = vmax.f32 %v255, %v260
        %v329 = vmax.f32 %v256, %v261
        %s330 = scalar_select %p325, 1, 0
        %v331 = vstv %s330
        %vm332 = vcmp.eq.s32.totalorder %v331, 1
        %v333 = vsel %vm332, %v326, %v253
        %v334 = vsel %vm332, %v327, %v254
        %v335 = vsel %vm332, %v328, %v255
        %v336 = vsel %vm332, %v329, %v256
        %s337 = scalar_lea.vmem %s132, 64 [#allocation5]
        %v338 = vld [vmem:[%s337] sm:$0xff]
        %v339 = vld [vmem:[%s337 + $0x8] sm:$0xff]
        %v340 = vld [vmem:[%s337 + $0x10] sm:$0xff]
        %v341 = vld [vmem:[%s337 + $0x18] sm:$0xff]
        %p342 = scmp.le.s32.totalorder %s159, 2
        %p343 = scmp.gt.s32.totalorder %s169, 2
        %p344 = pnand %p342, %p343
        %p345 = pneg %p344
        %v346 = vmax.f32 %v273, %v338
        %v347 = vmax.f32 %v274, %v339
        %v348 = vmax.f32 %v275, %v340
        %v349 = vmax.f32 %v276, %v341
        %s350 = scalar_select %p345, 1, 0
        %v351 = vstv %s350
        %vm352 = vcmp.eq.s32.totalorder %v351, 1
        %v353 = vsel %vm352, %v346, %v273
        %v354 = vsel %vm352, %v347, %v274
        %v355 = vsel %vm352, %v348, %v275
        %v356 = vsel %vm352, %v349, %v276
        %p357 = scmp.le.s32.totalorder %s161, 2
        %p358 = scmp.gt.s32.totalorder %s171, 2
        %p359 = pnand %p357, %p358
        %p360 = pneg %p359
        %v361 = vmax.f32 %v288, %v338
        %v362 = vmax.f32 %v289, %v339
        %v363 = vmax.f32 %v290, %v340
        %v364 = vmax.f32 %v291, %v341
        %s365 = scalar_select %p360, 1, 0
        %v366 = vstv %s365
        %vm367 = vcmp.eq.s32.totalorder %v366, 1
        %v368 = vsel %vm367, %v361, %v288
        %v369 = vsel %vm367, %v362, %v289
        %v370 = vsel %vm367, %v363, %v290
        %v371 = vsel %vm367, %v364, %v291
        %p372 = scmp.le.s32.totalorder %s163, 2
        %p373 = scmp.gt.s32.totalorder %s173, 2
        %p374 = pnand %p372, %p373
        %p375 = pneg %p374
        %v376 = vmax.f32 %v303, %v338
        %v377 = vmax.f32 %v304, %v339
        %v378 = vmax.f32 %v305, %v340
        %v379 = vmax.f32 %v306, %v341
        %s380 = scalar_select %p375, 1, 0
        %v381 = vstv %s380
        %vm382 = vcmp.eq.s32.totalorder %v381, 1
        %v383 = vsel %vm382, %v376, %v303
        %v384 = vsel %vm382, %v377, %v304
        %v385 = vsel %vm382, %v378, %v305
        %v386 = vsel %vm382, %v379, %v306
        %p387 = scmp.le.s32.totalorder %s165, 2
        %p388 = scmp.gt.s32.totalorder %s175, 2
        %p389 = pnand %p387, %p388
        %p390 = pneg %p389
        %v391 = vmax.f32 %v318, %v338
        %v392 = vmax.f32 %v319, %v339
        %v393 = vmax.f32 %v320, %v340
        %v394 = vmax.f32 %v321, %v341
        %s395 = scalar_select %p390, 1, 0
        %v396 = vstv %s395
        %vm397 = vcmp.eq.s32.totalorder %v396, 1
        %v398 = vsel %vm397, %v391, %v318
        %v399 = vsel %vm397, %v392, %v319
        %v400 = vsel %vm397, %v393, %v320
        %v401 = vsel %vm397, %v394, %v321
        %p402 = scmp.le.s32.totalorder %s167, 2
        %p403 = scmp.gt.s32.totalorder %s177, 2
        %p404 = pnand %p402, %p403
        %p405 = pneg %p404
        %v406 = vmax.f32 %v333, %v338
        %v407 = vmax.f32 %v334, %v339
        %v408 = vmax.f32 %v335, %v340
        %v409 = vmax.f32 %v336, %v341
        %s410 = scalar_select %p405, 1, 0
        %v411 = vstv %s410
        %vm412 = vcmp.eq.s32.totalorder %v411, 1
        %v413 = vsel %vm412, %v406, %v333
        %v414 = vsel %vm412, %v407, %v334
        %v415 = vsel %vm412, %v408, %v335
        %v416 = vsel %vm412, %v409, %v336
        %s417 = scalar_lea.vmem %s132, 96 [#allocation5]
        %v418 = vld [vmem:[%s417] sm:$0xff]
        %v419 = vld [vmem:[%s417 + $0x8] sm:$0xff]
        %v420 = vld [vmem:[%s417 + $0x10] sm:$0xff]
        %v421 = vld [vmem:[%s417 + $0x18] sm:$0xff]
        %p422 = scmp.le.s32.totalorder %s159, 3
        %p423 = scmp.gt.s32.totalorder %s169, 3
        %p424 = pnand %p422, %p423
        %p425 = pneg %p424
        %v426 = vmax.f32 %v353, %v418
        %v427 = vmax.f32 %v354, %v419
        %v428 = vmax.f32 %v355, %v420
        %v429 = vmax.f32 %v356, %v421
        %s430 = scalar_select %p425, 1, 0
        %v431 = vstv %s430
        %vm432 = vcmp.eq.s32.totalorder %v431, 1
        %v433 = vsel %vm432, %v426, %v353
        %v434 = vsel %vm432, %v427, %v354
        %v435 = vsel %vm432, %v428, %v355
        %v436 = vsel %vm432, %v429, %v356
        %p437 = scmp.le.s32.totalorder %s161, 3
        %p438 = scmp.gt.s32.totalorder %s171, 3
        %p439 = pnand %p437, %p438
        %p440 = pneg %p439
        %v441 = vmax.f32 %v368, %v418
        %v442 = vmax.f32 %v369, %v419
        %v443 = vmax.f32 %v370, %v420
        %v444 = vmax.f32 %v371, %v421
        %s445 = scalar_select %p440, 1, 0
        %v446 = vstv %s445
        %vm447 = vcmp.eq.s32.totalorder %v446, 1
        %v448 = vsel %vm447, %v441, %v368
        %v449 = vsel %vm447, %v442, %v369
        %v450 = vsel %vm447, %v443, %v370
        %v451 = vsel %vm447, %v444, %v371
        %p452 = scmp.le.s32.totalorder %s163, 3
        %p453 = scmp.gt.s32.totalorder %s173, 3
        %p454 = pnand %p452, %p453
        %p455 = pneg %p454
        %v456 = vmax.f32 %v383, %v418
        %v457 = vmax.f32 %v384, %v419
        %v458 = vmax.f32 %v385, %v420
        %v459 = vmax.f32 %v386, %v421
        %s460 = scalar_select %p455, 1, 0
        %v461 = vstv %s460
        %vm462 = vcmp.eq.s32.totalorder %v461, 1
        %v463 = vsel %vm462, %v456, %v383
        %v464 = vsel %vm462, %v457, %v384
        %v465 = vsel %vm462, %v458, %v385
        %v466 = vsel %vm462, %v459, %v386
        %p467 = scmp.le.s32.totalorder %s165, 3
        %p468 = scmp.gt.s32.totalorder %s175, 3
        %p469 = pnand %p467, %p468
        %p470 = pneg %p469
        %v471 = vmax.f32 %v398, %v418
        %v472 = vmax.f32 %v399, %v419
        %v473 = vmax.f32 %v400, %v420
        %v474 = vmax.f32 %v401, %v421
        %s475 = scalar_select %p470, 1, 0
        %v476 = vstv %s475
        %vm477 = vcmp.eq.s32.totalorder %v476, 1
        %v478 = vsel %vm477, %v471, %v398
        %v479 = vsel %vm477, %v472, %v399
        %v480 = vsel %vm477, %v473, %v400
        %v481 = vsel %vm477, %v474, %v401
        %p482 = scmp.le.s32.totalorder %s167, 3
        %p483 = scmp.gt.s32.totalorder %s177, 3
        %p484 = pnand %p482, %p483
        %p485 = pneg %p484
        %v486 = vmax.f32 %v413, %v418
        %v487 = vmax.f32 %v414, %v419
        %v488 = vmax.f32 %v415, %v420
        %v489 = vmax.f32 %v416, %v421
        %s490 = scalar_select %p485, 1, 0
        %v491 = vstv %s490
        %vm492 = vcmp.eq.s32.totalorder %v491, 1
        %v493 = vsel %vm492, %v486, %v413
        %v494 = vsel %vm492, %v487, %v414
        %v495 = vsel %vm492, %v488, %v415
        %v496 = vsel %vm492, %v489, %v416
        %s497 = scalar_lea.vmem %s132, 128 [#allocation5]
        %v498 = vld [vmem:[%s497] sm:$0xff]
        %v499 = vld [vmem:[%s497 + $0x8] sm:$0xff]
        %v500 = vld [vmem:[%s497 + $0x10] sm:$0xff]
        %v501 = vld [vmem:[%s497 + $0x18] sm:$0xff]
        %p502 = scmp.le.s32.totalorder %s159, 4
        %p503 = scmp.gt.s32.totalorder %s169, 4
        %p504 = pnand %p502, %p503
        %p505 = pneg %p504
        %v506 = vmax.f32 %v433, %v498
        %v507 = vmax.f32 %v434, %v499
        %v508 = vmax.f32 %v435, %v500
        %v509 = vmax.f32 %v436, %v501
        %s510 = scalar_select %p505, 1, 0
        %v511 = vstv %s510
        %vm512 = vcmp.eq.s32.totalorder %v511, 1
        %v513 = vsel %vm512, %v506, %v433
        %v514 = vsel %vm512, %v507, %v434
        %v515 = vsel %vm512, %v508, %v435
        %v516 = vsel %vm512, %v509, %v436
        %p517 = scmp.le.s32.totalorder %s161, 4
        %p518 = scmp.gt.s32.totalorder %s171, 4
        %p519 = pnand %p517, %p518
        %p520 = pneg %p519
        %v521 = vmax.f32 %v448, %v498
        %v522 = vmax.f32 %v449, %v499
        %v523 = vmax.f32 %v450, %v500
        %v524 = vmax.f32 %v451, %v501
        %s525 = scalar_select %p520, 1, 0
        %v526 = vstv %s525
        %vm527 = vcmp.eq.s32.totalorder %v526, 1
        %v528 = vsel %vm527, %v521, %v448
        %v529 = vsel %vm527, %v522, %v449
        %v530 = vsel %vm527, %v523, %v450
        %v531 = vsel %vm527, %v524, %v451
        %p532 = scmp.le.s32.totalorder %s163, 4
        %p533 = scmp.gt.s32.totalorder %s173, 4
        %p534 = pnand %p532, %p533
        %p535 = pneg %p534
        %v536 = vmax.f32 %v463, %v498
        %v537 = vmax.f32 %v464, %v499
        %v538 = vmax.f32 %v465, %v500
        %v539 = vmax.f32 %v466, %v501
        %s540 = scalar_select %p535, 1, 0
        %v541 = vstv %s540
        %vm542 = vcmp.eq.s32.totalorder %v541, 1
        %v543 = vsel %vm542, %v536, %v463
        %v544 = vsel %vm542, %v537, %v464
        %v545 = vsel %vm542, %v538, %v465
        %v546 = vsel %vm542, %v539, %v466
        %p547 = scmp.le.s32.totalorder %s165, 4
        %p548 = scmp.gt.s32.totalorder %s175, 4
        %p549 = pnand %p547, %p548
        %p550 = pneg %p549
        %v551 = vmax.f32 %v478, %v498
        %v552 = vmax.f32 %v479, %v499
        %v553 = vmax.f32 %v480, %v500
        %v554 = vmax.f32 %v481, %v501
        %s555 = scalar_select %p550, 1, 0
        %v556 = vstv %s555
        %vm557 = vcmp.eq.s32.totalorder %v556, 1
        %v558 = vsel %vm557, %v551, %v478
        %v559 = vsel %vm557, %v552, %v479
        %v560 = vsel %vm557, %v553, %v480
        %v561 = vsel %vm557, %v554, %v481
        %p562 = scmp.le.s32.totalorder %s167, 4
        %p563 = scmp.gt.s32.totalorder %s177, 4
        %p564 = pnand %p562, %p563
        %p565 = pneg %p564
        %v566 = vmax.f32 %v493, %v498
        %v567 = vmax.f32 %v494, %v499
        %v568 = vmax.f32 %v495, %v500
        %v569 = vmax.f32 %v496, %v501
        %s570 = scalar_select %p565, 1, 0
        %v571 = vstv %s570
        %vm572 = vcmp.eq.s32.totalorder %v571, 1
        %v573 = vsel %vm572, %v566, %v493
        %v574 = vsel %vm572, %v567, %v494
        %v575 = vsel %vm572, %v568, %v495
        %v576 = vsel %vm572, %v569, %v496
        %s577 = scalar_lea.vmem %s132, 160 [#allocation5]
        %v578 = vld [vmem:[%s577] sm:$0xff]
        %v579 = vld [vmem:[%s577 + $0x8] sm:$0xff]
        %v580 = vld [vmem:[%s577 + $0x10] sm:$0xff]
        %v581 = vld [vmem:[%s577 + $0x18] sm:$0xff]
        %p582 = scmp.le.s32.totalorder %s159, 5
        %p583 = scmp.gt.s32.totalorder %s169, 5
        %p584 = pnand %p582, %p583
        %p585 = pneg %p584
        %v586 = vmax.f32 %v513, %v578
        %v587 = vmax.f32 %v514, %v579
        %v588 = vmax.f32 %v515, %v580
        %v589 = vmax.f32 %v516, %v581
        %s590 = scalar_select %p585, 1, 0
        %v591 = vstv %s590
        %vm592 = vcmp.eq.s32.totalorder %v591, 1
        %v593 = vsel %vm592, %v586, %v513
        %v594 = vsel %vm592, %v587, %v514
        %v595 = vsel %vm592, %v588, %v515
        %v596 = vsel %vm592, %v589, %v516
        %p597 = scmp.le.s32.totalorder %s161, 5
        %p598 = scmp.gt.s32.totalorder %s171, 5
        %p599 = pnand %p597, %p598
        %p600 = pneg %p599
        %v601 = vmax.f32 %v528, %v578
        %v602 = vmax.f32 %v529, %v579
        %v603 = vmax.f32 %v530, %v580
        %v604 = vmax.f32 %v531, %v581
        %s605 = scalar_select %p600, 1, 0
        %v606 = vstv %s605
        %vm607 = vcmp.eq.s32.totalorder %v606, 1
        %v608 = vsel %vm607, %v601, %v528
        %v609 = vsel %vm607, %v602, %v529
        %v610 = vsel %vm607, %v603, %v530
        %v611 = vsel %vm607, %v604, %v531
        %p612 = scmp.le.s32.totalorder %s163, 5
        %p613 = scmp.gt.s32.totalorder %s173, 5
        %p614 = pnand %p612, %p613
        %p615 = pneg %p614
        %v616 = vmax.f32 %v543, %v578
        %v617 = vmax.f32 %v544, %v579
        %v618 = vmax.f32 %v545, %v580
        %v619 = vmax.f32 %v546, %v581
        %s620 = scalar_select %p615, 1, 0
        %v621 = vstv %s620
        %vm622 = vcmp.eq.s32.totalorder %v621, 1
        %v623 = vsel %vm622, %v616, %v543
        %v624 = vsel %vm622, %v617, %v544
        %v625 = vsel %vm622, %v618, %v545
        %v626 = vsel %vm622, %v619, %v546
        %p627 = scmp.le.s32.totalorder %s165, 5
        %p628 = scmp.gt.s32.totalorder %s175, 5
        %p629 = pnand %p627, %p628
        %p630 = pneg %p629
        %v631 = vmax.f32 %v558, %v578
        %v632 = vmax.f32 %v559, %v579
        %v633 = vmax.f32 %v560, %v580
        %v634 = vmax.f32 %v561, %v581
        %s635 = scalar_select %p630, 1, 0
        %v636 = vstv %s635
        %vm637 = vcmp.eq.s32.totalorder %v636, 1
        %v638 = vsel %vm637, %v631, %v558
        %v639 = vsel %vm637, %v632, %v559
        %v640 = vsel %vm637, %v633, %v560
        %v641 = vsel %vm637, %v634, %v561
        %p642 = scmp.le.s32.totalorder %s167, 5
        %p643 = scmp.gt.s32.totalorder %s177, 5
        %p644 = pnand %p642, %p643
        %p645 = pneg %p644
        %v646 = vmax.f32 %v573, %v578
        %v647 = vmax.f32 %v574, %v579
        %v648 = vmax.f32 %v575, %v580
        %v649 = vmax.f32 %v576, %v581
        %s650 = scalar_select %p645, 1, 0
        %v651 = vstv %s650
        %vm652 = vcmp.eq.s32.totalorder %v651, 1
        %v653 = vsel %vm652, %v646, %v573
        %v654 = vsel %vm652, %v647, %v574
        %v655 = vsel %vm652, %v648, %v575
        %v656 = vsel %vm652, %v649, %v576
        %s657 = scalar_lea.vmem %s132, 192 [#allocation5]
        %v658 = vld [vmem:[%s657] sm:$0xff]
        %v659 = vld [vmem:[%s657 + $0x8] sm:$0xff]
        %v660 = vld [vmem:[%s657 + $0x10] sm:$0xff]
        %v661 = vld [vmem:[%s657 + $0x18] sm:$0xff]
        %p662 = scmp.le.s32.totalorder %s159, 6
        %p663 = scmp.gt.s32.totalorder %s169, 6
        %p664 = pnand %p662, %p663
        %p665 = pneg %p664
        %v666 = vmax.f32 %v593, %v658
        %v667 = vmax.f32 %v594, %v659
        %v668 = vmax.f32 %v595, %v660
        %v669 = vmax.f32 %v596, %v661
        %s670 = scalar_select %p665, 1, 0
        %v671 = vstv %s670
        %vm672 = vcmp.eq.s32.totalorder %v671, 1
        %v673 = vsel %vm672, %v666, %v593
        %v674 = vsel %vm672, %v667, %v594
        %v675 = vsel %vm672, %v668, %v595
        %v676 = vsel %vm672, %v669, %v596
        %p677 = scmp.le.s32.totalorder %s161, 6
        %p678 = scmp.gt.s32.totalorder %s171, 6
        %p679 = pnand %p677, %p678
        %p680 = pneg %p679
        %v681 = vmax.f32 %v608, %v658
        %v682 = vmax.f32 %v609, %v659
        %v683 = vmax.f32 %v610, %v660
        %v684 = vmax.f32 %v611, %v661
        %s685 = scalar_select %p680, 1, 0
        %v686 = vstv %s685
        %vm687 = vcmp.eq.s32.totalorder %v686, 1
        %v688 = vsel %vm687, %v681, %v608
        %v689 = vsel %vm687, %v682, %v609
        %v690 = vsel %vm687, %v683, %v610
        %v691 = vsel %vm687, %v684, %v611
        %p692 = scmp.le.s32.totalorder %s163, 6
        %p693 = scmp.gt.s32.totalorder %s173, 6
        %p694 = pnand %p692, %p693
        %p695 = pneg %p694
        %v696 = vmax.f32 %v623, %v658
        %v697 = vmax.f32 %v624, %v659
        %v698 = vmax.f32 %v625, %v660
        %v699 = vmax.f32 %v626, %v661
        %s700 = scalar_select %p695, 1, 0
        %v701 = vstv %s700
        %vm702 = vcmp.eq.s32.totalorder %v701, 1
        %v703 = vsel %vm702, %v696, %v623
        %v704 = vsel %vm702, %v697, %v624
        %v705 = vsel %vm702, %v698, %v625
        %v706 = vsel %vm702, %v699, %v626
        %p707 = scmp.le.s32.totalorder %s165, 6
        %p708 = scmp.gt.s32.totalorder %s175, 6
        %p709 = pnand %p707, %p708
        %p710 = pneg %p709
        %v711 = vmax.f32 %v638, %v658
        %v712 = vmax.f32 %v639, %v659
        %v713 = vmax.f32 %v640, %v660
        %v714 = vmax.f32 %v641, %v661
        %s715 = scalar_select %p710, 1, 0
        %v716 = vstv %s715
        %vm717 = vcmp.eq.s32.totalorder %v716, 1
        %v718 = vsel %vm717, %v711, %v638
        %v719 = vsel %vm717, %v712, %v639
        %v720 = vsel %vm717, %v713, %v640
        %v721 = vsel %vm717, %v714, %v641
        %p722 = scmp.le.s32.totalorder %s167, 6
        %p723 = scmp.gt.s32.totalorder %s177, 6
        %p724 = pnand %p722, %p723
        %p725 = pneg %p724
        %v726 = vmax.f32 %v653, %v658
        %v727 = vmax.f32 %v654, %v659
        %v728 = vmax.f32 %v655, %v660
        %v729 = vmax.f32 %v656, %v661
        %s730 = scalar_select %p725, 1, 0
        %v731 = vstv %s730
        %vm732 = vcmp.eq.s32.totalorder %v731, 1
        %v733 = vsel %vm732, %v726, %v653
        %v734 = vsel %vm732, %v727, %v654
        %v735 = vsel %vm732, %v728, %v655
        %v736 = vsel %vm732, %v729, %v656
        %s737 = scalar_lea.vmem %s132, 224 [#allocation5]
        %v738 = vld [vmem:[%s737] sm:$0xff]
        %v739 = vld [vmem:[%s737 + $0x8] sm:$0xff]
        %v740 = vld [vmem:[%s737 + $0x10] sm:$0xff]
        %v741 = vld [vmem:[%s737 + $0x18] sm:$0xff]
        %p742 = scmp.le.s32.totalorder %s159, 7
        %p743 = scmp.gt.s32.totalorder %s169, 7
        %p744 = pnand %p742, %p743
        %p745 = pneg %p744
        %v746 = vmax.f32 %v673, %v738
        %v747 = vmax.f32 %v674, %v739
        %v748 = vmax.f32 %v675, %v740
        %v749 = vmax.f32 %v676, %v741
        %s750 = scalar_select %p745, 1, 0
        %v751 = vstv %s750
        %vm752 = vcmp.eq.s32.totalorder %v751, 1
        %v753 = vsel %vm752, %v746, %v673
        %v754 = vsel %vm752, %v747, %v674
        %v755 = vsel %vm752, %v748, %v675
        %v756 = vsel %vm752, %v749, %v676
        %p757 = scmp.le.s32.totalorder %s161, 7
        %p758 = scmp.gt.s32.totalorder %s171, 7
        %p759 = pnand %p757, %p758
        %p760 = pneg %p759
        %v761 = vmax.f32 %v688, %v738
        %v762 = vmax.f32 %v689, %v739
        %v763 = vmax.f32 %v690, %v740
        %v764 = vmax.f32 %v691, %v741
        %s765 = scalar_select %p760, 1, 0
        %v766 = vstv %s765
        %vm767 = vcmp.eq.s32.totalorder %v766, 1
        %v768 = vsel %vm767, %v761, %v688
        %v769 = vsel %vm767, %v762, %v689
        %v770 = vsel %vm767, %v763, %v690
        %v771 = vsel %vm767, %v764, %v691
        %p772 = scmp.le.s32.totalorder %s163, 7
        %p773 = scmp.gt.s32.totalorder %s173, 7
        %p774 = pnand %p772, %p773
        %p775 = pneg %p774
        %v776 = vmax.f32 %v703, %v738
        %v777 = vmax.f32 %v704, %v739
        %v778 = vmax.f32 %v705, %v740
        %v779 = vmax.f32 %v706, %v741
        %s780 = scalar_select %p775, 1, 0
        %v781 = vstv %s780
        %vm782 = vcmp.eq.s32.totalorder %v781, 1
        %v783 = vsel %vm782, %v776, %v703
        %v784 = vsel %vm782, %v777, %v704
        %v785 = vsel %vm782, %v778, %v705
        %v786 = vsel %vm782, %v779, %v706
        %p787 = scmp.le.s32.totalorder %s165, 7
        %p788 = scmp.gt.s32.totalorder %s175, 7
        %p789 = pnand %p787, %p788
        %p790 = pneg %p789
        %v791 = vmax.f32 %v718, %v738
        %v792 = vmax.f32 %v719, %v739
        %v793 = vmax.f32 %v720, %v740
        %v794 = vmax.f32 %v721, %v741
        %s795 = scalar_select %p790, 1, 0
        %v796 = vstv %s795
        %vm797 = vcmp.eq.s32.totalorder %v796, 1
        %v798 = vsel %vm797, %v791, %v718
        %v799 = vsel %vm797, %v792, %v719
        %v800 = vsel %vm797, %v793, %v720
        %v801 = vsel %vm797, %v794, %v721
        %p802 = scmp.le.s32.totalorder %s167, 7
        %p803 = scmp.gt.s32.totalorder %s177, 7
        %p804 = pnand %p802, %p803
        %p805 = pneg %p804
        %v806 = vmax.f32 %v733, %v738
        %v807 = vmax.f32 %v734, %v739
        %v808 = vmax.f32 %v735, %v740
        %v809 = vmax.f32 %v736, %v741
        %s810 = scalar_select %p805, 1, 0
        %v811 = vstv %s810
        %vm812 = vcmp.eq.s32.totalorder %v811, 1
        %v813 = vsel %vm812, %v806, %v733
        %v814 = vsel %vm812, %v807, %v734
        %v815 = vsel %vm812, %v808, %v735
        %v816 = vsel %vm812, %v809, %v736
        %s817 = scalar_lea.vmem %s132, 256 [#allocation5]
        %v818 = vld [vmem:[%s817] sm:$0xff]
        %v819 = vld [vmem:[%s817 + $0x8] sm:$0xff]
        %v820 = vld [vmem:[%s817 + $0x10] sm:$0xff]
        %v821 = vld [vmem:[%s817 + $0x18] sm:$0xff]
        %p822 = scmp.le.s32.totalorder %s159, 8
        %p823 = scmp.gt.s32.totalorder %s169, 8
        %p824 = pnand %p822, %p823
        %p825 = pneg %p824
        %v826 = vmax.f32 %v753, %v818
        %v827 = vmax.f32 %v754, %v819
        %v828 = vmax.f32 %v755, %v820
        %v829 = vmax.f32 %v756, %v821
        %s830 = scalar_select %p825, 1, 0
        %v831 = vstv %s830
        %vm832 = vcmp.eq.s32.totalorder %v831, 1
        %v833 = vsel %vm832, %v826, %v753
        %v834 = vsel %vm832, %v827, %v754
        %v835 = vsel %vm832, %v828, %v755
        %v836 = vsel %vm832, %v829, %v756
        %p837 = scmp.le.s32.totalorder %s161, 8
        %p838 = scmp.gt.s32.totalorder %s171, 8
        %p839 = pnand %p837, %p838
        %p840 = pneg %p839
        %v841 = vmax.f32 %v768, %v818
        %v842 = vmax.f32 %v769, %v819
        %v843 = vmax.f32 %v770, %v820
        %v844 = vmax.f32 %v771, %v821
        %s845 = scalar_select %p840, 1, 0
        %v846 = vstv %s845
        %vm847 = vcmp.eq.s32.totalorder %v846, 1
        %v848 = vsel %vm847, %v841, %v768
        %v849 = vsel %vm847, %v842, %v769
        %v850 = vsel %vm847, %v843, %v770
        %v851 = vsel %vm847, %v844, %v771
        %p852 = scmp.le.s32.totalorder %s163, 8
        %p853 = scmp.gt.s32.totalorder %s173, 8
        %p854 = pnand %p852, %p853
        %p855 = pneg %p854
        %v856 = vmax.f32 %v783, %v818
        %v857 = vmax.f32 %v784, %v819
        %v858 = vmax.f32 %v785, %v820
        %v859 = vmax.f32 %v786, %v821
        %s860 = scalar_select %p855, 1, 0
        %v861 = vstv %s860
        %vm862 = vcmp.eq.s32.totalorder %v861, 1
        %v863 = vsel %vm862, %v856, %v783
        %v864 = vsel %vm862, %v857, %v784
        %v865 = vsel %vm862, %v858, %v785
        %v866 = vsel %vm862, %v859, %v786
        %p867 = scmp.le.s32.totalorder %s165, 8
        %p868 = scmp.gt.s32.totalorder %s175, 8
        %p869 = pnand %p867, %p868
        %p870 = pneg %p869
        %v871 = vmax.f32 %v798, %v818
        %v872 = vmax.f32 %v799, %v819
        %v873 = vmax.f32 %v800, %v820
        %v874 = vmax.f32 %v801, %v821
        %s875 = scalar_select %p870, 1, 0
        %v876 = vstv %s875
        %vm877 = vcmp.eq.s32.totalorder %v876, 1
        %v878 = vsel %vm877, %v871, %v798
        %v879 = vsel %vm877, %v872, %v799
        %v880 = vsel %vm877, %v873, %v800
        %v881 = vsel %vm877, %v874, %v801
        %p882 = scmp.le.s32.totalorder %s167, 8
        %p883 = scmp.gt.s32.totalorder %s177, 8
        %p884 = pnand %p882, %p883
        %p885 = pneg %p884
        %v886 = vmax.f32 %v813, %v818
        %v887 = vmax.f32 %v814, %v819
        %v888 = vmax.f32 %v815, %v820
        %v889 = vmax.f32 %v816, %v821
        %s890 = scalar_select %p885, 1, 0
        %v891 = vstv %s890
        %vm892 = vcmp.eq.s32.totalorder %v891, 1
        %v893 = vsel %vm892, %v886, %v813
        %v894 = vsel %vm892, %v887, %v814
        %v895 = vsel %vm892, %v888, %v815
        %v896 = vsel %vm892, %v889, %v816
        %s897 = scalar_lea.vmem %s132, 288 [#allocation5]
        %v898 = vld [vmem:[%s897] sm:$0xff]
        %v899 = vld [vmem:[%s897 + $0x8] sm:$0xff]
        %v900 = vld [vmem:[%s897 + $0x10] sm:$0xff]
        %v901 = vld [vmem:[%s897 + $0x18] sm:$0xff]
        %p902 = scmp.le.s32.totalorder %s159, 9
        %p903 = scmp.gt.s32.totalorder %s169, 9
        %p904 = pnand %p902, %p903
        %p905 = pneg %p904
        %v906 = vmax.f32 %v833, %v898
        %v907 = vmax.f32 %v834, %v899
        %v908 = vmax.f32 %v835, %v900
        %v909 = vmax.f32 %v836, %v901
        %s910 = scalar_select %p905, 1, 0
        %v911 = vstv %s910
        %vm912 = vcmp.eq.s32.totalorder %v911, 1
        %v913 = vsel %vm912, %v906, %v833
        %v914 = vsel %vm912, %v907, %v834
        %v915 = vsel %vm912, %v908, %v835
        %v916 = vsel %vm912, %v909, %v836
        %p917 = scmp.le.s32.totalorder %s161, 9
        %p918 = scmp.gt.s32.totalorder %s171, 9
        %p919 = pnand %p917, %p918
        %p920 = pneg %p919
        %v921 = vmax.f32 %v848, %v898
        %v922 = vmax.f32 %v849, %v899
        %v923 = vmax.f32 %v850, %v900
        %v924 = vmax.f32 %v851, %v901
        %s925 = scalar_select %p920, 1, 0
        %v926 = vstv %s925
        %vm927 = vcmp.eq.s32.totalorder %v926, 1
        %v928 = vsel %vm927, %v921, %v848
        %v929 = vsel %vm927, %v922, %v849
        %v930 = vsel %vm927, %v923, %v850
        %v931 = vsel %vm927, %v924, %v851
        %p932 = scmp.le.s32.totalorder %s163, 9
        %p933 = scmp.gt.s32.totalorder %s173, 9
        %p934 = pnand %p932, %p933
        %p935 = pneg %p934
        %v936 = vmax.f32 %v863, %v898
        %v937 = vmax.f32 %v864, %v899
        %v938 = vmax.f32 %v865, %v900
        %v939 = vmax.f32 %v866, %v901
        %s940 = scalar_select %p935, 1, 0
        %v941 = vstv %s940
        %vm942 = vcmp.eq.s32.totalorder %v941, 1
        %v943 = vsel %vm942, %v936, %v863
        %v944 = vsel %vm942, %v937, %v864
        %v945 = vsel %vm942, %v938, %v865
        %v946 = vsel %vm942, %v939, %v866
        %p947 = scmp.le.s32.totalorder %s165, 9
        %p948 = scmp.gt.s32.totalorder %s175, 9
        %p949 = pnand %p947, %p948
        %p950 = pneg %p949
        %v951 = vmax.f32 %v878, %v898
        %v952 = vmax.f32 %v879, %v899
        %v953 = vmax.f32 %v880, %v900
        %v954 = vmax.f32 %v881, %v901
        %s955 = scalar_select %p950, 1, 0
        %v956 = vstv %s955
        %vm957 = vcmp.eq.s32.totalorder %v956, 1
        %v958 = vsel %vm957, %v951, %v878
        %v959 = vsel %vm957, %v952, %v879
        %v960 = vsel %vm957, %v953, %v880
        %v961 = vsel %vm957, %v954, %v881
        %p962 = scmp.le.s32.totalorder %s167, 9
        %p963 = scmp.gt.s32.totalorder %s177, 9
        %p964 = pnand %p962, %p963
        %p965 = pneg %p964
        %v966 = vmax.f32 %v893, %v898
        %v967 = vmax.f32 %v894, %v899
        %v968 = vmax.f32 %v895, %v900
        %v969 = vmax.f32 %v896, %v901
        %s970 = scalar_select %p965, 1, 0
        %v971 = vstv %s970
        %vm972 = vcmp.eq.s32.totalorder %v971, 1
        %v973 = vsel %vm972, %v966, %v893
        %v974 = vsel %vm972, %v967, %v894
        %v975 = vsel %vm972, %v968, %v895
        %v976 = vsel %vm972, %v969, %v896
        %s977 = scalar_lea.vmem %s132, 320 [#allocation5]
        %v978 = vld [vmem:[%s977] sm:$0xff]
        %v979 = vld [vmem:[%s977 + $0x8] sm:$0xff]
        %v980 = vld [vmem:[%s977 + $0x10] sm:$0xff]
        %v981 = vld [vmem:[%s977 + $0x18] sm:$0xff]
        %p982 = scmp.le.s32.totalorder %s159, 10
        %p983 = scmp.gt.s32.totalorder %s169, 10
        %p984 = pnand %p982, %p983
        %p985 = pneg %p984
        %v986 = vmax.f32 %v913, %v978
        %v987 = vmax.f32 %v914, %v979
        %v988 = vmax.f32 %v915, %v980
        %v989 = vmax.f32 %v916, %v981
        %s990 = scalar_select %p985, 1, 0
        %v991 = vstv %s990
        %vm992 = vcmp.eq.s32.totalorder %v991, 1
        %v993 = vsel %vm992, %v986, %v913
        %v994 = vsel %vm992, %v987, %v914
        %v995 = vsel %vm992, %v988, %v915
        %v996 = vsel %vm992, %v989, %v916
        %p997 = scmp.le.s32.totalorder %s161, 10
        %p998 = scmp.gt.s32.totalorder %s171, 10
        %p999 = pnand %p997, %p998
        %p1000 = pneg %p999
        %v1001 = vmax.f32 %v928, %v978
        %v1002 = vmax.f32 %v929, %v979
        %v1003 = vmax.f32 %v930, %v980
        %v1004 = vmax.f32 %v931, %v981
        %s1005 = scalar_select %p1000, 1, 0
        %v1006 = vstv %s1005
        %vm1007 = vcmp.eq.s32.totalorder %v1006, 1
        %v1008 = vsel %vm1007, %v1001, %v928
        %v1009 = vsel %vm1007, %v1002, %v929
        %v1010 = vsel %vm1007, %v1003, %v930
        %v1011 = vsel %vm1007, %v1004, %v931
        %p1012 = scmp.le.s32.totalorder %s163, 10
        %p1013 = scmp.gt.s32.totalorder %s173, 10
        %p1014 = pnand %p1012, %p1013
        %p1015 = pneg %p1014
        %v1016 = vmax.f32 %v943, %v978
        %v1017 = vmax.f32 %v944, %v979
        %v1018 = vmax.f32 %v945, %v980
        %v1019 = vmax.f32 %v946, %v981
        %s1020 = scalar_select %p1015, 1, 0
        %v1021 = vstv %s1020
        %vm1022 = vcmp.eq.s32.totalorder %v1021, 1
        %v1023 = vsel %vm1022, %v1016, %v943
        %v1024 = vsel %vm1022, %v1017, %v944
        %v1025 = vsel %vm1022, %v1018, %v945
        %v1026 = vsel %vm1022, %v1019, %v946
        %p1027 = scmp.le.s32.totalorder %s165, 10
        %p1028 = scmp.gt.s32.totalorder %s175, 10
        %p1029 = pnand %p1027, %p1028
        %p1030 = pneg %p1029
        %v1031 = vmax.f32 %v958, %v978
        %v1032 = vmax.f32 %v959, %v979
        %v1033 = vmax.f32 %v960, %v980
        %v1034 = vmax.f32 %v961, %v981
        %s1035 = scalar_select %p1030, 1, 0
        %v1036 = vstv %s1035
        %vm1037 = vcmp.eq.s32.totalorder %v1036, 1
        %v1038 = vsel %vm1037, %v1031, %v958
        %v1039 = vsel %vm1037, %v1032, %v959
        %v1040 = vsel %vm1037, %v1033, %v960
        %v1041 = vsel %vm1037, %v1034, %v961
        %p1042 = scmp.le.s32.totalorder %s167, 10
        %p1043 = scmp.gt.s32.totalorder %s177, 10
        %p1044 = pnand %p1042, %p1043
        %p1045 = pneg %p1044
        %v1046 = vmax.f32 %v973, %v978
        %v1047 = vmax.f32 %v974, %v979
        %v1048 = vmax.f32 %v975, %v980
        %v1049 = vmax.f32 %v976, %v981
        %s1050 = scalar_select %p1045, 1, 0
        %v1051 = vstv %s1050
        %vm1052 = vcmp.eq.s32.totalorder %v1051, 1
        %v1053 = vsel %vm1052, %v1046, %v973
        %v1054 = vsel %vm1052, %v1047, %v974
        %v1055 = vsel %vm1052, %v1048, %v975
        %v1056 = vsel %vm1052, %v1049, %v976
        %s1057 = scalar_lea.vmem %s132, 352 [#allocation5]
        %v1058 = vld [vmem:[%s1057] sm:$0xff]
        %v1059 = vld [vmem:[%s1057 + $0x8] sm:$0xff]
        %v1060 = vld [vmem:[%s1057 + $0x10] sm:$0xff]
        %v1061 = vld [vmem:[%s1057 + $0x18] sm:$0xff]
        %p1062 = scmp.le.s32.totalorder %s159, 11
        %p1063 = scmp.gt.s32.totalorder %s169, 11
        %p1064 = pnand %p1062, %p1063
        %p1065 = pneg %p1064
        %v1066 = vmax.f32 %v993, %v1058
        %v1067 = vmax.f32 %v994, %v1059
        %v1068 = vmax.f32 %v995, %v1060
        %v1069 = vmax.f32 %v996, %v1061
        %s1070 = scalar_select %p1065, 1, 0
        %v1071 = vstv %s1070
        %vm1072 = vcmp.eq.s32.totalorder %v1071, 1
        %v1073 = vsel %vm1072, %v1066, %v993
        %v1074 = vsel %vm1072, %v1067, %v994
        %v1075 = vsel %vm1072, %v1068, %v995
        %v1076 = vsel %vm1072, %v1069, %v996
        %p1077 = scmp.le.s32.totalorder %s161, 11
        %p1078 = scmp.gt.s32.totalorder %s171, 11
        %p1079 = pnand %p1077, %p1078
        %p1080 = pneg %p1079
        %v1081 = vmax.f32 %v1008, %v1058
        %v1082 = vmax.f32 %v1009, %v1059
        %v1083 = vmax.f32 %v1010, %v1060
        %v1084 = vmax.f32 %v1011, %v1061
        %s1085 = scalar_select %p1080, 1, 0
        %v1086 = vstv %s1085
        %vm1087 = vcmp.eq.s32.totalorder %v1086, 1
        %v1088 = vsel %vm1087, %v1081, %v1008
        %v1089 = vsel %vm1087, %v1082, %v1009
        %v1090 = vsel %vm1087, %v1083, %v1010
        %v1091 = vsel %vm1087, %v1084, %v1011
        %p1092 = scmp.le.s32.totalorder %s163, 11
        %p1093 = scmp.gt.s32.totalorder %s173, 11
        %p1094 = pnand %p1092, %p1093
        %p1095 = pneg %p1094
        %v1096 = vmax.f32 %v1023, %v1058
        %v1097 = vmax.f32 %v1024, %v1059
        %v1098 = vmax.f32 %v1025, %v1060
        %v1099 = vmax.f32 %v1026, %v1061
        %s1100 = scalar_select %p1095, 1, 0
        %v1101 = vstv %s1100
        %vm1102 = vcmp.eq.s32.totalorder %v1101, 1
        %v1103 = vsel %vm1102, %v1096, %v1023
        %v1104 = vsel %vm1102, %v1097, %v1024
        %v1105 = vsel %vm1102, %v1098, %v1025
        %v1106 = vsel %vm1102, %v1099, %v1026
        %p1107 = scmp.le.s32.totalorder %s165, 11
        %p1108 = scmp.gt.s32.totalorder %s175, 11
        %p1109 = pnand %p1107, %p1108
        %p1110 = pneg %p1109
        %v1111 = vmax.f32 %v1038, %v1058
        %v1112 = vmax.f32 %v1039, %v1059
        %v1113 = vmax.f32 %v1040, %v1060
        %v1114 = vmax.f32 %v1041, %v1061
        %s1115 = scalar_select %p1110, 1, 0
        %v1116 = vstv %s1115
        %vm1117 = vcmp.eq.s32.totalorder %v1116, 1
        %v1118 = vsel %vm1117, %v1111, %v1038
        %v1119 = vsel %vm1117, %v1112, %v1039
        %v1120 = vsel %vm1117, %v1113, %v1040
        %v1121 = vsel %vm1117, %v1114, %v1041
        %p1122 = scmp.le.s32.totalorder %s167, 11
        %p1123 = scmp.gt.s32.totalorder %s177, 11
        %p1124 = pnand %p1122, %p1123
        %p1125 = pneg %p1124
        %v1126 = vmax.f32 %v1053, %v1058
        %v1127 = vmax.f32 %v1054, %v1059
        %v1128 = vmax.f32 %v1055, %v1060
        %v1129 = vmax.f32 %v1056, %v1061
        %s1130 = scalar_select %p1125, 1, 0
        %v1131 = vstv %s1130
        %vm1132 = vcmp.eq.s32.totalorder %v1131, 1
        %v1133 = vsel %vm1132, %v1126, %v1053
        %v1134 = vsel %vm1132, %v1127, %v1054
        %v1135 = vsel %vm1132, %v1128, %v1055
        %v1136 = vsel %vm1132, %v1129, %v1056
        %s1137 = scalar_lea.vmem %s132, 384 [#allocation5]
        %v1138 = vld [vmem:[%s1137] sm:$0xff]
        %v1139 = vld [vmem:[%s1137 + $0x8] sm:$0xff]
        %v1140 = vld [vmem:[%s1137 + $0x10] sm:$0xff]
        %v1141 = vld [vmem:[%s1137 + $0x18] sm:$0xff]
        %p1142 = scmp.le.s32.totalorder %s159, 12
        %p1143 = scmp.gt.s32.totalorder %s169, 12
        %p1144 = pnand %p1142, %p1143
        %p1145 = pneg %p1144
        %v1146 = vmax.f32 %v1073, %v1138
        %v1147 = vmax.f32 %v1074, %v1139
        %v1148 = vmax.f32 %v1075, %v1140
        %v1149 = vmax.f32 %v1076, %v1141
        %s1150 = scalar_select %p1145, 1, 0
        %v1151 = vstv %s1150
        %vm1152 = vcmp.eq.s32.totalorder %v1151, 1
        %v1153 = vsel %vm1152, %v1146, %v1073
        %v1154 = vsel %vm1152, %v1147, %v1074
        %v1155 = vsel %vm1152, %v1148, %v1075
        %v1156 = vsel %vm1152, %v1149, %v1076
        %p1157 = scmp.le.s32.totalorder %s161, 12
        %p1158 = scmp.gt.s32.totalorder %s171, 12
        %p1159 = pnand %p1157, %p1158
        %p1160 = pneg %p1159
        %v1161 = vmax.f32 %v1088, %v1138
        %v1162 = vmax.f32 %v1089, %v1139
        %v1163 = vmax.f32 %v1090, %v1140
        %v1164 = vmax.f32 %v1091, %v1141
        %s1165 = scalar_select %p1160, 1, 0
        %v1166 = vstv %s1165
        %vm1167 = vcmp.eq.s32.totalorder %v1166, 1
        %v1168 = vsel %vm1167, %v1161, %v1088
        %v1169 = vsel %vm1167, %v1162, %v1089
        %v1170 = vsel %vm1167, %v1163, %v1090
        %v1171 = vsel %vm1167, %v1164, %v1091
        %p1172 = scmp.le.s32.totalorder %s163, 12
        %p1173 = scmp.gt.s32.totalorder %s173, 12
        %p1174 = pnand %p1172, %p1173
        %p1175 = pneg %p1174
        %v1176 = vmax.f32 %v1103, %v1138
        %v1177 = vmax.f32 %v1104, %v1139
        %v1178 = vmax.f32 %v1105, %v1140
        %v1179 = vmax.f32 %v1106, %v1141
        %s1180 = scalar_select %p1175, 1, 0
        %v1181 = vstv %s1180
        %vm1182 = vcmp.eq.s32.totalorder %v1181, 1
        %v1183 = vsel %vm1182, %v1176, %v1103
        %v1184 = vsel %vm1182, %v1177, %v1104
        %v1185 = vsel %vm1182, %v1178, %v1105
        %v1186 = vsel %vm1182, %v1179, %v1106
        %p1187 = scmp.le.s32.totalorder %s165, 12
        %p1188 = scmp.gt.s32.totalorder %s175, 12
        %p1189 = pnand %p1187, %p1188
        %p1190 = pneg %p1189
        %v1191 = vmax.f32 %v1118, %v1138
        %v1192 = vmax.f32 %v1119, %v1139
        %v1193 = vmax.f32 %v1120, %v1140
        %v1194 = vmax.f32 %v1121, %v1141
        %s1195 = scalar_select %p1190, 1, 0
        %v1196 = vstv %s1195
        %vm1197 = vcmp.eq.s32.totalorder %v1196, 1
        %v1198 = vsel %vm1197, %v1191, %v1118
        %v1199 = vsel %vm1197, %v1192, %v1119
        %v1200 = vsel %vm1197, %v1193, %v1120
        %v1201 = vsel %vm1197, %v1194, %v1121
        %p1202 = scmp.le.s32.totalorder %s167, 12
        %p1203 = scmp.gt.s32.totalorder %s177, 12
        %p1204 = pnand %p1202, %p1203
        %p1205 = pneg %p1204
        %v1206 = vmax.f32 %v1133, %v1138
        %v1207 = vmax.f32 %v1134, %v1139
        %v1208 = vmax.f32 %v1135, %v1140
        %v1209 = vmax.f32 %v1136, %v1141
        %s1210 = scalar_select %p1205, 1, 0
        %v1211 = vstv %s1210
        %vm1212 = vcmp.eq.s32.totalorder %v1211, 1
        %v1213 = vsel %vm1212, %v1206, %v1133
        %v1214 = vsel %vm1212, %v1207, %v1134
        %v1215 = vsel %vm1212, %v1208, %v1135
        %v1216 = vsel %vm1212, %v1209, %v1136
        %s1217 = scalar_lea.vmem %s132, 416 [#allocation5]
        %v1218 = vld [vmem:[%s1217] sm:$0xff]
        %v1219 = vld [vmem:[%s1217 + $0x8] sm:$0xff]
        %v1220 = vld [vmem:[%s1217 + $0x10] sm:$0xff]
        %v1221 = vld [vmem:[%s1217 + $0x18] sm:$0xff]
        %p1222 = scmp.le.s32.totalorder %s159, 13
        %p1223 = scmp.gt.s32.totalorder %s169, 13
        %p1224 = pnand %p1222, %p1223
        %p1225 = pneg %p1224
        %v1226 = vmax.f32 %v1153, %v1218
        %v1227 = vmax.f32 %v1154, %v1219
        %v1228 = vmax.f32 %v1155, %v1220
        %v1229 = vmax.f32 %v1156, %v1221
        %s1230 = scalar_select %p1225, 1, 0
        %v1231 = vstv %s1230
        %vm1232 = vcmp.eq.s32.totalorder %v1231, 1
        %v1233 = vsel %vm1232, %v1226, %v1153
        %v1234 = vsel %vm1232, %v1227, %v1154
        %v1235 = vsel %vm1232, %v1228, %v1155
        %v1236 = vsel %vm1232, %v1229, %v1156
        %p1237 = scmp.le.s32.totalorder %s161, 13
        %p1238 = scmp.gt.s32.totalorder %s171, 13
        %p1239 = pnand %p1237, %p1238
        %p1240 = pneg %p1239
        %v1241 = vmax.f32 %v1168, %v1218
        %v1242 = vmax.f32 %v1169, %v1219
        %v1243 = vmax.f32 %v1170, %v1220
        %v1244 = vmax.f32 %v1171, %v1221
        %s1245 = scalar_select %p1240, 1, 0
        %v1246 = vstv %s1245
        %vm1247 = vcmp.eq.s32.totalorder %v1246, 1
        %v1248 = vsel %vm1247, %v1241, %v1168
        %v1249 = vsel %vm1247, %v1242, %v1169
        %v1250 = vsel %vm1247, %v1243, %v1170
        %v1251 = vsel %vm1247, %v1244, %v1171
        %p1252 = scmp.le.s32.totalorder %s163, 13
        %p1253 = scmp.gt.s32.totalorder %s173, 13
        %p1254 = pnand %p1252, %p1253
        %p1255 = pneg %p1254
        %v1256 = vmax.f32 %v1183, %v1218
        %v1257 = vmax.f32 %v1184, %v1219
        %v1258 = vmax.f32 %v1185, %v1220
        %v1259 = vmax.f32 %v1186, %v1221
        %s1260 = scalar_select %p1255, 1, 0
        %v1261 = vstv %s1260
        %vm1262 = vcmp.eq.s32.totalorder %v1261, 1
        %v1263 = vsel %vm1262, %v1256, %v1183
        %v1264 = vsel %vm1262, %v1257, %v1184
        %v1265 = vsel %vm1262, %v1258, %v1185
        %v1266 = vsel %vm1262, %v1259, %v1186
        %p1267 = scmp.le.s32.totalorder %s165, 13
        %p1268 = scmp.gt.s32.totalorder %s175, 13
        %p1269 = pnand %p1267, %p1268
        %p1270 = pneg %p1269
        %v1271 = vmax.f32 %v1198, %v1218
        %v1272 = vmax.f32 %v1199, %v1219
        %v1273 = vmax.f32 %v1200, %v1220
        %v1274 = vmax.f32 %v1201, %v1221
        %s1275 = scalar_select %p1270, 1, 0
        %v1276 = vstv %s1275
        %vm1277 = vcmp.eq.s32.totalorder %v1276, 1
        %v1278 = vsel %vm1277, %v1271, %v1198
        %v1279 = vsel %vm1277, %v1272, %v1199
        %v1280 = vsel %vm1277, %v1273, %v1200
        %v1281 = vsel %vm1277, %v1274, %v1201
        %p1282 = scmp.le.s32.totalorder %s167, 13
        %p1283 = scmp.gt.s32.totalorder %s177, 13
        %p1284 = pnand %p1282, %p1283
        %p1285 = pneg %p1284
        %v1286 = vmax.f32 %v1213, %v1218
        %v1287 = vmax.f32 %v1214, %v1219
        %v1288 = vmax.f32 %v1215, %v1220
        %v1289 = vmax.f32 %v1216, %v1221
        %s1290 = scalar_select %p1285, 1, 0
        %v1291 = vstv %s1290
        %vm1292 = vcmp.eq.s32.totalorder %v1291, 1
        %v1293 = vsel %vm1292, %v1286, %v1213
        %v1294 = vsel %vm1292, %v1287, %v1214
        %v1295 = vsel %vm1292, %v1288, %v1215
        %v1296 = vsel %vm1292, %v1289, %v1216
        %s1297 = scalar_lea.vmem %s132, 448 [#allocation5]
        %v1298 = vld [vmem:[%s1297] sm:$0xff]
        %v1299 = vld [vmem:[%s1297 + $0x8] sm:$0xff]
        %v1300 = vld [vmem:[%s1297 + $0x10] sm:$0xff]
        %v1301 = vld [vmem:[%s1297 + $0x18] sm:$0xff]
        %p1302 = scmp.le.s32.totalorder %s159, 14
        %p1303 = scmp.gt.s32.totalorder %s169, 14
        %p1304 = pnand %p1302, %p1303
        %p1305 = pneg %p1304
        %v1306 = vmax.f32 %v1233, %v1298
        %v1307 = vmax.f32 %v1234, %v1299
        %v1308 = vmax.f32 %v1235, %v1300
        %v1309 = vmax.f32 %v1236, %v1301
        %s1310 = scalar_select %p1305, 1, 0
        %v1311 = vstv %s1310
        %vm1312 = vcmp.eq.s32.totalorder %v1311, 1
        %v1313 = vsel %vm1312, %v1306, %v1233
        %v1314 = vsel %vm1312, %v1307, %v1234
        %v1315 = vsel %vm1312, %v1308, %v1235
        %v1316 = vsel %vm1312, %v1309, %v1236
        %p1317 = scmp.le.s32.totalorder %s161, 14
        %p1318 = scmp.gt.s32.totalorder %s171, 14
        %p1319 = pnand %p1317, %p1318
        %p1320 = pneg %p1319
        %v1321 = vmax.f32 %v1248, %v1298
        %v1322 = vmax.f32 %v1249, %v1299
        %v1323 = vmax.f32 %v1250, %v1300
        %v1324 = vmax.f32 %v1251, %v1301
        %s1325 = scalar_select %p1320, 1, 0
        %v1326 = vstv %s1325
        %vm1327 = vcmp.eq.s32.totalorder %v1326, 1
        %v1328 = vsel %vm1327, %v1321, %v1248
        %v1329 = vsel %vm1327, %v1322, %v1249
        %v1330 = vsel %vm1327, %v1323, %v1250
        %v1331 = vsel %vm1327, %v1324, %v1251
        %p1332 = scmp.le.s32.totalorder %s163, 14
        %p1333 = scmp.gt.s32.totalorder %s173, 14
        %p1334 = pnand %p1332, %p1333
        %p1335 = pneg %p1334
        %v1336 = vmax.f32 %v1263, %v1298
        %v1337 = vmax.f32 %v1264, %v1299
        %v1338 = vmax.f32 %v1265, %v1300
        %v1339 = vmax.f32 %v1266, %v1301
        %s1340 = scalar_select %p1335, 1, 0
        %v1341 = vstv %s1340
        %vm1342 = vcmp.eq.s32.totalorder %v1341, 1
        %v1343 = vsel %vm1342, %v1336, %v1263
        %v1344 = vsel %vm1342, %v1337, %v1264
        %v1345 = vsel %vm1342, %v1338, %v1265
        %v1346 = vsel %vm1342, %v1339, %v1266
        %p1347 = scmp.le.s32.totalorder %s165, 14
        %p1348 = scmp.gt.s32.totalorder %s175, 14
        %p1349 = pnand %p1347, %p1348
        %p1350 = pneg %p1349
        %v1351 = vmax.f32 %v1278, %v1298
        %v1352 = vmax.f32 %v1279, %v1299
        %v1353 = vmax.f32 %v1280, %v1300
        %v1354 = vmax.f32 %v1281, %v1301
        %s1355 = scalar_select %p1350, 1, 0
        %v1356 = vstv %s1355
        %vm1357 = vcmp.eq.s32.totalorder %v1356, 1
        %v1358 = vsel %vm1357, %v1351, %v1278
        %v1359 = vsel %vm1357, %v1352, %v1279
        %v1360 = vsel %vm1357, %v1353, %v1280
        %v1361 = vsel %vm1357, %v1354, %v1281
        %p1362 = scmp.le.s32.totalorder %s167, 14
        %p1363 = scmp.gt.s32.totalorder %s177, 14
        %p1364 = pnand %p1362, %p1363
        %p1365 = pneg %p1364
        %v1366 = vmax.f32 %v1293, %v1298
        %v1367 = vmax.f32 %v1294, %v1299
        %v1368 = vmax.f32 %v1295, %v1300
        %v1369 = vmax.f32 %v1296, %v1301
        %s1370 = scalar_select %p1365, 1, 0
        %v1371 = vstv %s1370
        %vm1372 = vcmp.eq.s32.totalorder %v1371, 1
        %v1373 = vsel %vm1372, %v1366, %v1293
        %v1374 = vsel %vm1372, %v1367, %v1294
        %v1375 = vsel %vm1372, %v1368, %v1295
        %v1376 = vsel %vm1372, %v1369, %v1296
        %s1377 = scalar_lea.vmem %s132, 480 [#allocation5]
        %v1378 = vld [vmem:[%s1377] sm:$0xff]
        %v1379 = vld [vmem:[%s1377 + $0x8] sm:$0xff]
        %v1380 = vld [vmem:[%s1377 + $0x10] sm:$0xff]
        %v1381 = vld [vmem:[%s1377 + $0x18] sm:$0xff]
        %p1382 = scmp.le.s32.totalorder %s159, 15
        %p1383 = scmp.gt.s32.totalorder %s169, 15
        %p1384 = pnand %p1382, %p1383
        %p1385 = pneg %p1384
        %v1386 = vmax.f32 %v1313, %v1378
        %v1387 = vmax.f32 %v1314, %v1379
        %v1388 = vmax.f32 %v1315, %v1380
        %v1389 = vmax.f32 %v1316, %v1381
        %s1390 = scalar_select %p1385, 1, 0
        %v1391 = vstv %s1390
        %vm1392 = vcmp.eq.s32.totalorder %v1391, 1
        %v1393 = vsel %vm1392, %v1386, %v1313
        %v1394 = vsel %vm1392, %v1387, %v1314
        %v1395 = vsel %vm1392, %v1388, %v1315
        %v1396 = vsel %vm1392, %v1389, %v1316
        %p1397 = scmp.le.s32.totalorder %s161, 15
        %p1398 = scmp.gt.s32.totalorder %s171, 15
        %p1399 = pnand %p1397, %p1398
        %p1400 = pneg %p1399
        %v1401 = vmax.f32 %v1328, %v1378
        %v1402 = vmax.f32 %v1329, %v1379
        %v1403 = vmax.f32 %v1330, %v1380
        %v1404 = vmax.f32 %v1331, %v1381
        %s1405 = scalar_select %p1400, 1, 0
        %v1406 = vstv %s1405
        %vm1407 = vcmp.eq.s32.totalorder %v1406, 1
        %v1408 = vsel %vm1407, %v1401, %v1328
        %v1409 = vsel %vm1407, %v1402, %v1329
        %v1410 = vsel %vm1407, %v1403, %v1330
        %v1411 = vsel %vm1407, %v1404, %v1331
        %p1412 = scmp.le.s32.totalorder %s163, 15
        %p1413 = scmp.gt.s32.totalorder %s173, 15
        %p1414 = pnand %p1412, %p1413
        %p1415 = pneg %p1414
        %v1416 = vmax.f32 %v1343, %v1378
        %v1417 = vmax.f32 %v1344, %v1379
        %v1418 = vmax.f32 %v1345, %v1380
        %v1419 = vmax.f32 %v1346, %v1381
        %s1420 = scalar_select %p1415, 1, 0
        %v1421 = vstv %s1420
        %vm1422 = vcmp.eq.s32.totalorder %v1421, 1
        %v1423 = vsel %vm1422, %v1416, %v1343
        %v1424 = vsel %vm1422, %v1417, %v1344
        %v1425 = vsel %vm1422, %v1418, %v1345
        %v1426 = vsel %vm1422, %v1419, %v1346
        %p1427 = scmp.le.s32.totalorder %s165, 15
        %p1428 = scmp.gt.s32.totalorder %s175, 15
        %p1429 = pnand %p1427, %p1428
        %p1430 = pneg %p1429
        %v1431 = vmax.f32 %v1358, %v1378
        %v1432 = vmax.f32 %v1359, %v1379
        %v1433 = vmax.f32 %v1360, %v1380
        %v1434 = vmax.f32 %v1361, %v1381
        %s1435 = scalar_select %p1430, 1, 0
        %v1436 = vstv %s1435
        %vm1437 = vcmp.eq.s32.totalorder %v1436, 1
        %v1438 = vsel %vm1437, %v1431, %v1358
        %v1439 = vsel %vm1437, %v1432, %v1359
        %v1440 = vsel %vm1437, %v1433, %v1360
        %v1441 = vsel %vm1437, %v1434, %v1361
        %p1442 = scmp.le.s32.totalorder %s167, 15
        %p1443 = scmp.gt.s32.totalorder %s177, 15
        %p1444 = pnand %p1442, %p1443
        %p1445 = pneg %p1444
        %v1446 = vmax.f32 %v1373, %v1378
        %v1447 = vmax.f32 %v1374, %v1379
        %v1448 = vmax.f32 %v1375, %v1380
        %v1449 = vmax.f32 %v1376, %v1381
        %s1450 = scalar_select %p1445, 1, 0
        %v1451 = vstv %s1450
        %vm1452 = vcmp.eq.s32.totalorder %v1451, 1
        %v1453 = vsel %vm1452, %v1446, %v1373
        %v1454 = vsel %vm1452, %v1447, %v1374
        %v1455 = vsel %vm1452, %v1448, %v1375
        %v1456 = vsel %vm1452, %v1449, %v1376
        %v1457 = vlaneseq
        %v1458 = vshrl.u32 %v1457, 7
        %v1459 = vadd.s32 %v1458, 8
        %v1460 = vstv %s179
        %vm1461 = vcmp.ge.s32.totalorder %v1458, %v1460
        %vm1462 = vcmp.ge.s32.totalorder %v1459, %v1460
        %v1463 = vstv %s189
        %vm1464 = vcmp.lt.s32.totalorder %v1458, %v1463
        %vm1465 = vcmp.lt.s32.totalorder %v1459, %v1463
        %vm1466 = vmand %vm1461, %vm1464
        %vm1467 = vmand %vm1462, %vm1465
        %p1468 = scmp.le.s32.totalorder %s189, %s179
        %v1469 = vsel %vm1466, 1, 0
        %v1470 = vsel %vm1467, 1, 0
        %vm1471 = vcmp.eq.s32.totalorder %v1469, 1
        %vm1472 = vcmp.eq.s32.totalorder %v1470, 1
        %v1473 = vsel %vm1471, %v1393, -inf
        %v1474 = vsel %vm1471, %v1394, -inf
        %v1475 = vsel %vm1472, %v1395, -inf
        %v1476 = vsel %vm1472, %v1396, -inf
        %v1477 = vmax.f32 %v1473, %v1475
        %v1478 = vrot.slane %v1477, 4
        %v1479 = vmax.f32 %v1477, %v1478
        %v1480 = vrot.slane %v1479, 2
        %v1481 = vmax.f32 %v1479, %v1480
        %v1482 = vrot.slane %v1481, 1
        %v1483 = vmax.f32 %v1481, %v1482
        %v1484 = vmax.f32 %v1474, %v1476
        %v1485 = vrot.slane %v1484, 4
        %v1486 = vmax.f32 %v1484, %v1485
        %v1487 = vrot.slane %v1486, 2
        %v1488 = vmax.f32 %v1486, %v1487
        %v1489 = vrot.slane %v1488, 1
        %v1490 = vmax.f32 %v1488, %v1489
        %p1491 = scmp.le.s32.totalorder %s169, %s159
        %p1492 = por %p1491, %p1468
        %s1493 = scalar_select %p1492, 1, 0
        %v1494 = vstv %s1493
        %vm1495 = vcmp.eq.s32.totalorder %v1494, 1
        %v1496 = vsel %vm1495, 0.0, %v1483
        %v1497 = vsel %vm1495, 0.0, %v1490
        %v1500 = vrot.slane %v1497, 7
        %vm1501 = vcmask 1040384
        %v1502 = vsel %vm1501, %v1496, %v1500
        %v1504 = vlaneseq
        %vm1505 = vcmp.ge.s32.totalorder %v1504, 0
        %vm1506 = vcmp.lt.s32.totalorder %v1504, 256
        %vm1507 = vmand %vm1505, %vm1506
        %1508 = vst.msk [vmem:[%s157] ss:$8 sm:$0x3] %vm1507, %v1502
        %1509 = vst.msk [vmem:[%s157] ss:$8 sm:$0x0] %vm1507, %v1502
        %v1510 = vsel %vm1471, %v1408, -inf
        %v1511 = vsel %vm1471, %v1409, -inf
        %v1512 = vsel %vm1472, %v1410, -inf
        %v1513 = vsel %vm1472, %v1411, -inf
        %v1514 = vmax.f32 %v1510, %v1512
        %v1515 = vrot.slane %v1514, 4
        %v1516 = vmax.f32 %v1514, %v1515
        %v1517 = vrot.slane %v1516, 2
        %v1518 = vmax.f32 %v1516, %v1517
        %v1519 = vrot.slane %v1518, 1
        %v1520 = vmax.f32 %v1518, %v1519
        %v1521 = vmax.f32 %v1511, %v1513
        %v1522 = vrot.slane %v1521, 4
        %v1523 = vmax.f32 %v1521, %v1522
        %v1524 = vrot.slane %v1523, 2
        %v1525 = vmax.f32 %v1523, %v1524
        %v1526 = vrot.slane %v1525, 1
        %v1527 = vmax.f32 %v1525, %v1526
        %p1528 = scmp.le.s32.totalorder %s171, %s161
        %p1529 = por %p1528, %p1468
        %s1530 = scalar_select %p1529, 1, 0
        %v1531 = vstv %s1530
        %vm1532 = vcmp.eq.s32.totalorder %v1531, 1
        %v1533 = vsel %vm1532, 0.0, %v1520
        %v1534 = vsel %vm1532, 0.0, %v1527
        %v1537 = vrot.slane %v1534, 7
        %v1538 = vsel %vm1501, %v1533, %v1537
        %s1540 = scalar_lea.vmem %s157, 5
        %1541 = vst.msk [vmem:[%s1540] ss:$8 sm:$0x3] %vm1507, %v1538
        %1542 = vst.msk [vmem:[%s1540] ss:$8 sm:$0x0] %vm1507, %v1538
        %v1543 = vsel %vm1471, %v1423, -inf
        %v1544 = vsel %vm1471, %v1424, -inf
        %v1545 = vsel %vm1472, %v1425, -inf
        %v1546 = vsel %vm1472, %v1426, -inf
        %v1547 = vmax.f32 %v1543, %v1545
        %v1548 = vrot.slane %v1547, 4
        %v1549 = vmax.f32 %v1547, %v1548
        %v1550 = vrot.slane %v1549, 2
        %v1551 = vmax.f32 %v1549, %v1550
        %v1552 = vrot.slane %v1551, 1
        %v1553 = vmax.f32 %v1551, %v1552
        %v1554 = vmax.f32 %v1544, %v1546
        %v1555 = vrot.slane %v1554, 4
        %v1556 = vmax.f32 %v1554, %v1555
        %v1557 = vrot.slane %v1556, 2
        %v1558 = vmax.f32 %v1556, %v1557
        %v1559 = vrot.slane %v1558, 1
        %v1560 = vmax.f32 %v1558, %v1559
        %p1561 = scmp.le.s32.totalorder %s173, %s163
        %p1562 = por %p1561, %p1468
        %s1563 = scalar_select %p1562, 1, 0
        %v1564 = vstv %s1563
        %vm1565 = vcmp.eq.s32.totalorder %v1564, 1
        %v1566 = vsel %vm1565, 0.0, %v1553
        %v1567 = vsel %vm1565, 0.0, %v1560
        %v1570 = vrot.slane %v1567, 7
        %v1571 = vsel %vm1501, %v1566, %v1570
        %s1573 = scalar_lea.vmem %s157, 18
        %1574 = vst.msk [vmem:[%s1573] ss:$8 sm:$0x3] %vm1507, %v1571
        %1575 = vst.msk [vmem:[%s1573] ss:$8 sm:$0x0] %vm1507, %v1571
        %v1576 = vsel %vm1471, %v1438, -inf
        %v1577 = vsel %vm1471, %v1439, -inf
        %v1578 = vsel %vm1472, %v1440, -inf
        %v1579 = vsel %vm1472, %v1441, -inf
        %v1580 = vmax.f32 %v1576, %v1578
        %v1581 = vrot.slane %v1580, 4
        %v1582 = vmax.f32 %v1580, %v1581
        %v1583 = vrot.slane %v1582, 2
        %v1584 = vmax.f32 %v1582, %v1583
        %v1585 = vrot.slane %v1584, 1
        %v1586 = vmax.f32 %v1584, %v1585
        %v1587 = vmax.f32 %v1577, %v1579
        %v1588 = vrot.slane %v1587, 4
        %v1589 = vmax.f32 %v1587, %v1588
        %v1590 = vrot.slane %v1589, 2
        %v1591 = vmax.f32 %v1589, %v1590
        %v1592 = vrot.slane %v1591, 1
        %v1593 = vmax.f32 %v1591, %v1592
        %p1594 = scmp.le.s32.totalorder %s175, %s165
        %p1595 = por %p1594, %p1468
        %s1596 = scalar_select %p1595, 1, 0
        %v1597 = vstv %s1596
        %vm1598 = vcmp.eq.s32.totalorder %v1597, 1
        %v1599 = vsel %vm1598, 0.0, %v1586
        %v1600 = vsel %vm1598, 0.0, %v1593
        %v1603 = vrot.slane %v1600, 7
        %v1604 = vsel %vm1501, %v1599, %v1603
        %s1606 = scalar_lea.vmem %s157, 23
        %1607 = vst.msk [vmem:[%s1606] ss:$8 sm:$0x3] %vm1507, %v1604
        %1608 = vst.msk [vmem:[%s1606] ss:$8 sm:$0x0] %vm1507, %v1604
        %v1609 = vsel %vm1471, %v1453, -inf
        %v1610 = vsel %vm1471, %v1454, -inf
        %v1611 = vsel %vm1472, %v1455, -inf
        %v1612 = vsel %vm1472, %v1456, -inf
        %v1613 = vmax.f32 %v1609, %v1611
        %v1614 = vrot.slane %v1613, 4
        %v1615 = vmax.f32 %v1613, %v1614
        %v1616 = vrot.slane %v1615, 2
        %v1617 = vmax.f32 %v1615, %v1616
        %v1618 = vrot.slane %v1617, 1
        %v1619 = vmax.f32 %v1617, %v1618
        %v1620 = vmax.f32 %v1610, %v1612
        %v1621 = vrot.slane %v1620, 4
        %v1622 = vmax.f32 %v1620, %v1621
        %v1623 = vrot.slane %v1622, 2
        %v1624 = vmax.f32 %v1622, %v1623
        %v1625 = vrot.slane %v1624, 1
        %v1626 = vmax.f32 %v1624, %v1625
        %p1627 = scmp.le.s32.totalorder %s177, %s167
        %p1628 = por %p1627, %p1468
        %s1629 = scalar_select %p1628, 1, 0
        %v1630 = vstv %s1629
        %vm1631 = vcmp.eq.s32.totalorder %v1630, 1
        %v1632 = vsel %vm1631, 0.0, %v1619
        %v1633 = vsel %vm1631, 0.0, %v1626
        %v1636 = vrot.slane %v1633, 7
        %v1637 = vsel %vm1501, %v1632, %v1636
        %s1639 = scalar_lea.vmem %s157, 36
        %1640 = vst.msk [vmem:[%s1639] ss:$8 sm:$0x3] %vm1507, %v1637
        %1641 = vst.msk [vmem:[%s1639] ss:$8 sm:$0x0] %vm1507, %v1637
        %v1642 = vstv %s181
        %vm1643 = vcmp.ge.s32.totalorder %v1458, %v1642
        %vm1644 = vcmp.ge.s32.totalorder %v1459, %v1642
        %v1645 = vstv %s191
        %vm1646 = vcmp.lt.s32.totalorder %v1458, %v1645
        %vm1647 = vcmp.lt.s32.totalorder %v1459, %v1645
        %vm1648 = vmand %vm1643, %vm1646
        %vm1649 = vmand %vm1644, %vm1647
        %p1650 = scmp.le.s32.totalorder %s191, %s181
        %v1651 = vsel %vm1648, 1, 0
        %v1652 = vsel %vm1649, 1, 0
        %vm1653 = vcmp.eq.s32.totalorder %v1651, 1
        %vm1654 = vcmp.eq.s32.totalorder %v1652, 1
        %v1655 = vsel %vm1653, %v1393, -inf
        %v1656 = vsel %vm1653, %v1394, -inf
        %v1657 = vsel %vm1654, %v1395, -inf
        %v1658 = vsel %vm1654, %v1396, -inf
        %v1659 = vmax.f32 %v1655, %v1657
        %v1660 = vrot.slane %v1659, 4
        %v1661 = vmax.f32 %v1659, %v1660
        %v1662 = vrot.slane %v1661, 2
        %v1663 = vmax.f32 %v1661, %v1662
        %v1664 = vrot.slane %v1663, 1
        %v1665 = vmax.f32 %v1663, %v1664
        %v1666 = vmax.f32 %v1656, %v1658
        %v1667 = vrot.slane %v1666, 4
        %v1668 = vmax.f32 %v1666, %v1667
        %v1669 = vrot.slane %v1668, 2
        %v1670 = vmax.f32 %v1668, %v1669
        %v1671 = vrot.slane %v1670, 1
        %v1672 = vmax.f32 %v1670, %v1671
        %p1673 = por %p1491, %p1650
        %s1674 = scalar_select %p1673, 1, 0
        %v1675 = vstv %s1674
        %vm1676 = vcmp.eq.s32.totalorder %v1675, 1
        %v1677 = vsel %vm1676, 0.0, %v1665
        %v1678 = vsel %vm1676, 0.0, %v1672
        %v1681 = vrot.slane %v1678, 7
        %v1682 = vsel %vm1501, %v1677, %v1681
        %s1684 = scalar_lea.vmem %s157, 1
        %1685 = vst.msk [vmem:[%s1684] ss:$8 sm:$0x3] %vm1507, %v1682
        %1686 = vst.msk [vmem:[%s1684] ss:$8 sm:$0x0] %vm1507, %v1682
        %v1687 = vsel %vm1653, %v1408, -inf
        %v1688 = vsel %vm1653, %v1409, -inf
        %v1689 = vsel %vm1654, %v1410, -inf
        %v1690 = vsel %vm1654, %v1411, -inf
        %v1691 = vmax.f32 %v1687, %v1689
        %v1692 = vrot.slane %v1691, 4
        %v1693 = vmax.f32 %v1691, %v1692
        %v1694 = vrot.slane %v1693, 2
        %v1695 = vmax.f32 %v1693, %v1694
        %v1696 = vrot.slane %v1695, 1
        %v1697 = vmax.f32 %v1695, %v1696
        %v1698 = vmax.f32 %v1688, %v1690
        %v1699 = vrot.slane %v1698, 4
        %v1700 = vmax.f32 %v1698, %v1699
        %v1701 = vrot.slane %v1700, 2
        %v1702 = vmax.f32 %v1700, %v1701
        %v1703 = vrot.slane %v1702, 1
        %v1704 = vmax.f32 %v1702, %v1703
        %p1705 = por %p1528, %p1650
        %s1706 = scalar_select %p1705, 1, 0
        %v1707 = vstv %s1706
        %vm1708 = vcmp.eq.s32.totalorder %v1707, 1
        %v1709 = vsel %vm1708, 0.0, %v1697
        %v1710 = vsel %vm1708, 0.0, %v1704
        %v1713 = vrot.slane %v1710, 7
        %v1714 = vsel %vm1501, %v1709, %v1713
        %s1716 = scalar_lea.vmem %s157, 6
        %1717 = vst.msk [vmem:[%s1716] ss:$8 sm:$0x3] %vm1507, %v1714
        %1718 = vst.msk [vmem:[%s1716] ss:$8 sm:$0x0] %vm1507, %v1714
        %v1719 = vsel %vm1653, %v1423, -inf
        %v1720 = vsel %vm1653, %v1424, -inf
        %v1721 = vsel %vm1654, %v1425, -inf
        %v1722 = vsel %vm1654, %v1426, -inf
        %v1723 = vmax.f32 %v1719, %v1721
        %v1724 = vrot.slane %v1723, 4
        %v1725 = vmax.f32 %v1723, %v1724
        %v1726 = vrot.slane %v1725, 2
        %v1727 = vmax.f32 %v1725, %v1726
        %v1728 = vrot.slane %v1727, 1
        %v1729 = vmax.f32 %v1727, %v1728
        %v1730 = vmax.f32 %v1720, %v1722
        %v1731 = vrot.slane %v1730, 4
        %v1732 = vmax.f32 %v1730, %v1731
        %v1733 = vrot.slane %v1732, 2
        %v1734 = vmax.f32 %v1732, %v1733
        %v1735 = vrot.slane %v1734, 1
        %v1736 = vmax.f32 %v1734, %v1735
        %p1737 = por %p1561, %p1650
        %s1738 = scalar_select %p1737, 1, 0
        %v1739 = vstv %s1738
        %vm1740 = vcmp.eq.s32.totalorder %v1739, 1
        %v1741 = vsel %vm1740, 0.0, %v1729
        %v1742 = vsel %vm1740, 0.0, %v1736
        %v1745 = vrot.slane %v1742, 7
        %v1746 = vsel %vm1501, %v1741, %v1745
        %s1748 = scalar_lea.vmem %s157, 19
        %1749 = vst.msk [vmem:[%s1748] ss:$8 sm:$0x3] %vm1507, %v1746
        %1750 = vst.msk [vmem:[%s1748] ss:$8 sm:$0x0] %vm1507, %v1746
        %v1751 = vsel %vm1653, %v1438, -inf
        %v1752 = vsel %vm1653, %v1439, -inf
        %v1753 = vsel %vm1654, %v1440, -inf
        %v1754 = vsel %vm1654, %v1441, -inf
        %v1755 = vmax.f32 %v1751, %v1753
        %v1756 = vrot.slane %v1755, 4
        %v1757 = vmax.f32 %v1755, %v1756
        %v1758 = vrot.slane %v1757, 2
        %v1759 = vmax.f32 %v1757, %v1758
        %v1760 = vrot.slane %v1759, 1
        %v1761 = vmax.f32 %v1759, %v1760
        %v1762 = vmax.f32 %v1752, %v1754
        %v1763 = vrot.slane %v1762, 4
        %v1764 = vmax.f32 %v1762, %v1763
        %v1765 = vrot.slane %v1764, 2
        %v1766 = vmax.f32 %v1764, %v1765
        %v1767 = vrot.slane %v1766, 1
        %v1768 = vmax.f32 %v1766, %v1767
        %p1769 = por %p1594, %p1650
        %s1770 = scalar_select %p1769, 1, 0
        %v1771 = vstv %s1770
        %vm1772 = vcmp.eq.s32.totalorder %v1771, 1
        %v1773 = vsel %vm1772, 0.0, %v1761
        %v1774 = vsel %vm1772, 0.0, %v1768
        %v1777 = vrot.slane %v1774, 7
        %v1778 = vsel %vm1501, %v1773, %v1777
        %s1780 = scalar_lea.vmem %s157, 32
        %1781 = vst.msk [vmem:[%s1780] ss:$8 sm:$0x3] %vm1507, %v1778
        %1782 = vst.msk [vmem:[%s1780] ss:$8 sm:$0x0] %vm1507, %v1778
        %v1783 = vsel %vm1653, %v1453, -inf
        %v1784 = vsel %vm1653, %v1454, -inf
        %v1785 = vsel %vm1654, %v1455, -inf
        %v1786 = vsel %vm1654, %v1456, -inf
        %v1787 = vmax.f32 %v1783, %v1785
        %v1788 = vrot.slane %v1787, 4
        %v1789 = vmax.f32 %v1787, %v1788
        %v1790 = vrot.slane %v1789, 2
        %v1791 = vmax.f32 %v1789, %v1790
        %v1792 = vrot.slane %v1791, 1
        %v1793 = vmax.f32 %v1791, %v1792
        %v1794 = vmax.f32 %v1784, %v1786
        %v1795 = vrot.slane %v1794, 4
        %v1796 = vmax.f32 %v1794, %v1795
        %v1797 = vrot.slane %v1796, 2
        %v1798 = vmax.f32 %v1796, %v1797
        %v1799 = vrot.slane %v1798, 1
        %v1800 = vmax.f32 %v1798, %v1799
        %p1801 = por %p1627, %p1650
        %s1802 = scalar_select %p1801, 1, 0
        %v1803 = vstv %s1802
        %vm1804 = vcmp.eq.s32.totalorder %v1803, 1
        %v1805 = vsel %vm1804, 0.0, %v1793
        %v1806 = vsel %vm1804, 0.0, %v1800
        %v1809 = vrot.slane %v1806, 7
        %v1810 = vsel %vm1501, %v1805, %v1809
        %s1812 = scalar_lea.vmem %s157, 37
        %1813 = vst.msk [vmem:[%s1812] ss:$8 sm:$0x3] %vm1507, %v1810
        %1814 = vst.msk [vmem:[%s1812] ss:$8 sm:$0x0] %vm1507, %v1810
        %v1815 = vstv %s183
        %vm1816 = vcmp.ge.s32.totalorder %v1458, %v1815
        %vm1817 = vcmp.ge.s32.totalorder %v1459, %v1815
        %v1818 = vstv %s193
        %vm1819 = vcmp.lt.s32.totalorder %v1458, %v1818
        %vm1820 = vcmp.lt.s32.totalorder %v1459, %v1818
        %vm1821 = vmand %vm1816, %vm1819
        %vm1822 = vmand %vm1817, %vm1820
        %p1823 = scmp.le.s32.totalorder %s193, %s183
        %v1824 = vsel %vm1821, 1, 0
        %v1825 = vsel %vm1822, 1, 0
        %vm1826 = vcmp.eq.s32.totalorder %v1824, 1
        %vm1827 = vcmp.eq.s32.totalorder %v1825, 1
        %v1828 = vsel %vm1826, %v1393, -inf
        %v1829 = vsel %vm1826, %v1394, -inf
        %v1830 = vsel %vm1827, %v1395, -inf
        %v1831 = vsel %vm1827, %v1396, -inf
        %v1832 = vmax.f32 %v1828, %v1830
        %v1833 = vrot.slane %v1832, 4
        %v1834 = vmax.f32 %v1832, %v1833
        %v1835 = vrot.slane %v1834, 2
        %v1836 = vmax.f32 %v1834, %v1835
        %v1837 = vrot.slane %v1836, 1
        %v1838 = vmax.f32 %v1836, %v1837
        %v1839 = vmax.f32 %v1829, %v1831
        %v1840 = vrot.slane %v1839, 4
        %v1841 = vmax.f32 %v1839, %v1840
        %v1842 = vrot.slane %v1841, 2
        %v1843 = vmax.f32 %v1841, %v1842
        %v1844 = vrot.slane %v1843, 1
        %v1845 = vmax.f32 %v1843, %v1844
        %p1846 = por %p1491, %p1823
        %s1847 = scalar_select %p1846, 1, 0
        %v1848 = vstv %s1847
        %vm1849 = vcmp.eq.s32.totalorder %v1848, 1
        %v1850 = vsel %vm1849, 0.0, %v1838
        %v1851 = vsel %vm1849, 0.0, %v1845
        %v1854 = vrot.slane %v1851, 7
        %v1855 = vsel %vm1501, %v1850, %v1854
        %s1857 = scalar_lea.vmem %s157, 2
        %1858 = vst.msk [vmem:[%s1857] ss:$8 sm:$0x3] %vm1507, %v1855
        %1859 = vst.msk [vmem:[%s1857] ss:$8 sm:$0x0] %vm1507, %v1855
        %v1860 = vsel %vm1826, %v1408, -inf
        %v1861 = vsel %vm1826, %v1409, -inf
        %v1862 = vsel %vm1827, %v1410, -inf
        %v1863 = vsel %vm1827, %v1411, -inf
        %v1864 = vmax.f32 %v1860, %v1862
        %v1865 = vrot.slane %v1864, 4
        %v1866 = vmax.f32 %v1864, %v1865
        %v1867 = vrot.slane %v1866, 2
        %v1868 = vmax.f32 %v1866, %v1867
        %v1869 = vrot.slane %v1868, 1
        %v1870 = vmax.f32 %v1868, %v1869
        %v1871 = vmax.f32 %v1861, %v1863
        %v1872 = vrot.slane %v1871, 4
        %v1873 = vmax.f32 %v1871, %v1872
        %v1874 = vrot.slane %v1873, 2
        %v1875 = vmax.f32 %v1873, %v1874
        %v1876 = vrot.slane %v1875, 1
        %v1877 = vmax.f32 %v1875, %v1876
        %p1878 = por %p1528, %p1823
        %s1879 = scalar_select %p1878, 1, 0
        %v1880 = vstv %s1879
        %vm1881 = vcmp.eq.s32.totalorder %v1880, 1
        %v1882 = vsel %vm1881, 0.0, %v1870
        %v1883 = vsel %vm1881, 0.0, %v1877
        %v1886 = vrot.slane %v1883, 7
        %v1887 = vsel %vm1501, %v1882, %v1886
        %s1889 = scalar_lea.vmem %s157, 7
        %1890 = vst.msk [vmem:[%s1889] ss:$8 sm:$0x3] %vm1507, %v1887
        %1891 = vst.msk [vmem:[%s1889] ss:$8 sm:$0x0] %vm1507, %v1887
        %v1892 = vsel %vm1826, %v1423, -inf
        %v1893 = vsel %vm1826, %v1424, -inf
        %v1894 = vsel %vm1827, %v1425, -inf
        %v1895 = vsel %vm1827, %v1426, -inf
        %v1896 = vmax.f32 %v1892, %v1894
        %v1897 = vrot.slane %v1896, 4
        %v1898 = vmax.f32 %v1896, %v1897
        %v1899 = vrot.slane %v1898, 2
        %v1900 = vmax.f32 %v1898, %v1899
        %v1901 = vrot.slane %v1900, 1
        %v1902 = vmax.f32 %v1900, %v1901
        %v1903 = vmax.f32 %v1893, %v1895
        %v1904 = vrot.slane %v1903, 4
        %v1905 = vmax.f32 %v1903, %v1904
        %v1906 = vrot.slane %v1905, 2
        %v1907 = vmax.f32 %v1905, %v1906
        %v1908 = vrot.slane %v1907, 1
        %v1909 = vmax.f32 %v1907, %v1908
        %p1910 = por %p1561, %p1823
        %s1911 = scalar_select %p1910, 1, 0
        %v1912 = vstv %s1911
        %vm1913 = vcmp.eq.s32.totalorder %v1912, 1
        %v1914 = vsel %vm1913, 0.0, %v1902
        %v1915 = vsel %vm1913, 0.0, %v1909
        %v1918 = vrot.slane %v1915, 7
        %v1919 = vsel %vm1501, %v1914, %v1918
        %s1921 = scalar_lea.vmem %s157, 20
        %1922 = vst.msk [vmem:[%s1921] ss:$8 sm:$0x3] %vm1507, %v1919
        %1923 = vst.msk [vmem:[%s1921] ss:$8 sm:$0x0] %vm1507, %v1919
        %v1924 = vsel %vm1826, %v1438, -inf
        %v1925 = vsel %vm1826, %v1439, -inf
        %v1926 = vsel %vm1827, %v1440, -inf
        %v1927 = vsel %vm1827, %v1441, -inf
        %v1928 = vmax.f32 %v1924, %v1926
        %v1929 = vrot.slane %v1928, 4
        %v1930 = vmax.f32 %v1928, %v1929
        %v1931 = vrot.slane %v1930, 2
        %v1932 = vmax.f32 %v1930, %v1931
        %v1933 = vrot.slane %v1932, 1
        %v1934 = vmax.f32 %v1932, %v1933
        %v1935 = vmax.f32 %v1925, %v1927
        %v1936 = vrot.slane %v1935, 4
        %v1937 = vmax.f32 %v1935, %v1936
        %v1938 = vrot.slane %v1937, 2
        %v1939 = vmax.f32 %v1937, %v1938
        %v1940 = vrot.slane %v1939, 1
        %v1941 = vmax.f32 %v1939, %v1940
        %p1942 = por %p1594, %p1823
        %s1943 = scalar_select %p1942, 1, 0
        %v1944 = vstv %s1943
        %vm1945 = vcmp.eq.s32.totalorder %v1944, 1
        %v1946 = vsel %vm1945, 0.0, %v1934
        %v1947 = vsel %vm1945, 0.0, %v1941
        %v1950 = vrot.slane %v1947, 7
        %v1951 = vsel %vm1501, %v1946, %v1950
        %s1953 = scalar_lea.vmem %s157, 33
        %1954 = vst.msk [vmem:[%s1953] ss:$8 sm:$0x3] %vm1507, %v1951
        %1955 = vst.msk [vmem:[%s1953] ss:$8 sm:$0x0] %vm1507, %v1951
        %v1956 = vsel %vm1826, %v1453, -inf
        %v1957 = vsel %vm1826, %v1454, -inf
        %v1958 = vsel %vm1827, %v1455, -inf
        %v1959 = vsel %vm1827, %v1456, -inf
        %v1960 = vmax.f32 %v1956, %v1958
        %v1961 = vrot.slane %v1960, 4
        %v1962 = vmax.f32 %v1960, %v1961
        %v1963 = vrot.slane %v1962, 2
        %v1964 = vmax.f32 %v1962, %v1963
        %v1965 = vrot.slane %v1964, 1
        %v1966 = vmax.f32 %v1964, %v1965
        %v1967 = vmax.f32 %v1957, %v1959
        %v1968 = vrot.slane %v1967, 4
        %v1969 = vmax.f32 %v1967, %v1968
        %v1970 = vrot.slane %v1969, 2
        %v1971 = vmax.f32 %v1969, %v1970
        %v1972 = vrot.slane %v1971, 1
        %v1973 = vmax.f32 %v1971, %v1972
        %p1974 = por %p1627, %p1823
        %s1975 = scalar_select %p1974, 1, 0
        %v1976 = vstv %s1975
        %vm1977 = vcmp.eq.s32.totalorder %v1976, 1
        %v1978 = vsel %vm1977, 0.0, %v1966
        %v1979 = vsel %vm1977, 0.0, %v1973
        %v1982 = vrot.slane %v1979, 7
        %v1983 = vsel %vm1501, %v1978, %v1982
        %s1985 = scalar_lea.vmem %s157, 38
        %1986 = vst.msk [vmem:[%s1985] ss:$8 sm:$0x3] %vm1507, %v1983
        %1987 = vst.msk [vmem:[%s1985] ss:$8 sm:$0x0] %vm1507, %v1983
        %v1988 = vstv %s185
        %vm1989 = vcmp.ge.s32.totalorder %v1458, %v1988
        %vm1990 = vcmp.ge.s32.totalorder %v1459, %v1988
        %v1991 = vstv %s195
        %vm1992 = vcmp.lt.s32.totalorder %v1458, %v1991
        %vm1993 = vcmp.lt.s32.totalorder %v1459, %v1991
        %vm1994 = vmand %vm1989, %vm1992
        %vm1995 = vmand %vm1990, %vm1993
        %p1996 = scmp.le.s32.totalorder %s195, %s185
        %v1997 = vsel %vm1994, 1, 0
        %v1998 = vsel %vm1995, 1, 0
        %vm1999 = vcmp.eq.s32.totalorder %v1997, 1
        %vm2000 = vcmp.eq.s32.totalorder %v1998, 1
        %v2001 = vsel %vm1999, %v1393, -inf
        %v2002 = vsel %vm1999, %v1394, -inf
        %v2003 = vsel %vm2000, %v1395, -inf
        %v2004 = vsel %vm2000, %v1396, -inf
        %v2005 = vmax.f32 %v2001, %v2003
        %v2006 = vrot.slane %v2005, 4
        %v2007 = vmax.f32 %v2005, %v2006
        %v2008 = vrot.slane %v2007, 2
        %v2009 = vmax.f32 %v2007, %v2008
        %v2010 = vrot.slane %v2009, 1
        %v2011 = vmax.f32 %v2009, %v2010
        %v2012 = vmax.f32 %v2002, %v2004
        %v2013 = vrot.slane %v2012, 4
        %v2014 = vmax.f32 %v2012, %v2013
        %v2015 = vrot.slane %v2014, 2
        %v2016 = vmax.f32 %v2014, %v2015
        %v2017 = vrot.slane %v2016, 1
        %v2018 = vmax.f32 %v2016, %v2017
        %p2019 = por %p1491, %p1996
        %s2020 = scalar_select %p2019, 1, 0
        %v2021 = vstv %s2020
        %vm2022 = vcmp.eq.s32.totalorder %v2021, 1
        %v2023 = vsel %vm2022, 0.0, %v2011
        %v2024 = vsel %vm2022, 0.0, %v2018
        %v2027 = vrot.slane %v2024, 7
        %v2028 = vsel %vm1501, %v2023, %v2027
        %s2030 = scalar_lea.vmem %s157, 3
        %2031 = vst.msk [vmem:[%s2030] ss:$8 sm:$0x3] %vm1507, %v2028
        %2032 = vst.msk [vmem:[%s2030] ss:$8 sm:$0x0] %vm1507, %v2028
        %v2033 = vsel %vm1999, %v1408, -inf
        %v2034 = vsel %vm1999, %v1409, -inf
        %v2035 = vsel %vm2000, %v1410, -inf
        %v2036 = vsel %vm2000, %v1411, -inf
        %v2037 = vmax.f32 %v2033, %v2035
        %v2038 = vrot.slane %v2037, 4
        %v2039 = vmax.f32 %v2037, %v2038
        %v2040 = vrot.slane %v2039, 2
        %v2041 = vmax.f32 %v2039, %v2040
        %v2042 = vrot.slane %v2041, 1
        %v2043 = vmax.f32 %v2041, %v2042
        %v2044 = vmax.f32 %v2034, %v2036
        %v2045 = vrot.slane %v2044, 4
        %v2046 = vmax.f32 %v2044, %v2045
        %v2047 = vrot.slane %v2046, 2
        %v2048 = vmax.f32 %v2046, %v2047
        %v2049 = vrot.slane %v2048, 1
        %v2050 = vmax.f32 %v2048, %v2049
        %p2051 = por %p1528, %p1996
        %s2052 = scalar_select %p2051, 1, 0
        %v2053 = vstv %s2052
        %vm2054 = vcmp.eq.s32.totalorder %v2053, 1
        %v2055 = vsel %vm2054, 0.0, %v2043
        %v2056 = vsel %vm2054, 0.0, %v2050
        %v2059 = vrot.slane %v2056, 7
        %v2060 = vsel %vm1501, %v2055, %v2059
        %s2062 = scalar_lea.vmem %s157, 16
        %2063 = vst.msk [vmem:[%s2062] ss:$8 sm:$0x3] %vm1507, %v2060
        %2064 = vst.msk [vmem:[%s2062] ss:$8 sm:$0x0] %vm1507, %v2060
        %v2065 = vsel %vm1999, %v1423, -inf
        %v2066 = vsel %vm1999, %v1424, -inf
        %v2067 = vsel %vm2000, %v1425, -inf
        %v2068 = vsel %vm2000, %v1426, -inf
        %v2069 = vmax.f32 %v2065, %v2067
        %v2070 = vrot.slane %v2069, 4
        %v2071 = vmax.f32 %v2069, %v2070
        %v2072 = vrot.slane %v2071, 2
        %v2073 = vmax.f32 %v2071, %v2072
        %v2074 = vrot.slane %v2073, 1
        %v2075 = vmax.f32 %v2073, %v2074
        %v2076 = vmax.f32 %v2066, %v2068
        %v2077 = vrot.slane %v2076, 4
        %v2078 = vmax.f32 %v2076, %v2077
        %v2079 = vrot.slane %v2078, 2
        %v2080 = vmax.f32 %v2078, %v2079
        %v2081 = vrot.slane %v2080, 1
        %v2082 = vmax.f32 %v2080, %v2081
        %p2083 = por %p1561, %p1996
        %s2084 = scalar_select %p2083, 1, 0
        %v2085 = vstv %s2084
        %vm2086 = vcmp.eq.s32.totalorder %v2085, 1
        %v2087 = vsel %vm2086, 0.0, %v2075
        %v2088 = vsel %vm2086, 0.0, %v2082
        %v2091 = vrot.slane %v2088, 7
        %v2092 = vsel %vm1501, %v2087, %v2091
        %s2094 = scalar_lea.vmem %s157, 21
        %2095 = vst.msk [vmem:[%s2094] ss:$8 sm:$0x3] %vm1507, %v2092
        %2096 = vst.msk [vmem:[%s2094] ss:$8 sm:$0x0] %vm1507, %v2092
        %v2097 = vsel %vm1999, %v1438, -inf
        %v2098 = vsel %vm1999, %v1439, -inf
        %v2099 = vsel %vm2000, %v1440, -inf
        %v2100 = vsel %vm2000, %v1441, -inf
        %v2101 = vmax.f32 %v2097, %v2099
        %v2102 = vrot.slane %v2101, 4
        %v2103 = vmax.f32 %v2101, %v2102
        %v2104 = vrot.slane %v2103, 2
        %v2105 = vmax.f32 %v2103, %v2104
        %v2106 = vrot.slane %v2105, 1
        %v2107 = vmax.f32 %v2105, %v2106
        %v2108 = vmax.f32 %v2098, %v2100
        %v2109 = vrot.slane %v2108, 4
        %v2110 = vmax.f32 %v2108, %v2109
        %v2111 = vrot.slane %v2110, 2
        %v2112 = vmax.f32 %v2110, %v2111
        %v2113 = vrot.slane %v2112, 1
        %v2114 = vmax.f32 %v2112, %v2113
        %p2115 = por %p1594, %p1996
        %s2116 = scalar_select %p2115, 1, 0
        %v2117 = vstv %s2116
        %vm2118 = vcmp.eq.s32.totalorder %v2117, 1
        %v2119 = vsel %vm2118, 0.0, %v2107
        %v2120 = vsel %vm2118, 0.0, %v2114
        %v2123 = vrot.slane %v2120, 7
        %v2124 = vsel %vm1501, %v2119, %v2123
        %s2126 = scalar_lea.vmem %s157, 34
        %2127 = vst.msk [vmem:[%s2126] ss:$8 sm:$0x3] %vm1507, %v2124
        %2128 = vst.msk [vmem:[%s2126] ss:$8 sm:$0x0] %vm1507, %v2124
        %v2129 = vsel %vm1999, %v1453, -inf
        %v2130 = vsel %vm1999, %v1454, -inf
        %v2131 = vsel %vm2000, %v1455, -inf
        %v2132 = vsel %vm2000, %v1456, -inf
        %v2133 = vmax.f32 %v2129, %v2131
        %v2134 = vrot.slane %v2133, 4
        %v2135 = vmax.f32 %v2133, %v2134
        %v2136 = vrot.slane %v2135, 2
        %v2137 = vmax.f32 %v2135, %v2136
        %v2138 = vrot.slane %v2137, 1
        %v2139 = vmax.f32 %v2137, %v2138
        %v2140 = vmax.f32 %v2130, %v2132
        %v2141 = vrot.slane %v2140, 4
        %v2142 = vmax.f32 %v2140, %v2141
        %v2143 = vrot.slane %v2142, 2
        %v2144 = vmax.f32 %v2142, %v2143
        %v2145 = vrot.slane %v2144, 1
        %v2146 = vmax.f32 %v2144, %v2145
        %p2147 = por %p1627, %p1996
        %s2148 = scalar_select %p2147, 1, 0
        %v2149 = vstv %s2148
        %vm2150 = vcmp.eq.s32.totalorder %v2149, 1
        %v2151 = vsel %vm2150, 0.0, %v2139
        %v2152 = vsel %vm2150, 0.0, %v2146
        %v2155 = vrot.slane %v2152, 7
        %v2156 = vsel %vm1501, %v2151, %v2155
        %s2158 = scalar_lea.vmem %s157, 39
        %2159 = vst.msk [vmem:[%s2158] ss:$8 sm:$0x3] %vm1507, %v2156
        %2160 = vst.msk [vmem:[%s2158] ss:$8 sm:$0x0] %vm1507, %v2156
        %v2161 = vstv %s187
        %vm2162 = vcmp.ge.s32.totalorder %v1458, %v2161
        %vm2163 = vcmp.ge.s32.totalorder %v1459, %v2161
        %v2164 = vstv %s197
        %vm2165 = vcmp.lt.s32.totalorder %v1458, %v2164
        %vm2166 = vcmp.lt.s32.totalorder %v1459, %v2164
        %vm2167 = vmand %vm2162, %vm2165
        %vm2168 = vmand %vm2163, %vm2166
        %p2169 = scmp.le.s32.totalorder %s197, %s187
        %v2170 = vsel %vm2167, 1, 0
        %v2171 = vsel %vm2168, 1, 0
        %vm2172 = vcmp.eq.s32.totalorder %v2170, 1
        %vm2173 = vcmp.eq.s32.totalorder %v2171, 1
        %v2174 = vsel %vm2172, %v1393, -inf
        %v2175 = vsel %vm2172, %v1394, -inf
        %v2176 = vsel %vm2173, %v1395, -inf
        %v2177 = vsel %vm2173, %v1396, -inf
        %v2178 = vmax.f32 %v2174, %v2176
        %v2179 = vrot.slane %v2178, 4
        %v2180 = vmax.f32 %v2178, %v2179
        %v2181 = vrot.slane %v2180, 2
        %v2182 = vmax.f32 %v2180, %v2181
        %v2183 = vrot.slane %v2182, 1
        %v2184 = vmax.f32 %v2182, %v2183
        %v2185 = vmax.f32 %v2175, %v2177
        %v2186 = vrot.slane %v2185, 4
        %v2187 = vmax.f32 %v2185, %v2186
        %v2188 = vrot.slane %v2187, 2
        %v2189 = vmax.f32 %v2187, %v2188
        %v2190 = vrot.slane %v2189, 1
        %v2191 = vmax.f32 %v2189, %v2190
        %p2192 = por %p1491, %p2169
        %s2193 = scalar_select %p2192, 1, 0
        %v2194 = vstv %s2193
        %vm2195 = vcmp.eq.s32.totalorder %v2194, 1
        %v2196 = vsel %vm2195, 0.0, %v2184
        %v2197 = vsel %vm2195, 0.0, %v2191
        %v2200 = vrot.slane %v2197, 7
        %v2201 = vsel %vm1501, %v2196, %v2200
        %s2203 = scalar_lea.vmem %s157, 4
        %2204 = vst.msk [vmem:[%s2203] ss:$8 sm:$0x3] %vm1507, %v2201
        %2205 = vst.msk [vmem:[%s2203] ss:$8 sm:$0x0] %vm1507, %v2201
        %v2206 = vsel %vm2172, %v1408, -inf
        %v2207 = vsel %vm2172, %v1409, -inf
        %v2208 = vsel %vm2173, %v1410, -inf
        %v2209 = vsel %vm2173, %v1411, -inf
        %v2210 = vmax.f32 %v2206, %v2208
        %v2211 = vrot.slane %v2210, 4
        %v2212 = vmax.f32 %v2210, %v2211
        %v2213 = vrot.slane %v2212, 2
        %v2214 = vmax.f32 %v2212, %v2213
        %v2215 = vrot.slane %v2214, 1
        %v2216 = vmax.f32 %v2214, %v2215
        %v2217 = vmax.f32 %v2207, %v2209
        %v2218 = vrot.slane %v2217, 4
        %v2219 = vmax.f32 %v2217, %v2218
        %v2220 = vrot.slane %v2219, 2
        %v2221 = vmax.f32 %v2219, %v2220
        %v2222 = vrot.slane %v2221, 1
        %v2223 = vmax.f32 %v2221, %v2222
        %p2224 = por %p1528, %p2169
        %s2225 = scalar_select %p2224, 1, 0
        %v2226 = vstv %s2225
        %vm2227 = vcmp.eq.s32.totalorder %v2226, 1
        %v2228 = vsel %vm2227, 0.0, %v2216
        %v2229 = vsel %vm2227, 0.0, %v2223
        %v2232 = vrot.slane %v2229, 7
        %v2233 = vsel %vm1501, %v2228, %v2232
        %s2235 = scalar_lea.vmem %s157, 17
        %2236 = vst.msk [vmem:[%s2235] ss:$8 sm:$0x3] %vm1507, %v2233
        %2237 = vst.msk [vmem:[%s2235] ss:$8 sm:$0x0] %vm1507, %v2233
        %v2238 = vsel %vm2172, %v1423, -inf
        %v2239 = vsel %vm2172, %v1424, -inf
        %v2240 = vsel %vm2173, %v1425, -inf
        %v2241 = vsel %vm2173, %v1426, -inf
        %v2242 = vmax.f32 %v2238, %v2240
        %v2243 = vrot.slane %v2242, 4
        %v2244 = vmax.f32 %v2242, %v2243
        %v2245 = vrot.slane %v2244, 2
        %v2246 = vmax.f32 %v2244, %v2245
        %v2247 = vrot.slane %v2246, 1
        %v2248 = vmax.f32 %v2246, %v2247
        %v2249 = vmax.f32 %v2239, %v2241
        %v2250 = vrot.slane %v2249, 4
        %v2251 = vmax.f32 %v2249, %v2250
        %v2252 = vrot.slane %v2251, 2
        %v2253 = vmax.f32 %v2251, %v2252
        %v2254 = vrot.slane %v2253, 1
        %v2255 = vmax.f32 %v2253, %v2254
        %p2256 = por %p1561, %p2169
        %s2257 = scalar_select %p2256, 1, 0
        %v2258 = vstv %s2257
        %vm2259 = vcmp.eq.s32.totalorder %v2258, 1
        %v2260 = vsel %vm2259, 0.0, %v2248
        %v2261 = vsel %vm2259, 0.0, %v2255
        %v2264 = vrot.slane %v2261, 7
        %v2265 = vsel %vm1501, %v2260, %v2264
        %s2267 = scalar_lea.vmem %s157, 22
        %2268 = vst.msk [vmem:[%s2267] ss:$8 sm:$0x3] %vm1507, %v2265
        %2269 = vst.msk [vmem:[%s2267] ss:$8 sm:$0x0] %vm1507, %v2265
        %v2270 = vsel %vm2172, %v1438, -inf
        %v2271 = vsel %vm2172, %v1439, -inf
        %v2272 = vsel %vm2173, %v1440, -inf
        %v2273 = vsel %vm2173, %v1441, -inf
        %v2274 = vmax.f32 %v2270, %v2272
        %v2275 = vrot.slane %v2274, 4
        %v2276 = vmax.f32 %v2274, %v2275
        %v2277 = vrot.slane %v2276, 2
        %v2278 = vmax.f32 %v2276, %v2277
        %v2279 = vrot.slane %v2278, 1
        %v2280 = vmax.f32 %v2278, %v2279
        %v2281 = vmax.f32 %v2271, %v2273
        %v2282 = vrot.slane %v2281, 4
        %v2283 = vmax.f32 %v2281, %v2282
        %v2284 = vrot.slane %v2283, 2
        %v2285 = vmax.f32 %v2283, %v2284
        %v2286 = vrot.slane %v2285, 1
        %v2287 = vmax.f32 %v2285, %v2286
        %p2288 = por %p1594, %p2169
        %s2289 = scalar_select %p2288, 1, 0
        %v2290 = vstv %s2289
        %vm2291 = vcmp.eq.s32.totalorder %v2290, 1
        %v2292 = vsel %vm2291, 0.0, %v2280
        %v2293 = vsel %vm2291, 0.0, %v2287
        %v2296 = vrot.slane %v2293, 7
        %v2297 = vsel %vm1501, %v2292, %v2296
        %s2299 = scalar_lea.vmem %s157, 35
        %2300 = vst.msk [vmem:[%s2299] ss:$8 sm:$0x3] %vm1507, %v2297
        %2301 = vst.msk [vmem:[%s2299] ss:$8 sm:$0x0] %vm1507, %v2297
        %v2302 = vsel %vm2172, %v1453, -inf
        %v2303 = vsel %vm2172, %v1454, -inf
        %v2304 = vsel %vm2173, %v1455, -inf
        %v2305 = vsel %vm2173, %v1456, -inf
        %v2306 = vmax.f32 %v2302, %v2304
        %v2307 = vrot.slane %v2306, 4
        %v2308 = vmax.f32 %v2306, %v2307
        %v2309 = vrot.slane %v2308, 2
        %v2310 = vmax.f32 %v2308, %v2309
        %v2311 = vrot.slane %v2310, 1
        %v2312 = vmax.f32 %v2310, %v2311
        %v2313 = vmax.f32 %v2303, %v2305
        %v2314 = vrot.slane %v2313, 4
        %v2315 = vmax.f32 %v2313, %v2314
        %v2316 = vrot.slane %v2315, 2
        %v2317 = vmax.f32 %v2315, %v2316
        %v2318 = vrot.slane %v2317, 1
        %v2319 = vmax.f32 %v2317, %v2318
        %p2320 = por %p1627, %p2169
        %s2321 = scalar_select %p2320, 1, 0
        %v2322 = vstv %s2321
        %vm2323 = vcmp.eq.s32.totalorder %v2322, 1
        %v2324 = vsel %vm2323, 0.0, %v2312
        %v2325 = vsel %vm2323, 0.0, %v2319
        %v2328 = vrot.slane %v2325, 7
        %v2329 = vsel %vm1501, %v2324, %v2328
        %s2331 = scalar_lea.vmem %s157, 48
        %2332 = vst.msk [vmem:[%s2331] ss:$8 sm:$0x3] %vm1507, %v2329
        %2333 = vst.msk [vmem:[%s2331] ss:$8 sm:$0x0] %vm1507, %v2329
        %p2334 = scmp.lt.s32.totalorder %s30, 7
        %s2335 = scalar_select %p2334, %s30, 7
        %s2336 = smul.addr %s2335, 8
        %s2337 = smul.addr %s2336, 8
        %s2338 = scalar_lea.vmem %s3, %s2337
        // Predicated region
        $region29: #{tpu_custom_call.1} parent=23 // pred_check
          %p2339 = pneg %p76
        $region30: #{tpu_custom_call.1} parent=23 // pred_check_branch
          %2341 = sbr.rel (%p2339) target = $region32
        $region31: #{tpu_custom_call.1} parent=23 // pred_region
          _
        $region32: #{tpu_custom_call.1} parent=23 // pred_fallthru
          _
      $region24: #{tpu_custom_call.1} parent=5 // pred_fallthru
        _
      %p2342 = scmp.le.s32.totalorder 2, %s25
      // Predicated region
      $region33: #{tpu_custom_call.1} parent=5 // pred_check
        %p2343 = pneg %p2342
      $region34: #{tpu_custom_call.1} parent=5 // pred_check_branch
        %2345 = sbr.rel (%p2343) target = $region36
      $region35: #{tpu_custom_call.1} parent=5 // pred_region
        %s2346 = ssub.s32 %s25, 2
        // Predicated region
        $region37: #{tpu_custom_call.1} parent=35 // pred_check
          %p2347 = pneg %p82
        $region38: #{tpu_custom_call.1} parent=35 // pred_check_branch
          %2349 = sbr.rel (%p2347) target = $region40
        $region39: #{tpu_custom_call.1} parent=35 // pred_region
          %p2350 = scmp.lt.s32.totalorder %s31, 7
          %s2351 = scalar_select %p2350, %s31, 7
          %s2352 = smul.addr %s2351, 8
          %s2353 = smul.addr %s2352, 8
          %s2354 = scalar_lea.vmem %s3, %s2353
        $region40: #{tpu_custom_call.1} parent=35 // pred_fallthru
          _
      $region36: #{tpu_custom_call.1} parent=5 // pred_fallthru
        _
    $region6: #{tpu_custom_call.1} parent=1 // loop_footer
      %s29 = sadd.s32 1, %s25
    $region7: #{tpu_custom_call.1} parent=1 // loop_footer_branch
      %24 = sbr.rel target = $region3
    $region8: #{tpu_custom_call.1} parent=1 // loop_exit
      _
    %2355 = vsyncpa [#allocation6], 1
    %s2356 = scalar_lea.sflag [#allocation6], 1
    %2357 = vsyncpa %s2356, 1

</llo_original>
